<compile_context>
chip_gen: v6e
topology: v6e:2x2x1
jax: 0.10.0
libtpu: 0.0.40
codegen_flags: <defaults>
</compile_context>

<pallas_src>
import functools

import jax
import jax.numpy as jnp
from jax import lax
from jax.experimental import pallas as pl
from jax.experimental.pallas import tpu as pltpu


# ----------------------------------------------------------------------------
# Fused kernel: T message-passing steps + readout + classifier
# ----------------------------------------------------------------------------
def _mpnn_fused_kernel(
    # graph tensors
    h0_ref, oh_src_T_ref, oh_dst_ref, oh_graph_T_ref, e_vw_ref,
    # message edge-network (output columns permuted to (d, m)-major)
    mw1_ref, mb1_ref, mw2_ref, mb2_ref,
    # packed GRU (gate order r | z | n)
    w_ih_ref, b_ih_ref, w_hh_ref, b_hh_ref,
    # readout i-net (iw1 split for the [h_v, h_0] concat) and j-net
    iw1a_ref, iw1b_ref, ib1_ref, iw2_ref, ib2_ref,
    jw1_ref, jb1_ref, jw2_ref, jb2_ref,
    # classifier (last layer zero-padded to 128 output lanes)
    cw1_ref, cb1_ref, cw2_ref, cb2_ref,
    # output: (n_graph, 128) slab, column 0 = prediction
    pred_ref,
    *, T, n_dim, m_dim):
    f32 = jnp.float32

    h0 = h0_ref[...]                       # (n_node, n_dim)
    oh_src_T = oh_src_T_ref[...]           # (n_node, n_edge)  scatter by E[0]
    oh_dst = oh_dst_ref[...]               # (n_edge, n_node)  gather h_v[E[1]]

    # --- edge network: loop-invariant (depends only on E_attr) -> hoisted ---
    hidden = jnp.maximum(
        jnp.dot(e_vw_ref[...], mw1_ref[...], preferred_element_type=f32)
        + mb1_ref[...], 0.0)                                   # (n_edge, 128)
    a2 = jnp.dot(hidden, mw2_ref[...], preferred_element_type=f32) + mb2_ref[...]
    # a2[e, d*m_dim + m] == A(e)[m, d]                         # (n_edge, n_dim*m_dim)

    w_ih = w_ih_ref[...]; b_ih = b_ih_ref[...]                 # (m_dim, 3n), (1, 3n)
    w_hh = w_hh_ref[...]; b_hh = b_hh_ref[...]                 # (n_dim, 3n), (1, 3n)
    n_edge = a2.shape[0]

    def step(_, h_v):
        # gather h_w = h_v[E[1]]  (MXU)
        h_w = jnp.dot(oh_dst, h_v, preferred_element_type=f32)      # (n_edge, n_dim)
        # per-edge message: msg[e, m] = sum_d A(e)[m, d] * h_w[e, d]
        # unrolled madd over d -> no cross-lane reduce, no 3-D intermediate
        msg = jnp.zeros((n_edge, m_dim), f32)
        for d in range(n_dim):
            msg = msg + h_w[:, d:d + 1] * a2[:, d * m_dim:(d + 1) * m_dim]
        # scatter-sum by edge source (MXU)
        m_v = jnp.dot(oh_src_T, msg, preferred_element_type=f32)    # (n_node, m_dim)
        # GRUCell, packed gates (PyTorch semantics)
        gi = jnp.dot(m_v, w_ih, preferred_element_type=f32) + b_ih  # (n_node, 3n)
        gh = jnp.dot(h_v, w_hh, preferred_element_type=f32) + b_hh
        r = jax.nn.sigmoid(gi[:, 0:n_dim] + gh[:, 0:n_dim])
        z = jax.nn.sigmoid(gi[:, n_dim:2 * n_dim] + gh[:, n_dim:2 * n_dim])
        n = jnp.tanh(gi[:, 2 * n_dim:3 * n_dim] + r * gh[:, 2 * n_dim:3 * n_dim])
        return (1.0 - z) * n + z * h_v

    h_T = lax.fori_loop(0, T, step, h0, unroll=True)

    # --- readout: R_g = sum_v sigmoid(i([h_T, h_0])) * j(h_T) ---
    i_hid = jnp.maximum(
        jnp.dot(h_T, iw1a_ref[...], preferred_element_type=f32)
        + jnp.dot(h0, iw1b_ref[...], preferred_element_type=f32)
        + ib1_ref[...], 0.0)                                        # (n_node, 128)
    i_out = jnp.dot(i_hid, iw2_ref[...], preferred_element_type=f32) + ib2_ref[...]
    j_hid = jnp.maximum(
        jnp.dot(h_T, jw1_ref[...], preferred_element_type=f32) + jb1_ref[...], 0.0)
    j_out = jnp.dot(j_hid, jw2_ref[...], preferred_element_type=f32) + jb2_ref[...]
    gated = jax.nn.sigmoid(i_out) * j_out                           # (n_node, g_dim)
    R = jnp.dot(oh_graph_T_ref[...], gated, preferred_element_type=f32)  # (n_graph, g_dim)

    # --- classifier, lane-dense 128-wide output slab ---
    c_hid = jnp.maximum(
        jnp.dot(R, cw1_ref[...], preferred_element_type=f32) + cb1_ref[...], 0.0)
    logits = jnp.dot(c_hid, cw2_ref[...], preferred_element_type=f32) + cb2_ref[...]
    pred_ref[...] = jax.nn.sigmoid(logits)      # column 0 holds the real prediction


# ----------------------------------------------------------------------------
# Parameter init (deterministic, PyTorch-Linear-style uniform) + packing
# ----------------------------------------------------------------------------
def _linear_init(key, fan_in, fan_out):
    kw, kb = jax.random.split(key)
    bound = 1.0 / jnp.sqrt(jnp.float32(fan_in))
    w = jax.random.uniform(kw, (fan_in, fan_out), jnp.float32, -bound, bound)
    b = jax.random.uniform(kb, (1, fan_out), jnp.float32, -bound, bound)
    return w, b


def init_params(key, n_dim, e_dim, m_dim, g_dim, hid=128):
    keys = jax.random.split(key, 16)
    # Message edge-network: e_dim -> hid -> n_dim * m_dim  (PyTorch view(-1, m_dim, n_dim))
    mw1, mb1 = _linear_init(keys[0], e_dim, hid)
    mw2, mb2 = _linear_init(keys[1], hid, n_dim * m_dim)
    # GRU gates (input m_dim, hidden n_dim), separate r/z/n blocks (PyTorch layout)
    wir, bir = _linear_init(keys[2], m_dim, n_dim)
    wiz, biz = _linear_init(keys[3], m_dim, n_dim)
    win, bin_ = _linear_init(keys[4], m_dim, n_dim)
    whr, bhr = _linear_init(keys[5], n_dim, n_dim)
    whz, bhz = _linear_init(keys[6], n_dim, n_dim)
    whn, bhn = _linear_init(keys[7], n_dim, n_dim)
    # Readout i-net (2*n_dim -> hid -> g_dim) and j-net (n_dim -> hid -> g_dim)
    iw1, ib1 = _linear_init(keys[8], 2 * n_dim, hid)
    iw2, ib2 = _linear_init(keys[9], hid, g_dim)
    jw1, jb1 = _linear_init(keys[10], n_dim, hid)
    jw2, jb2 = _linear_init(keys[11], hid, g_dim)
    # Classifier g_dim -> 128 -> 1
    cw1, cb1 = _linear_init(keys[12], g_dim, hid)
    cw2, cb2 = _linear_init(keys[13], hid, 1)
    return {
        "n_dim": n_dim, "m_dim": m_dim,
        "msg": (mw1, mb1, mw2, mb2),
        "gru": (wir, wiz, win, whr, whz, whn, bir, biz, bin_, bhr, bhz, bhn),
        "r_i": (iw1, ib1, iw2, ib2),
        "r_j": (jw1, jb1, jw2, jb2),
        "cls": (cw1, cb1, cw2, cb2),
    }


def pack_params(params):
    """One-time repack of PyTorch-layout weights into kernel-ready form."""
    n_dim, m_dim = params["n_dim"], params["m_dim"]

    mw1, mb1, mw2, mb2 = params["msg"]
    hid = mw1.shape[1]
    # Permute edge-net output from (m, d)-major (PyTorch view(-1, m_dim, n_dim))
    # to (d, m)-major so the in-kernel contraction slices contiguous m_dim blocks.
    mw2_dm = mw2.reshape(hid, m_dim, n_dim).transpose(0, 2, 1).reshape(hid, n_dim * m_dim)
    mb2_dm = mb2.reshape(1, m_dim, n_dim).transpose(0, 2, 1).reshape(1, n_dim * m_dim)

    wir, wiz, win, whr, whz, whn, bir, biz, bin_, bhr, bhz, bhn = params["gru"]
    w_ih = jnp.concatenate([wir, wiz, win], axis=1)      # (m_dim, 3*n_dim)
    w_hh = jnp.concatenate([whr, whz, whn], axis=1)      # (n_dim, 3*n_dim)
    b_ih = jnp.concatenate([bir, biz, bin_], axis=1)     # (1, 3*n_dim)
    b_hh = jnp.concatenate([bhr, bhz, bhn], axis=1)

    iw1, ib1, iw2, ib2 = params["r_i"]
    iw1a, iw1b = iw1[:n_dim, :], iw1[n_dim:, :]          # split for concat([h_v, h_0])
    jw1, jb1, jw2, jb2 = params["r_j"]

    cw1, cb1, cw2, cb2 = params["cls"]
    # pad the 1-wide classifier head to 128 lanes -> lane-dense final store
    cw2p = jnp.zeros((cw2.shape[0], 128), jnp.float32).at[:, :cw2.shape[1]].set(cw2)
    cb2p = jnp.zeros((1, 128), jnp.float32).at[:, :cb2.shape[1]].set(cb2)

    return (mw1, mb1, mw2_dm, mb2_dm,
            w_ih, b_ih, w_hh, b_hh,
            iw1a, iw1b, ib1, iw2, ib2,
            jw1, jb1, jw2, jb2,
            cw1, cb1, cw2p, cb2p)


# ----------------------------------------------------------------------------
# Forward pass (matches MPNN_GraphClassifer.forward)
# ----------------------------------------------------------------------------
def mpnn_forward(weights, h_0, graph_index, E, E_attr, n_graph, T=3):
    n_node, n_dim = h_0.shape
    m_dim = weights[4].shape[0]           # w_ih: (m_dim, 3*n_dim)

    # dense one-hot scatter/gather operands (exact in f32; MXU-consumable)
    oh_src_T = jax.nn.one_hot(E[0], n_node, dtype=jnp.float32).T    # (n_node, n_edge)
    oh_dst = jax.nn.one_hot(E[1], n_node, dtype=jnp.float32)        # (n_edge, n_node)
    oh_graph_T = jax.nn.one_hot(graph_index, n_graph, dtype=jnp.float32).T
    e_vw = E_attr.T                                                 # (n_edge, e_dim)

    args = (h_0, oh_src_T, oh_dst, oh_graph_T, e_vw) + tuple(weights)
    kern = functools.partial(_mpnn_fused_kernel, T=T, n_dim=n_dim, m_dim=m_dim)

    pred_slab = pl.pallas_call(
        kern,
        out_shape=jax.ShapeDtypeStruct((n_graph, 128), jnp.float32),
        in_specs=[pl.BlockSpec(memory_space=pltpu.MemorySpace.VMEM)] * len(args),
        out_specs=pl.BlockSpec(memory_space=pltpu.MemorySpace.VMEM),
    )(*args)

    # column 0 of the lane-dense slab is the prediction; matches torch .squeeze()
    return pred_slab[:, 0]                                          # (n_graph,)


# ----------------------------------------------------------------------------
if __name__ == "__main__":
    n_dim, e_dim, m_dim, g_dim, T = 16, 8, 16, 16, 3
    n_node, n_edge, n_graph = 16, 32, 2

    key = jax.random.PRNGKey(0)
    k_h, k_e, k_attr, k_params = jax.random.split(key, 4)

    h_0 = jax.random.normal(k_h, (n_node, n_dim), jnp.float32)
    graph_index = jnp.concatenate(
        [jnp.zeros(n_node // 2, jnp.int32), jnp.ones(n_node - n_node // 2, jnp.int32)]
    )
    E = jax.random.randint(k_e, (2, n_edge), 0, n_node, dtype=jnp.int32)
    E_attr = jax.random.normal(k_attr, (e_dim, n_edge), jnp.float32)

    params = init_params(k_params, n_dim, e_dim, m_dim, g_dim)
    weights = pack_params(params)

    fwd = jax.jit(functools.partial(mpnn_forward, n_graph=n_graph, T=T))
    pred = fwd(weights, h_0, graph_index, E, E_attr)
    pred = jax.block_until_ready(pred)

    assert pred.shape == (n_graph,)
    assert bool(jnp.all(jnp.isfinite(pred)))
    assert bool(jnp.all((pred >= 0.0) & (pred <= 1.0)))
    print("KERNEL_OK")
</pallas_src>

<mosaic_0001>
module attributes {stable_mosaic.version = 11 : i64} {
  func.func @_mpnn_fused_kernel(%arg0: memref<16x16xf32, #tpu.memory_space<vmem>>, %arg1: memref<16x32xf32, #tpu.memory_space<vmem>>, %arg2: memref<32x16xf32, #tpu.memory_space<vmem>>, %arg3: memref<2x16xf32, #tpu.memory_space<vmem>>, %arg4: memref<32x8xf32, #tpu.memory_space<vmem>>, %arg5: memref<8x128xf32, #tpu.memory_space<vmem>>, %arg6: memref<1x128xf32, #tpu.memory_space<vmem>>, %arg7: memref<128x256xf32, #tpu.memory_space<vmem>>, %arg8: memref<1x256xf32, #tpu.memory_space<vmem>>, %arg9: memref<16x48xf32, #tpu.memory_space<vmem>>, %arg10: memref<1x48xf32, #tpu.memory_space<vmem>>, %arg11: memref<16x48xf32, #tpu.memory_space<vmem>>, %arg12: memref<1x48xf32, #tpu.memory_space<vmem>>, %arg13: memref<16x128xf32, #tpu.memory_space<vmem>>, %arg14: memref<16x128xf32, #tpu.memory_space<vmem>>, %arg15: memref<1x128xf32, #tpu.memory_space<vmem>>, %arg16: memref<128x16xf32, #tpu.memory_space<vmem>>, %arg17: memref<1x16xf32, #tpu.memory_space<vmem>>, %arg18: memref<16x128xf32, #tpu.memory_space<vmem>>, %arg19: memref<1x128xf32, #tpu.memory_space<vmem>>, %arg20: memref<128x16xf32, #tpu.memory_space<vmem>>, %arg21: memref<1x16xf32, #tpu.memory_space<vmem>>, %arg22: memref<16x128xf32, #tpu.memory_space<vmem>>, %arg23: memref<1x128xf32, #tpu.memory_space<vmem>>, %arg24: memref<128x128xf32, #tpu.memory_space<vmem>>, %arg25: memref<1x128xf32, #tpu.memory_space<vmem>>, %arg26: memref<2x128xf32, #tpu.memory_space<vmem>>) attributes {dimension_semantics = [], scalar_prefetch = 0 : i64, scratch_operands = 0 : i64, tpu.core_type = #tpu.core_type<tc>} {
    %c0 = arith.constant 0 : index
    %c0_0 = arith.constant 0 : index
    %0 = vector.load %arg0[%c0, %c0_0] : memref<16x16xf32, #tpu.memory_space<vmem>>, vector<16x16xf32>
    %c0_1 = arith.constant 0 : index
    %c0_2 = arith.constant 0 : index
    %1 = vector.load %arg1[%c0_1, %c0_2] : memref<16x32xf32, #tpu.memory_space<vmem>>, vector<16x32xf32>
    %c0_3 = arith.constant 0 : index
    %c0_4 = arith.constant 0 : index
    %2 = vector.load %arg2[%c0_3, %c0_4] : memref<32x16xf32, #tpu.memory_space<vmem>>, vector<32x16xf32>
    %c0_5 = arith.constant 0 : index
    %c0_6 = arith.constant 0 : index
    %3 = vector.load %arg4[%c0_5, %c0_6] : memref<32x8xf32, #tpu.memory_space<vmem>>, vector<32x8xf32>
    %c0_7 = arith.constant 0 : index
    %c0_8 = arith.constant 0 : index
    %4 = vector.load %arg5[%c0_7, %c0_8] : memref<8x128xf32, #tpu.memory_space<vmem>>, vector<8x128xf32>
    %cst = arith.constant dense<0.000000e+00> : vector<32x128xf32>
    %5 = tpu.matmul %3, %4, %cst {dimension_numbers = #tpu.dot_dimension_numbers<[1], [0], [0], [1], [0, 0, 1, 1], [], []>} : vector<32x8xf32>, vector<8x128xf32>, vector<32x128xf32> -> vector<32x128xf32>
    %c0_9 = arith.constant 0 : index
    %c0_10 = arith.constant 0 : index
    %6 = vector.load %arg6[%c0_9, %c0_10] : memref<1x128xf32, #tpu.memory_space<vmem>>, vector<1x128xf32>
    %7 = vector.broadcast %6 : vector<1x128xf32> to vector<32x128xf32>
    %8 = arith.addf %5, %7 : vector<32x128xf32>
    %cst_11 = arith.constant 0.000000e+00 : f32
    %9 = vector.broadcast %cst_11 : f32 to vector<32x128xf32>
    %10 = arith.maximumf %8, %9 : vector<32x128xf32>
    %c0_12 = arith.constant 0 : index
    %c0_13 = arith.constant 0 : index
    %11 = vector.load %arg7[%c0_12, %c0_13] : memref<128x256xf32, #tpu.memory_space<vmem>>, vector<128x256xf32>
    %cst_14 = arith.constant dense<0.000000e+00> : vector<32x256xf32>
    %12 = tpu.matmul %10, %11, %cst_14 {dimension_numbers = #tpu.dot_dimension_numbers<[1], [0], [0], [1], [0, 0, 1, 1], [], []>} : vector<32x128xf32>, vector<128x256xf32>, vector<32x256xf32> -> vector<32x256xf32>
    %c0_15 = arith.constant 0 : index
    %c0_16 = arith.constant 0 : index
    %13 = vector.load %arg8[%c0_15, %c0_16] : memref<1x256xf32, #tpu.memory_space<vmem>>, vector<1x256xf32>
    %14 = vector.broadcast %13 : vector<1x256xf32> to vector<32x256xf32>
    %15 = arith.addf %12, %14 : vector<32x256xf32>
    %c0_17 = arith.constant 0 : index
    %c0_18 = arith.constant 0 : index
    %16 = vector.load %arg9[%c0_17, %c0_18] : memref<16x48xf32, #tpu.memory_space<vmem>>, vector<16x48xf32>
    %c0_19 = arith.constant 0 : index
    %c0_20 = arith.constant 0 : index
    %17 = vector.load %arg10[%c0_19, %c0_20] : memref<1x48xf32, #tpu.memory_space<vmem>>, vector<1x48xf32>
    %c0_21 = arith.constant 0 : index
    %c0_22 = arith.constant 0 : index
    %18 = vector.load %arg11[%c0_21, %c0_22] : memref<16x48xf32, #tpu.memory_space<vmem>>, vector<16x48xf32>
    %c0_23 = arith.constant 0 : index
    %c0_24 = arith.constant 0 : index
    %19 = vector.load %arg12[%c0_23, %c0_24] : memref<1x48xf32, #tpu.memory_space<vmem>>, vector<1x48xf32>
    %c0_i32 = arith.constant 0 : i32
    %cst_25 = arith.constant dense<0.000000e+00> : vector<32x16xf32>
    %20 = tpu.matmul %2, %0, %cst_25 {dimension_numbers = #tpu.dot_dimension_numbers<[1], [0], [0], [1], [0, 0, 1, 1], [], []>} : vector<32x16xf32>, vector<16x16xf32>, vector<32x16xf32> -> vector<32x16xf32>
    %cst_26 = arith.constant 0.000000e+00 : f32
    %21 = vector.broadcast %cst_26 : f32 to vector<32x16xf32>
    %22 = vector.extract_strided_slice %20 {offsets = [0, 0], sizes = [32, 1], strides = [1, 1]} : vector<32x16xf32> to vector<32x1xf32>
    %23 = vector.extract_strided_slice %15 {offsets = [0, 0], sizes = [32, 16], strides = [1, 1]} : vector<32x256xf32> to vector<32x16xf32>
    %24 = vector.broadcast %22 : vector<32x1xf32> to vector<32x16xf32>
    %25 = arith.mulf %24, %23 : vector<32x16xf32>
    %26 = arith.addf %21, %25 : vector<32x16xf32>
    %27 = vector.extract_strided_slice %20 {offsets = [0, 1], sizes = [32, 1], strides = [1, 1]} : vector<32x16xf32> to vector<32x1xf32>
    %28 = vector.extract_strided_slice %15 {offsets = [0, 16], sizes = [32, 16], strides = [1, 1]} : vector<32x256xf32> to vector<32x16xf32>
    %29 = vector.broadcast %27 : vector<32x1xf32> to vector<32x16xf32>
    %30 = arith.mulf %29, %28 : vector<32x16xf32>
    %31 = arith.addf %26, %30 : vector<32x16xf32>
    %32 = vector.extract_strided_slice %20 {offsets = [0, 2], sizes = [32, 1], strides = [1, 1]} : vector<32x16xf32> to vector<32x1xf32>
    %33 = vector.extract_strided_slice %15 {offsets = [0, 32], sizes = [32, 16], strides = [1, 1]} : vector<32x256xf32> to vector<32x16xf32>
    %34 = vector.broadcast %32 : vector<32x1xf32> to vector<32x16xf32>
    %35 = arith.mulf %34, %33 : vector<32x16xf32>
    %36 = arith.addf %31, %35 : vector<32x16xf32>
    %37 = vector.extract_strided_slice %20 {offsets = [0, 3], sizes = [32, 1], strides = [1, 1]} : vector<32x16xf32> to vector<32x1xf32>
    %38 = vector.extract_strided_slice %15 {offsets = [0, 48], sizes = [32, 16], strides = [1, 1]} : vector<32x256xf32> to vector<32x16xf32>
    %39 = vector.broadcast %37 : vector<32x1xf32> to vector<32x16xf32>
    %40 = arith.mulf %39, %38 : vector<32x16xf32>
    %41 = arith.addf %36, %40 : vector<32x16xf32>
    %42 = vector.extract_strided_slice %20 {offsets = [0, 4], sizes = [32, 1], strides = [1, 1]} : vector<32x16xf32> to vector<32x1xf32>
    %43 = vector.extract_strided_slice %15 {offsets = [0, 64], sizes = [32, 16], strides = [1, 1]} : vector<32x256xf32> to vector<32x16xf32>
    %44 = vector.broadcast %42 : vector<32x1xf32> to vector<32x16xf32>
    %45 = arith.mulf %44, %43 : vector<32x16xf32>
    %46 = arith.addf %41, %45 : vector<32x16xf32>
    %47 = vector.extract_strided_slice %20 {offsets = [0, 5], sizes = [32, 1], strides = [1, 1]} : vector<32x16xf32> to vector<32x1xf32>
    %48 = vector.extract_strided_slice %15 {offsets = [0, 80], sizes = [32, 16], strides = [1, 1]} : vector<32x256xf32> to vector<32x16xf32>
    %49 = vector.broadcast %47 : vector<32x1xf32> to vector<32x16xf32>
    %50 = arith.mulf %49, %48 : vector<32x16xf32>
    %51 = arith.addf %46, %50 : vector<32x16xf32>
    %52 = vector.extract_strided_slice %20 {offsets = [0, 6], sizes = [32, 1], strides = [1, 1]} : vector<32x16xf32> to vector<32x1xf32>
    %53 = vector.extract_strided_slice %15 {offsets = [0, 96], sizes = [32, 16], strides = [1, 1]} : vector<32x256xf32> to vector<32x16xf32>
    %54 = vector.broadcast %52 : vector<32x1xf32> to vector<32x16xf32>
    %55 = arith.mulf %54, %53 : vector<32x16xf32>
    %56 = arith.addf %51, %55 : vector<32x16xf32>
    %57 = vector.extract_strided_slice %20 {offsets = [0, 7], sizes = [32, 1], strides = [1, 1]} : vector<32x16xf32> to vector<32x1xf32>
    %58 = vector.extract_strided_slice %15 {offsets = [0, 112], sizes = [32, 16], strides = [1, 1]} : vector<32x256xf32> to vector<32x16xf32>
    %59 = vector.broadcast %57 : vector<32x1xf32> to vector<32x16xf32>
    %60 = arith.mulf %59, %58 : vector<32x16xf32>
    %61 = arith.addf %56, %60 : vector<32x16xf32>
    %62 = vector.extract_strided_slice %20 {offsets = [0, 8], sizes = [32, 1], strides = [1, 1]} : vector<32x16xf32> to vector<32x1xf32>
    %63 = vector.extract_strided_slice %15 {offsets = [0, 128], sizes = [32, 16], strides = [1, 1]} : vector<32x256xf32> to vector<32x16xf32>
    %64 = vector.broadcast %62 : vector<32x1xf32> to vector<32x16xf32>
    %65 = arith.mulf %64, %63 : vector<32x16xf32>
    %66 = arith.addf %61, %65 : vector<32x16xf32>
    %67 = vector.extract_strided_slice %20 {offsets = [0, 9], sizes = [32, 1], strides = [1, 1]} : vector<32x16xf32> to vector<32x1xf32>
    %68 = vector.extract_strided_slice %15 {offsets = [0, 144], sizes = [32, 16], strides = [1, 1]} : vector<32x256xf32> to vector<32x16xf32>
    %69 = vector.broadcast %67 : vector<32x1xf32> to vector<32x16xf32>
    %70 = arith.mulf %69, %68 : vector<32x16xf32>
    %71 = arith.addf %66, %70 : vector<32x16xf32>
    %72 = vector.extract_strided_slice %20 {offsets = [0, 10], sizes = [32, 1], strides = [1, 1]} : vector<32x16xf32> to vector<32x1xf32>
    %73 = vector.extract_strided_slice %15 {offsets = [0, 160], sizes = [32, 16], strides = [1, 1]} : vector<32x256xf32> to vector<32x16xf32>
    %74 = vector.broadcast %72 : vector<32x1xf32> to vector<32x16xf32>
    %75 = arith.mulf %74, %73 : vector<32x16xf32>
    %76 = arith.addf %71, %75 : vector<32x16xf32>
    %77 = vector.extract_strided_slice %20 {offsets = [0, 11], sizes = [32, 1], strides = [1, 1]} : vector<32x16xf32> to vector<32x1xf32>
    %78 = vector.extract_strided_slice %15 {offsets = [0, 176], sizes = [32, 16], strides = [1, 1]} : vector<32x256xf32> to vector<32x16xf32>
    %79 = vector.broadcast %77 : vector<32x1xf32> to vector<32x16xf32>
    %80 = arith.mulf %79, %78 : vector<32x16xf32>
    %81 = arith.addf %76, %80 : vector<32x16xf32>
    %82 = vector.extract_strided_slice %20 {offsets = [0, 12], sizes = [32, 1], strides = [1, 1]} : vector<32x16xf32> to vector<32x1xf32>
    %83 = vector.extract_strided_slice %15 {offsets = [0, 192], sizes = [32, 16], strides = [1, 1]} : vector<32x256xf32> to vector<32x16xf32>
    %84 = vector.broadcast %82 : vector<32x1xf32> to vector<32x16xf32>
    %85 = arith.mulf %84, %83 : vector<32x16xf32>
    %86 = arith.addf %81, %85 : vector<32x16xf32>
    %87 = vector.extract_strided_slice %20 {offsets = [0, 13], sizes = [32, 1], strides = [1, 1]} : vector<32x16xf32> to vector<32x1xf32>
    %88 = vector.extract_strided_slice %15 {offsets = [0, 208], sizes = [32, 16], strides = [1, 1]} : vector<32x256xf32> to vector<32x16xf32>
    %89 = vector.broadcast %87 : vector<32x1xf32> to vector<32x16xf32>
    %90 = arith.mulf %89, %88 : vector<32x16xf32>
    %91 = arith.addf %86, %90 : vector<32x16xf32>
    %92 = vector.extract_strided_slice %20 {offsets = [0, 14], sizes = [32, 1], strides = [1, 1]} : vector<32x16xf32> to vector<32x1xf32>
    %93 = vector.extract_strided_slice %15 {offsets = [0, 224], sizes = [32, 16], strides = [1, 1]} : vector<32x256xf32> to vector<32x16xf32>
    %94 = vector.broadcast %92 : vector<32x1xf32> to vector<32x16xf32>
    %95 = arith.mulf %94, %93 : vector<32x16xf32>
    %96 = arith.addf %91, %95 : vector<32x16xf32>
    %97 = vector.extract_strided_slice %20 {offsets = [0, 15], sizes = [32, 1], strides = [1, 1]} : vector<32x16xf32> to vector<32x1xf32>
    %98 = vector.extract_strided_slice %15 {offsets = [0, 240], sizes = [32, 16], strides = [1, 1]} : vector<32x256xf32> to vector<32x16xf32>
    %99 = vector.broadcast %97 : vector<32x1xf32> to vector<32x16xf32>
    %100 = arith.mulf %99, %98 : vector<32x16xf32>
    %101 = arith.addf %96, %100 : vector<32x16xf32>
    %cst_27 = arith.constant dense<0.000000e+00> : vector<16x16xf32>
    %102 = tpu.matmul %1, %101, %cst_27 {dimension_numbers = #tpu.dot_dimension_numbers<[1], [0], [0], [1], [0, 0, 1, 1], [], []>} : vector<16x32xf32>, vector<32x16xf32>, vector<16x16xf32> -> vector<16x16xf32>
    %cst_28 = arith.constant dense<0.000000e+00> : vector<16x48xf32>
    %103 = tpu.matmul %102, %16, %cst_28 {dimension_numbers = #tpu.dot_dimension_numbers<[1], [0], [0], [1], [0, 0, 1, 1], [], []>} : vector<16x16xf32>, vector<16x48xf32>, vector<16x48xf32> -> vector<16x48xf32>
    %104 = vector.broadcast %17 : vector<1x48xf32> to vector<16x48xf32>
    %105 = arith.addf %103, %104 : vector<16x48xf32>
    %cst_29 = arith.constant dense<0.000000e+00> : vector<16x48xf32>
    %106 = tpu.matmul %0, %18, %cst_29 {dimension_numbers = #tpu.dot_dimension_numbers<[1], [0], [0], [1], [0, 0, 1, 1], [], []>} : vector<16x16xf32>, vector<16x48xf32>, vector<16x48xf32> -> vector<16x48xf32>
    %107 = vector.broadcast %19 : vector<1x48xf32> to vector<16x48xf32>
    %108 = arith.addf %106, %107 : vector<16x48xf32>
    %109 = vector.extract_strided_slice %105 {offsets = [0, 0], sizes = [16, 16], strides = [1, 1]} : vector<16x48xf32> to vector<16x16xf32>
    %110 = vector.extract_strided_slice %108 {offsets = [0, 0], sizes = [16, 16], strides = [1, 1]} : vector<16x48xf32> to vector<16x16xf32>
    %111 = arith.addf %109, %110 : vector<16x16xf32>
    %112 = arith.negf %111 : vector<16x16xf32>
    %113 = math.exp %112 : vector<16x16xf32>
    %cst_30 = arith.constant 1.000000e+00 : f32
    %114 = vector.broadcast %cst_30 : f32 to vector<16x16xf32>
    %115 = arith.addf %114, %113 : vector<16x16xf32>
    %116 = arith.divf %114, %115 : vector<16x16xf32>
    %117 = vector.extract_strided_slice %105 {offsets = [0, 16], sizes = [16, 16], strides = [1, 1]} : vector<16x48xf32> to vector<16x16xf32>
    %118 = vector.extract_strided_slice %108 {offsets = [0, 16], sizes = [16, 16], strides = [1, 1]} : vector<16x48xf32> to vector<16x16xf32>
    %119 = arith.addf %117, %118 : vector<16x16xf32>
    %120 = arith.negf %119 : vector<16x16xf32>
    %121 = math.exp %120 : vector<16x16xf32>
    %cst_31 = arith.constant 1.000000e+00 : f32
    %122 = vector.broadcast %cst_31 : f32 to vector<16x16xf32>
    %123 = arith.addf %122, %121 : vector<16x16xf32>
    %124 = arith.divf %122, %123 : vector<16x16xf32>
    %125 = vector.extract_strided_slice %105 {offsets = [0, 32], sizes = [16, 16], strides = [1, 1]} : vector<16x48xf32> to vector<16x16xf32>
    %126 = vector.extract_strided_slice %108 {offsets = [0, 32], sizes = [16, 16], strides = [1, 1]} : vector<16x48xf32> to vector<16x16xf32>
    %127 = arith.mulf %116, %126 : vector<16x16xf32>
    %128 = arith.addf %125, %127 : vector<16x16xf32>
    %129 = math.tanh %128 : vector<16x16xf32>
    %cst_32 = arith.constant 1.000000e+00 : f32
    %130 = vector.broadcast %cst_32 : f32 to vector<16x16xf32>
    %131 = arith.subf %130, %124 : vector<16x16xf32>
    %132 = arith.mulf %131, %129 : vector<16x16xf32>
    %133 = arith.mulf %124, %0 : vector<16x16xf32>
    %134 = arith.addf %132, %133 : vector<16x16xf32>
    %c1_i32 = arith.constant 1 : i32
    %cst_33 = arith.constant dense<0.000000e+00> : vector<32x16xf32>
    %135 = tpu.matmul %2, %134, %cst_33 {dimension_numbers = #tpu.dot_dimension_numbers<[1], [0], [0], [1], [0, 0, 1, 1], [], []>} : vector<32x16xf32>, vector<16x16xf32>, vector<32x16xf32> -> vector<32x16xf32>
    %cst_34 = arith.constant 0.000000e+00 : f32
    %136 = vector.broadcast %cst_34 : f32 to vector<32x16xf32>
    %137 = vector.extract_strided_slice %135 {offsets = [0, 0], sizes = [32, 1], strides = [1, 1]} : vector<32x16xf32> to vector<32x1xf32>
    %138 = vector.extract_strided_slice %15 {offsets = [0, 0], sizes = [32, 16], strides = [1, 1]} : vector<32x256xf32> to vector<32x16xf32>
    %139 = vector.broadcast %137 : vector<32x1xf32> to vector<32x16xf32>
    %140 = arith.mulf %139, %138 : vector<32x16xf32>
    %141 = arith.addf %136, %140 : vector<32x16xf32>
    %142 = vector.extract_strided_slice %135 {offsets = [0, 1], sizes = [32, 1], strides = [1, 1]} : vector<32x16xf32> to vector<32x1xf32>
    %143 = vector.extract_strided_slice %15 {offsets = [0, 16], sizes = [32, 16], strides = [1, 1]} : vector<32x256xf32> to vector<32x16xf32>
    %144 = vector.broadcast %142 : vector<32x1xf32> to vector<32x16xf32>
    %145 = arith.mulf %144, %143 : vector<32x16xf32>
    %146 = arith.addf %141, %145 : vector<32x16xf32>
    %147 = vector.extract_strided_slice %135 {offsets = [0, 2], sizes = [32, 1], strides = [1, 1]} : vector<32x16xf32> to vector<32x1xf32>
    %148 = vector.extract_strided_slice %15 {offsets = [0, 32], sizes = [32, 16], strides = [1, 1]} : vector<32x256xf32> to vector<32x16xf32>
    %149 = vector.broadcast %147 : vector<32x1xf32> to vector<32x16xf32>
    %150 = arith.mulf %149, %148 : vector<32x16xf32>
    %151 = arith.addf %146, %150 : vector<32x16xf32>
    %152 = vector.extract_strided_slice %135 {offsets = [0, 3], sizes = [32, 1], strides = [1, 1]} : vector<32x16xf32> to vector<32x1xf32>
    %153 = vector.extract_strided_slice %15 {offsets = [0, 48], sizes = [32, 16], strides = [1, 1]} : vector<32x256xf32> to vector<32x16xf32>
    %154 = vector.broadcast %152 : vector<32x1xf32> to vector<32x16xf32>
    %155 = arith.mulf %154, %153 : vector<32x16xf32>
    %156 = arith.addf %151, %155 : vector<32x16xf32>
    %157 = vector.extract_strided_slice %135 {offsets = [0, 4], sizes = [32, 1], strides = [1, 1]} : vector<32x16xf32> to vector<32x1xf32>
    %158 = vector.extract_strided_slice %15 {offsets = [0, 64], sizes = [32, 16], strides = [1, 1]} : vector<32x256xf32> to vector<32x16xf32>
    %159 = vector.broadcast %157 : vector<32x1xf32> to vector<32x16xf32>
    %160 = arith.mulf %159, %158 : vector<32x16xf32>
    %161 = arith.addf %156, %160 : vector<32x16xf32>
    %162 = vector.extract_strided_slice %135 {offsets = [0, 5], sizes = [32, 1], strides = [1, 1]} : vector<32x16xf32> to vector<32x1xf32>
    %163 = vector.extract_strided_slice %15 {offsets = [0, 80], sizes = [32, 16], strides = [1, 1]} : vector<32x256xf32> to vector<32x16xf32>
    %164 = vector.broadcast %162 : vector<32x1xf32> to vector<32x16xf32>
    %165 = arith.mulf %164, %163 : vector<32x16xf32>
    %166 = arith.addf %161, %165 : vector<32x16xf32>
    %167 = vector.extract_strided_slice %135 {offsets = [0, 6], sizes = [32, 1], strides = [1, 1]} : vector<32x16xf32> to vector<32x1xf32>
    %168 = vector.extract_strided_slice %15 {offsets = [0, 96], sizes = [32, 16], strides = [1, 1]} : vector<32x256xf32> to vector<32x16xf32>
    %169 = vector.broadcast %167 : vector<32x1xf32> to vector<32x16xf32>
    %170 = arith.mulf %169, %168 : vector<32x16xf32>
    %171 = arith.addf %166, %170 : vector<32x16xf32>
    %172 = vector.extract_strided_slice %135 {offsets = [0, 7], sizes = [32, 1], strides = [1, 1]} : vector<32x16xf32> to vector<32x1xf32>
    %173 = vector.extract_strided_slice %15 {offsets = [0, 112], sizes = [32, 16], strides = [1, 1]} : vector<32x256xf32> to vector<32x16xf32>
    %174 = vector.broadcast %172 : vector<32x1xf32> to vector<32x16xf32>
    %175 = arith.mulf %174, %173 : vector<32x16xf32>
    %176 = arith.addf %171, %175 : vector<32x16xf32>
    %177 = vector.extract_strided_slice %135 {offsets = [0, 8], sizes = [32, 1], strides = [1, 1]} : vector<32x16xf32> to vector<32x1xf32>
    %178 = vector.extract_strided_slice %15 {offsets = [0, 128], sizes = [32, 16], strides = [1, 1]} : vector<32x256xf32> to vector<32x16xf32>
    %179 = vector.broadcast %177 : vector<32x1xf32> to vector<32x16xf32>
    %180 = arith.mulf %179, %178 : vector<32x16xf32>
    %181 = arith.addf %176, %180 : vector<32x16xf32>
    %182 = vector.extract_strided_slice %135 {offsets = [0, 9], sizes = [32, 1], strides = [1, 1]} : vector<32x16xf32> to vector<32x1xf32>
    %183 = vector.extract_strided_slice %15 {offsets = [0, 144], sizes = [32, 16], strides = [1, 1]} : vector<32x256xf32> to vector<32x16xf32>
    %184 = vector.broadcast %182 : vector<32x1xf32> to vector<32x16xf32>
    %185 = arith.mulf %184, %183 : vector<32x16xf32>
    %186 = arith.addf %181, %185 : vector<32x16xf32>
    %187 = vector.extract_strided_slice %135 {offsets = [0, 10], sizes = [32, 1], strides = [1, 1]} : vector<32x16xf32> to vector<32x1xf32>
    %188 = vector.extract_strided_slice %15 {offsets = [0, 160], sizes = [32, 16], strides = [1, 1]} : vector<32x256xf32> to vector<32x16xf32>
    %189 = vector.broadcast %187 : vector<32x1xf32> to vector<32x16xf32>
    %190 = arith.mulf %189, %188 : vector<32x16xf32>
    %191 = arith.addf %186, %190 : vector<32x16xf32>
    %192 = vector.extract_strided_slice %135 {offsets = [0, 11], sizes = [32, 1], strides = [1, 1]} : vector<32x16xf32> to vector<32x1xf32>
    %193 = vector.extract_strided_slice %15 {offsets = [0, 176], sizes = [32, 16], strides = [1, 1]} : vector<32x256xf32> to vector<32x16xf32>
    %194 = vector.broadcast %192 : vector<32x1xf32> to vector<32x16xf32>
    %195 = arith.mulf %194, %193 : vector<32x16xf32>
    %196 = arith.addf %191, %195 : vector<32x16xf32>
    %197 = vector.extract_strided_slice %135 {offsets = [0, 12], sizes = [32, 1], strides = [1, 1]} : vector<32x16xf32> to vector<32x1xf32>
    %198 = vector.extract_strided_slice %15 {offsets = [0, 192], sizes = [32, 16], strides = [1, 1]} : vector<32x256xf32> to vector<32x16xf32>
    %199 = vector.broadcast %197 : vector<32x1xf32> to vector<32x16xf32>
    %200 = arith.mulf %199, %198 : vector<32x16xf32>
    %201 = arith.addf %196, %200 : vector<32x16xf32>
    %202 = vector.extract_strided_slice %135 {offsets = [0, 13], sizes = [32, 1], strides = [1, 1]} : vector<32x16xf32> to vector<32x1xf32>
    %203 = vector.extract_strided_slice %15 {offsets = [0, 208], sizes = [32, 16], strides = [1, 1]} : vector<32x256xf32> to vector<32x16xf32>
    %204 = vector.broadcast %202 : vector<32x1xf32> to vector<32x16xf32>
    %205 = arith.mulf %204, %203 : vector<32x16xf32>
    %206 = arith.addf %201, %205 : vector<32x16xf32>
    %207 = vector.extract_strided_slice %135 {offsets = [0, 14], sizes = [32, 1], strides = [1, 1]} : vector<32x16xf32> to vector<32x1xf32>
    %208 = vector.extract_strided_slice %15 {offsets = [0, 224], sizes = [32, 16], strides = [1, 1]} : vector<32x256xf32> to vector<32x16xf32>
    %209 = vector.broadcast %207 : vector<32x1xf32> to vector<32x16xf32>
    %210 = arith.mulf %209, %208 : vector<32x16xf32>
    %211 = arith.addf %206, %210 : vector<32x16xf32>
    %212 = vector.extract_strided_slice %135 {offsets = [0, 15], sizes = [32, 1], strides = [1, 1]} : vector<32x16xf32> to vector<32x1xf32>
    %213 = vector.extract_strided_slice %15 {offsets = [0, 240], sizes = [32, 16], strides = [1, 1]} : vector<32x256xf32> to vector<32x16xf32>
    %214 = vector.broadcast %212 : vector<32x1xf32> to vector<32x16xf32>
    %215 = arith.mulf %214, %213 : vector<32x16xf32>
    %216 = arith.addf %211, %215 : vector<32x16xf32>
    %cst_35 = arith.constant dense<0.000000e+00> : vector<16x16xf32>
    %217 = tpu.matmul %1, %216, %cst_35 {dimension_numbers = #tpu.dot_dimension_numbers<[1], [0], [0], [1], [0, 0, 1, 1], [], []>} : vector<16x32xf32>, vector<32x16xf32>, vector<16x16xf32> -> vector<16x16xf32>
    %cst_36 = arith.constant dense<0.000000e+00> : vector<16x48xf32>
    %218 = tpu.matmul %217, %16, %cst_36 {dimension_numbers = #tpu.dot_dimension_numbers<[1], [0], [0], [1], [0, 0, 1, 1], [], []>} : vector<16x16xf32>, vector<16x48xf32>, vector<16x48xf32> -> vector<16x48xf32>
    %219 = vector.broadcast %17 : vector<1x48xf32> to vector<16x48xf32>
    %220 = arith.addf %218, %219 : vector<16x48xf32>
    %cst_37 = arith.constant dense<0.000000e+00> : vector<16x48xf32>
    %221 = tpu.matmul %134, %18, %cst_37 {dimension_numbers = #tpu.dot_dimension_numbers<[1], [0], [0], [1], [0, 0, 1, 1], [], []>} : vector<16x16xf32>, vector<16x48xf32>, vector<16x48xf32> -> vector<16x48xf32>
    %222 = vector.broadcast %19 : vector<1x48xf32> to vector<16x48xf32>
    %223 = arith.addf %221, %222 : vector<16x48xf32>
    %224 = vector.extract_strided_slice %220 {offsets = [0, 0], sizes = [16, 16], strides = [1, 1]} : vector<16x48xf32> to vector<16x16xf32>
    %225 = vector.extract_strided_slice %223 {offsets = [0, 0], sizes = [16, 16], strides = [1, 1]} : vector<16x48xf32> to vector<16x16xf32>
    %226 = arith.addf %224, %225 : vector<16x16xf32>
    %227 = arith.negf %226 : vector<16x16xf32>
    %228 = math.exp %227 : vector<16x16xf32>
    %cst_38 = arith.constant 1.000000e+00 : f32
    %229 = vector.broadcast %cst_38 : f32 to vector<16x16xf32>
    %230 = arith.addf %229, %228 : vector<16x16xf32>
    %231 = arith.divf %229, %230 : vector<16x16xf32>
    %232 = vector.extract_strided_slice %220 {offsets = [0, 16], sizes = [16, 16], strides = [1, 1]} : vector<16x48xf32> to vector<16x16xf32>
    %233 = vector.extract_strided_slice %223 {offsets = [0, 16], sizes = [16, 16], strides = [1, 1]} : vector<16x48xf32> to vector<16x16xf32>
    %234 = arith.addf %232, %233 : vector<16x16xf32>
    %235 = arith.negf %234 : vector<16x16xf32>
    %236 = math.exp %235 : vector<16x16xf32>
    %cst_39 = arith.constant 1.000000e+00 : f32
    %237 = vector.broadcast %cst_39 : f32 to vector<16x16xf32>
    %238 = arith.addf %237, %236 : vector<16x16xf32>
    %239 = arith.divf %237, %238 : vector<16x16xf32>
    %240 = vector.extract_strided_slice %220 {offsets = [0, 32], sizes = [16, 16], strides = [1, 1]} : vector<16x48xf32> to vector<16x16xf32>
    %241 = vector.extract_strided_slice %223 {offsets = [0, 32], sizes = [16, 16], strides = [1, 1]} : vector<16x48xf32> to vector<16x16xf32>
    %242 = arith.mulf %231, %241 : vector<16x16xf32>
    %243 = arith.addf %240, %242 : vector<16x16xf32>
    %244 = math.tanh %243 : vector<16x16xf32>
    %cst_40 = arith.constant 1.000000e+00 : f32
    %245 = vector.broadcast %cst_40 : f32 to vector<16x16xf32>
    %246 = arith.subf %245, %239 : vector<16x16xf32>
    %247 = arith.mulf %246, %244 : vector<16x16xf32>
    %248 = arith.mulf %239, %134 : vector<16x16xf32>
    %249 = arith.addf %247, %248 : vector<16x16xf32>
    %c2_i32 = arith.constant 2 : i32
    %cst_41 = arith.constant dense<0.000000e+00> : vector<32x16xf32>
    %250 = tpu.matmul %2, %249, %cst_41 {dimension_numbers = #tpu.dot_dimension_numbers<[1], [0], [0], [1], [0, 0, 1, 1], [], []>} : vector<32x16xf32>, vector<16x16xf32>, vector<32x16xf32> -> vector<32x16xf32>
    %cst_42 = arith.constant 0.000000e+00 : f32
    %251 = vector.broadcast %cst_42 : f32 to vector<32x16xf32>
    %252 = vector.extract_strided_slice %250 {offsets = [0, 0], sizes = [32, 1], strides = [1, 1]} : vector<32x16xf32> to vector<32x1xf32>
    %253 = vector.extract_strided_slice %15 {offsets = [0, 0], sizes = [32, 16], strides = [1, 1]} : vector<32x256xf32> to vector<32x16xf32>
    %254 = vector.broadcast %252 : vector<32x1xf32> to vector<32x16xf32>
    %255 = arith.mulf %254, %253 : vector<32x16xf32>
    %256 = arith.addf %251, %255 : vector<32x16xf32>
    %257 = vector.extract_strided_slice %250 {offsets = [0, 1], sizes = [32, 1], strides = [1, 1]} : vector<32x16xf32> to vector<32x1xf32>
    %258 = vector.extract_strided_slice %15 {offsets = [0, 16], sizes = [32, 16], strides = [1, 1]} : vector<32x256xf32> to vector<32x16xf32>
    %259 = vector.broadcast %257 : vector<32x1xf32> to vector<32x16xf32>
    %260 = arith.mulf %259, %258 : vector<32x16xf32>
    %261 = arith.addf %256, %260 : vector<32x16xf32>
    %262 = vector.extract_strided_slice %250 {offsets = [0, 2], sizes = [32, 1], strides = [1, 1]} : vector<32x16xf32> to vector<32x1xf32>
    %263 = vector.extract_strided_slice %15 {offsets = [0, 32], sizes = [32, 16], strides = [1, 1]} : vector<32x256xf32> to vector<32x16xf32>
    %264 = vector.broadcast %262 : vector<32x1xf32> to vector<32x16xf32>
    %265 = arith.mulf %264, %263 : vector<32x16xf32>
    %266 = arith.addf %261, %265 : vector<32x16xf32>
    %267 = vector.extract_strided_slice %250 {offsets = [0, 3], sizes = [32, 1], strides = [1, 1]} : vector<32x16xf32> to vector<32x1xf32>
    %268 = vector.extract_strided_slice %15 {offsets = [0, 48], sizes = [32, 16], strides = [1, 1]} : vector<32x256xf32> to vector<32x16xf32>
    %269 = vector.broadcast %267 : vector<32x1xf32> to vector<32x16xf32>
    %270 = arith.mulf %269, %268 : vector<32x16xf32>
    %271 = arith.addf %266, %270 : vector<32x16xf32>
    %272 = vector.extract_strided_slice %250 {offsets = [0, 4], sizes = [32, 1], strides = [1, 1]} : vector<32x16xf32> to vector<32x1xf32>
    %273 = vector.extract_strided_slice %15 {offsets = [0, 64], sizes = [32, 16], strides = [1, 1]} : vector<32x256xf32> to vector<32x16xf32>
    %274 = vector.broadcast %272 : vector<32x1xf32> to vector<32x16xf32>
    %275 = arith.mulf %274, %273 : vector<32x16xf32>
    %276 = arith.addf %271, %275 : vector<32x16xf32>
    %277 = vector.extract_strided_slice %250 {offsets = [0, 5], sizes = [32, 1], strides = [1, 1]} : vector<32x16xf32> to vector<32x1xf32>
    %278 = vector.extract_strided_slice %15 {offsets = [0, 80], sizes = [32, 16], strides = [1, 1]} : vector<32x256xf32> to vector<32x16xf32>
    %279 = vector.broadcast %277 : vector<32x1xf32> to vector<32x16xf32>
    %280 = arith.mulf %279, %278 : vector<32x16xf32>
    %281 = arith.addf %276, %280 : vector<32x16xf32>
    %282 = vector.extract_strided_slice %250 {offsets = [0, 6], sizes = [32, 1], strides = [1, 1]} : vector<32x16xf32> to vector<32x1xf32>
    %283 = vector.extract_strided_slice %15 {offsets = [0, 96], sizes = [32, 16], strides = [1, 1]} : vector<32x256xf32> to vector<32x16xf32>
    %284 = vector.broadcast %282 : vector<32x1xf32> to vector<32x16xf32>
    %285 = arith.mulf %284, %283 : vector<32x16xf32>
    %286 = arith.addf %281, %285 : vector<32x16xf32>
    %287 = vector.extract_strided_slice %250 {offsets = [0, 7], sizes = [32, 1], strides = [1, 1]} : vector<32x16xf32> to vector<32x1xf32>
    %288 = vector.extract_strided_slice %15 {offsets = [0, 112], sizes = [32, 16], strides = [1, 1]} : vector<32x256xf32> to vector<32x16xf32>
    %289 = vector.broadcast %287 : vector<32x1xf32> to vector<32x16xf32>
    %290 = arith.mulf %289, %288 : vector<32x16xf32>
    %291 = arith.addf %286, %290 : vector<32x16xf32>
    %292 = vector.extract_strided_slice %250 {offsets = [0, 8], sizes = [32, 1], strides = [1, 1]} : vector<32x16xf32> to vector<32x1xf32>
    %293 = vector.extract_strided_slice %15 {offsets = [0, 128], sizes = [32, 16], strides = [1, 1]} : vector<32x256xf32> to vector<32x16xf32>
    %294 = vector.broadcast %292 : vector<32x1xf32> to vector<32x16xf32>
    %295 = arith.mulf %294, %293 : vector<32x16xf32>
    %296 = arith.addf %291, %295 : vector<32x16xf32>
    %297 = vector.extract_strided_slice %250 {offsets = [0, 9], sizes = [32, 1], strides = [1, 1]} : vector<32x16xf32> to vector<32x1xf32>
    %298 = vector.extract_strided_slice %15 {offsets = [0, 144], sizes = [32, 16], strides = [1, 1]} : vector<32x256xf32> to vector<32x16xf32>
    %299 = vector.broadcast %297 : vector<32x1xf32> to vector<32x16xf32>
    %300 = arith.mulf %299, %298 : vector<32x16xf32>
    %301 = arith.addf %296, %300 : vector<32x16xf32>
    %302 = vector.extract_strided_slice %250 {offsets = [0, 10], sizes = [32, 1], strides = [1, 1]} : vector<32x16xf32> to vector<32x1xf32>
    %303 = vector.extract_strided_slice %15 {offsets = [0, 160], sizes = [32, 16], strides = [1, 1]} : vector<32x256xf32> to vector<32x16xf32>
    %304 = vector.broadcast %302 : vector<32x1xf32> to vector<32x16xf32>
    %305 = arith.mulf %304, %303 : vector<32x16xf32>
    %306 = arith.addf %301, %305 : vector<32x16xf32>
    %307 = vector.extract_strided_slice %250 {offsets = [0, 11], sizes = [32, 1], strides = [1, 1]} : vector<32x16xf32> to vector<32x1xf32>
    %308 = vector.extract_strided_slice %15 {offsets = [0, 176], sizes = [32, 16], strides = [1, 1]} : vector<32x256xf32> to vector<32x16xf32>
    %309 = vector.broadcast %307 : vector<32x1xf32> to vector<32x16xf32>
    %310 = arith.mulf %309, %308 : vector<32x16xf32>
    %311 = arith.addf %306, %310 : vector<32x16xf32>
    %312 = vector.extract_strided_slice %250 {offsets = [0, 12], sizes = [32, 1], strides = [1, 1]} : vector<32x16xf32> to vector<32x1xf32>
    %313 = vector.extract_strided_slice %15 {offsets = [0, 192], sizes = [32, 16], strides = [1, 1]} : vector<32x256xf32> to vector<32x16xf32>
    %314 = vector.broadcast %312 : vector<32x1xf32> to vector<32x16xf32>
    %315 = arith.mulf %314, %313 : vector<32x16xf32>
    %316 = arith.addf %311, %315 : vector<32x16xf32>
    %317 = vector.extract_strided_slice %250 {offsets = [0, 13], sizes = [32, 1], strides = [1, 1]} : vector<32x16xf32> to vector<32x1xf32>
    %318 = vector.extract_strided_slice %15 {offsets = [0, 208], sizes = [32, 16], strides = [1, 1]} : vector<32x256xf32> to vector<32x16xf32>
    %319 = vector.broadcast %317 : vector<32x1xf32> to vector<32x16xf32>
    %320 = arith.mulf %319, %318 : vector<32x16xf32>
    %321 = arith.addf %316, %320 : vector<32x16xf32>
    %322 = vector.extract_strided_slice %250 {offsets = [0, 14], sizes = [32, 1], strides = [1, 1]} : vector<32x16xf32> to vector<32x1xf32>
    %323 = vector.extract_strided_slice %15 {offsets = [0, 224], sizes = [32, 16], strides = [1, 1]} : vector<32x256xf32> to vector<32x16xf32>
    %324 = vector.broadcast %322 : vector<32x1xf32> to vector<32x16xf32>
    %325 = arith.mulf %324, %323 : vector<32x16xf32>
    %326 = arith.addf %321, %325 : vector<32x16xf32>
    %327 = vector.extract_strided_slice %250 {offsets = [0, 15], sizes = [32, 1], strides = [1, 1]} : vector<32x16xf32> to vector<32x1xf32>
    %328 = vector.extract_strided_slice %15 {offsets = [0, 240], sizes = [32, 16], strides = [1, 1]} : vector<32x256xf32> to vector<32x16xf32>
    %329 = vector.broadcast %327 : vector<32x1xf32> to vector<32x16xf32>
    %330 = arith.mulf %329, %328 : vector<32x16xf32>
    %331 = arith.addf %326, %330 : vector<32x16xf32>
    %cst_43 = arith.constant dense<0.000000e+00> : vector<16x16xf32>
    %332 = tpu.matmul %1, %331, %cst_43 {dimension_numbers = #tpu.dot_dimension_numbers<[1], [0], [0], [1], [0, 0, 1, 1], [], []>} : vector<16x32xf32>, vector<32x16xf32>, vector<16x16xf32> -> vector<16x16xf32>
    %cst_44 = arith.constant dense<0.000000e+00> : vector<16x48xf32>
    %333 = tpu.matmul %332, %16, %cst_44 {dimension_numbers = #tpu.dot_dimension_numbers<[1], [0], [0], [1], [0, 0, 1, 1], [], []>} : vector<16x16xf32>, vector<16x48xf32>, vector<16x48xf32> -> vector<16x48xf32>
    %334 = vector.broadcast %17 : vector<1x48xf32> to vector<16x48xf32>
    %335 = arith.addf %333, %334 : vector<16x48xf32>
    %cst_45 = arith.constant dense<0.000000e+00> : vector<16x48xf32>
    %336 = tpu.matmul %249, %18, %cst_45 {dimension_numbers = #tpu.dot_dimension_numbers<[1], [0], [0], [1], [0, 0, 1, 1], [], []>} : vector<16x16xf32>, vector<16x48xf32>, vector<16x48xf32> -> vector<16x48xf32>
    %337 = vector.broadcast %19 : vector<1x48xf32> to vector<16x48xf32>
    %338 = arith.addf %336, %337 : vector<16x48xf32>
    %339 = vector.extract_strided_slice %335 {offsets = [0, 0], sizes = [16, 16], strides = [1, 1]} : vector<16x48xf32> to vector<16x16xf32>
    %340 = vector.extract_strided_slice %338 {offsets = [0, 0], sizes = [16, 16], strides = [1, 1]} : vector<16x48xf32> to vector<16x16xf32>
    %341 = arith.addf %339, %340 : vector<16x16xf32>
    %342 = arith.negf %341 : vector<16x16xf32>
    %343 = math.exp %342 : vector<16x16xf32>
    %cst_46 = arith.constant 1.000000e+00 : f32
    %344 = vector.broadcast %cst_46 : f32 to vector<16x16xf32>
    %345 = arith.addf %344, %343 : vector<16x16xf32>
    %346 = arith.divf %344, %345 : vector<16x16xf32>
    %347 = vector.extract_strided_slice %335 {offsets = [0, 16], sizes = [16, 16], strides = [1, 1]} : vector<16x48xf32> to vector<16x16xf32>
    %348 = vector.extract_strided_slice %338 {offsets = [0, 16], sizes = [16, 16], strides = [1, 1]} : vector<16x48xf32> to vector<16x16xf32>
    %349 = arith.addf %347, %348 : vector<16x16xf32>
    %350 = arith.negf %349 : vector<16x16xf32>
    %351 = math.exp %350 : vector<16x16xf32>
    %cst_47 = arith.constant 1.000000e+00 : f32
    %352 = vector.broadcast %cst_47 : f32 to vector<16x16xf32>
    %353 = arith.addf %352, %351 : vector<16x16xf32>
    %354 = arith.divf %352, %353 : vector<16x16xf32>
    %355 = vector.extract_strided_slice %335 {offsets = [0, 32], sizes = [16, 16], strides = [1, 1]} : vector<16x48xf32> to vector<16x16xf32>
    %356 = vector.extract_strided_slice %338 {offsets = [0, 32], sizes = [16, 16], strides = [1, 1]} : vector<16x48xf32> to vector<16x16xf32>
    %357 = arith.mulf %346, %356 : vector<16x16xf32>
    %358 = arith.addf %355, %357 : vector<16x16xf32>
    %359 = math.tanh %358 : vector<16x16xf32>
    %cst_48 = arith.constant 1.000000e+00 : f32
    %360 = vector.broadcast %cst_48 : f32 to vector<16x16xf32>
    %361 = arith.subf %360, %354 : vector<16x16xf32>
    %362 = arith.mulf %361, %359 : vector<16x16xf32>
    %363 = arith.mulf %354, %249 : vector<16x16xf32>
    %364 = arith.addf %362, %363 : vector<16x16xf32>
    %c0_49 = arith.constant 0 : index
    %c0_50 = arith.constant 0 : index
    %365 = vector.load %arg13[%c0_49, %c0_50] : memref<16x128xf32, #tpu.memory_space<vmem>>, vector<16x128xf32>
    %cst_51 = arith.constant dense<0.000000e+00> : vector<16x128xf32>
    %366 = tpu.matmul %364, %365, %cst_51 {dimension_numbers = #tpu.dot_dimension_numbers<[1], [0], [0], [1], [0, 0, 1, 1], [], []>} : vector<16x16xf32>, vector<16x128xf32>, vector<16x128xf32> -> vector<16x128xf32>
    %c0_52 = arith.constant 0 : index
    %c0_53 = arith.constant 0 : index
    %367 = vector.load %arg14[%c0_52, %c0_53] : memref<16x128xf32, #tpu.memory_space<vmem>>, vector<16x128xf32>
    %cst_54 = arith.constant dense<0.000000e+00> : vector<16x128xf32>
    %368 = tpu.matmul %0, %367, %cst_54 {dimension_numbers = #tpu.dot_dimension_numbers<[1], [0], [0], [1], [0, 0, 1, 1], [], []>} : vector<16x16xf32>, vector<16x128xf32>, vector<16x128xf32> -> vector<16x128xf32>
    %369 = arith.addf %366, %368 : vector<16x128xf32>
    %c0_55 = arith.constant 0 : index
    %c0_56 = arith.constant 0 : index
    %370 = vector.load %arg15[%c0_55, %c0_56] : memref<1x128xf32, #tpu.memory_space<vmem>>, vector<1x128xf32>
    %371 = vector.broadcast %370 : vector<1x128xf32> to vector<16x128xf32>
    %372 = arith.addf %369, %371 : vector<16x128xf32>
    %cst_57 = arith.constant 0.000000e+00 : f32
    %373 = vector.broadcast %cst_57 : f32 to vector<16x128xf32>
    %374 = arith.maximumf %372, %373 : vector<16x128xf32>
    %c0_58 = arith.constant 0 : index
    %c0_59 = arith.constant 0 : index
    %375 = vector.load %arg16[%c0_58, %c0_59] : memref<128x16xf32, #tpu.memory_space<vmem>>, vector<128x16xf32>
    %cst_60 = arith.constant dense<0.000000e+00> : vector<16x16xf32>
    %376 = tpu.matmul %374, %375, %cst_60 {dimension_numbers = #tpu.dot_dimension_numbers<[1], [0], [0], [1], [0, 0, 1, 1], [], []>} : vector<16x128xf32>, vector<128x16xf32>, vector<16x16xf32> -> vector<16x16xf32>
    %c0_61 = arith.constant 0 : index
    %c0_62 = arith.constant 0 : index
    %377 = vector.load %arg17[%c0_61, %c0_62] : memref<1x16xf32, #tpu.memory_space<vmem>>, vector<1x16xf32>
    %378 = vector.broadcast %377 : vector<1x16xf32> to vector<16x16xf32>
    %379 = arith.addf %376, %378 : vector<16x16xf32>
    %c0_63 = arith.constant 0 : index
    %c0_64 = arith.constant 0 : index
    %380 = vector.load %arg18[%c0_63, %c0_64] : memref<16x128xf32, #tpu.memory_space<vmem>>, vector<16x128xf32>
    %cst_65 = arith.constant dense<0.000000e+00> : vector<16x128xf32>
    %381 = tpu.matmul %364, %380, %cst_65 {dimension_numbers = #tpu.dot_dimension_numbers<[1], [0], [0], [1], [0, 0, 1, 1], [], []>} : vector<16x16xf32>, vector<16x128xf32>, vector<16x128xf32> -> vector<16x128xf32>
    %c0_66 = arith.constant 0 : index
    %c0_67 = arith.constant 0 : index
    %382 = vector.load %arg19[%c0_66, %c0_67] : memref<1x128xf32, #tpu.memory_space<vmem>>, vector<1x128xf32>
    %383 = vector.broadcast %382 : vector<1x128xf32> to vector<16x128xf32>
    %384 = arith.addf %381, %383 : vector<16x128xf32>
    %cst_68 = arith.constant 0.000000e+00 : f32
    %385 = vector.broadcast %cst_68 : f32 to vector<16x128xf32>
    %386 = arith.maximumf %384, %385 : vector<16x128xf32>
    %c0_69 = arith.constant 0 : index
    %c0_70 = arith.constant 0 : index
    %387 = vector.load %arg20[%c0_69, %c0_70] : memref<128x16xf32, #tpu.memory_space<vmem>>, vector<128x16xf32>
    %cst_71 = arith.constant dense<0.000000e+00> : vector<16x16xf32>
    %388 = tpu.matmul %386, %387, %cst_71 {dimension_numbers = #tpu.dot_dimension_numbers<[1], [0], [0], [1], [0, 0, 1, 1], [], []>} : vector<16x128xf32>, vector<128x16xf32>, vector<16x16xf32> -> vector<16x16xf32>
    %c0_72 = arith.constant 0 : index
    %c0_73 = arith.constant 0 : index
    %389 = vector.load %arg21[%c0_72, %c0_73] : memref<1x16xf32, #tpu.memory_space<vmem>>, vector<1x16xf32>
    %390 = vector.broadcast %389 : vector<1x16xf32> to vector<16x16xf32>
    %391 = arith.addf %388, %390 : vector<16x16xf32>
    %392 = arith.negf %379 : vector<16x16xf32>
    %393 = math.exp %392 : vector<16x16xf32>
    %cst_74 = arith.constant 1.000000e+00 : f32
    %394 = vector.broadcast %cst_74 : f32 to vector<16x16xf32>
    %395 = arith.addf %394, %393 : vector<16x16xf32>
    %396 = arith.divf %394, %395 : vector<16x16xf32>
    %397 = arith.mulf %396, %391 : vector<16x16xf32>
    %c0_75 = arith.constant 0 : index
    %c0_76 = arith.constant 0 : index
    %398 = vector.load %arg3[%c0_75, %c0_76] : memref<2x16xf32, #tpu.memory_space<vmem>>, vector<2x16xf32>
    %cst_77 = arith.constant dense<0.000000e+00> : vector<2x16xf32>
    %399 = tpu.matmul %398, %397, %cst_77 {dimension_numbers = #tpu.dot_dimension_numbers<[1], [0], [0], [1], [0, 0, 1, 1], [], []>} : vector<2x16xf32>, vector<16x16xf32>, vector<2x16xf32> -> vector<2x16xf32>
    %c0_78 = arith.constant 0 : index
    %c0_79 = arith.constant 0 : index
    %400 = vector.load %arg22[%c0_78, %c0_79] : memref<16x128xf32, #tpu.memory_space<vmem>>, vector<16x128xf32>
    %cst_80 = arith.constant dense<0.000000e+00> : vector<2x128xf32>
    %401 = tpu.matmul %399, %400, %cst_80 {dimension_numbers = #tpu.dot_dimension_numbers<[1], [0], [0], [1], [0, 0, 1, 1], [], []>} : vector<2x16xf32>, vector<16x128xf32>, vector<2x128xf32> -> vector<2x128xf32>
    %c0_81 = arith.constant 0 : index
    %c0_82 = arith.constant 0 : index
    %402 = vector.load %arg23[%c0_81, %c0_82] : memref<1x128xf32, #tpu.memory_space<vmem>>, vector<1x128xf32>
    %403 = vector.broadcast %402 : vector<1x128xf32> to vector<2x128xf32>
    %404 = arith.addf %401, %403 : vector<2x128xf32>
    %cst_83 = arith.constant 0.000000e+00 : f32
    %405 = vector.broadcast %cst_83 : f32 to vector<2x128xf32>
    %406 = arith.maximumf %404, %405 : vector<2x128xf32>
    %c0_84 = arith.constant 0 : index
    %c0_85 = arith.constant 0 : index
    %407 = vector.load %arg24[%c0_84, %c0_85] : memref<128x128xf32, #tpu.memory_space<vmem>>, vector<128x128xf32>
    %cst_86 = arith.constant dense<0.000000e+00> : vector<2x128xf32>
    %408 = tpu.matmul %406, %407, %cst_86 {dimension_numbers = #tpu.dot_dimension_numbers<[1], [0], [0], [1], [0, 0, 1, 1], [], []>} : vector<2x128xf32>, vector<128x128xf32>, vector<2x128xf32> -> vector<2x128xf32>
    %c0_87 = arith.constant 0 : index
    %c0_88 = arith.constant 0 : index
    %409 = vector.load %arg25[%c0_87, %c0_88] : memref<1x128xf32, #tpu.memory_space<vmem>>, vector<1x128xf32>
    %410 = vector.broadcast %409 : vector<1x128xf32> to vector<2x128xf32>
    %411 = arith.addf %408, %410 : vector<2x128xf32>
    %412 = arith.negf %411 : vector<2x128xf32>
    %413 = math.exp %412 : vector<2x128xf32>
    %cst_89 = arith.constant 1.000000e+00 : f32
    %414 = vector.broadcast %cst_89 : f32 to vector<2x128xf32>
    %415 = arith.addf %414, %413 : vector<2x128xf32>
    %416 = arith.divf %414, %415 : vector<2x128xf32>
    %c0_90 = arith.constant 0 : index
    %c0_91 = arith.constant 0 : index
    %417 = vector.load %arg26[%c0_90, %c0_91] : memref<2x128xf32, #tpu.memory_space<vmem>>, vector<2x128xf32>
    tpu.vector_store %arg26[%c0_90, %c0_91], %416 {strides = array<i32>} : memref<2x128xf32, #tpu.memory_space<vmem>>, vector<2x128xf32>,
    return
  }
}

</mosaic_0001>

<llo_original>
// kernel: mpnn_forward.1
$region0: #{mpnn_forward.1}
  #allocation0 [shape = 'u32[]', space=smem, size = 0x4, offset = 0x4, fixed_abs, tag = 'smem constant byte address 0x4 - core index']
  #allocation1 [shape = 'u32[144,128]{1,0:T(1,128)}', space=vmem, size = 0x12000, scoped, tag = 'internal scratch']
  %s0 = inlined_call_operand.hbm [shape: f32[16,16], index: 0, kind: input, shape index: {}]
  %s1 = inlined_call_operand.vmem [shape: f32[16,32], index: 1, kind: input, shape index: {}]
  %s2 = inlined_call_operand.vmem [shape: f32[32,16], index: 2, kind: input, shape index: {}]
  %s3 = inlined_call_operand.vmem [shape: f32[2,16], index: 3, kind: input, shape index: {}]
  %s4 = inlined_call_operand.vmem [shape: f32[32,8], index: 4, kind: input, shape index: {}]
  %s5 = inlined_call_operand.hbm [shape: f32[8,128], index: 5, kind: input, shape index: {}]
  %s6 = inlined_call_operand.hbm [shape: f32[1,128], index: 6, kind: input, shape index: {}]
  %s7 = inlined_call_operand.vmem [shape: f32[128,256], index: 7, kind: input, shape index: {}]
  %s8 = inlined_call_operand.hbm [shape: f32[1,256], index: 8, kind: input, shape index: {}]
  %s9 = inlined_call_operand.hbm [shape: f32[16,48], index: 9, kind: input, shape index: {}]
  %s10 = inlined_call_operand.hbm [shape: f32[1,48], index: 10, kind: input, shape index: {}]
  %s11 = inlined_call_operand.hbm [shape: f32[16,48], index: 11, kind: input, shape index: {}]
  %s12 = inlined_call_operand.hbm [shape: f32[1,48], index: 12, kind: input, shape index: {}]
  %s13 = inlined_call_operand.hbm [shape: f32[16,128], index: 13, kind: input, shape index: {}]
  %s14 = inlined_call_operand.hbm [shape: f32[16,128], index: 14, kind: input, shape index: {}]
  %s15 = inlined_call_operand.hbm [shape: f32[1,128], index: 15, kind: input, shape index: {}]
  %s16 = inlined_call_operand.vmem [shape: f32[128,16], index: 16, kind: input, shape index: {}]
  %s17 = inlined_call_operand.hbm [shape: f32[1,16], index: 17, kind: input, shape index: {}]
  %s18 = inlined_call_operand.hbm [shape: f32[16,128], index: 18, kind: input, shape index: {}]
  %s19 = inlined_call_operand.hbm [shape: f32[1,128], index: 19, kind: input, shape index: {}]
  %s20 = inlined_call_operand.vmem [shape: f32[128,16], index: 20, kind: input, shape index: {}]
  %s21 = inlined_call_operand.vmem [shape: f32[1,16], index: 21, kind: input, shape index: {}]
  %s22 = inlined_call_operand.hbm [shape: f32[16,128], index: 22, kind: input, shape index: {}]
  %s23 = inlined_call_operand.hbm [shape: f32[1,128], index: 23, kind: input, shape index: {}]
  %s24 = inlined_call_operand.vmem [shape: f32[128,128], index: 24, kind: input, shape index: {}]
  %s25 = inlined_call_operand.hbm [shape: f32[1,128], index: 25, kind: input, shape index: {}]
  %s26 = inlined_call_operand.vmem [shape: f32[2,128], index: 26, kind: output, shape index: {}]
  %s27 = sld [smem:[#allocation0]]
  $region182: #{mpnn_forward.1} parent=0
    _
  %s29 = ssub.s32 1, %s27
  %s30 = scalar_select 0, %s29, %s27
  $region1: #{mpnn_forward.1} parent=0
    #allocation2 [shape = 'u8[8192]{0}', space=vmem, size = 0x2000, scoped, tag = 'input window, operand 0, single buffered']
    #allocation3 [shape = 's32[1]{0}', space=sflag, size = 0x4, scoped, tag = 'scoped memory for mpnn_forward.1']
    #allocation4 [shape = 'u8[4096]{0}', space=vmem, size = 0x1000, scoped, tag = 'input window, operand 5, single buffered']
    #allocation5 [shape = 's32[1]{0}', space=sflag, size = 0x4, scoped, tag = 'scoped memory for mpnn_forward.1']
    #allocation6 [shape = 'u8[512]{0}', space=vmem, size = 0x400, scoped, tag = 'input window, operand 6, single buffered']
    #allocation7 [shape = 'u8[1024]{0}', space=vmem, size = 0x400, scoped, tag = 'input window, operand 8, single buffered']
    #allocation8 [shape = 's32[1]{0}', space=sflag, size = 0x4, scoped, tag = 'scoped memory for mpnn_forward.1']
    #allocation9 [shape = 'u8[8192]{0}', space=vmem, size = 0x2000, scoped, tag = 'input window, operand 9, single buffered']
    #allocation10 [shape = 'u8[512]{0}', space=vmem, size = 0x400, scoped, tag = 'input window, operand 10, single buffered']
    #allocation11 [shape = 's32[1]{0}', space=sflag, size = 0x4, scoped, tag = 'scoped memory for mpnn_forward.1']
    #allocation12 [shape = 'u8[8192]{0}', space=vmem, size = 0x2000, scoped, tag = 'input window, operand 11, single buffered']
    #allocation13 [shape = 'u8[512]{0}', space=vmem, size = 0x400, scoped, tag = 'input window, operand 12, single buffered']
    #allocation14 [shape = 's32[1]{0}', space=sflag, size = 0x4, scoped, tag = 'scoped memory for mpnn_forward.1']
    #allocation15 [shape = 'u8[8192]{0}', space=vmem, size = 0x2000, scoped, tag = 'input window, operand 13, single buffered']
    #allocation16 [shape = 'u8[8192]{0}', space=vmem, size = 0x2000, scoped, tag = 'input window, operand 14, single buffered']
    #allocation17 [shape = 's32[1]{0}', space=sflag, size = 0x4, scoped, tag = 'scoped memory for mpnn_forward.1']
    #allocation18 [shape = 'u8[512]{0}', space=vmem, size = 0x400, scoped, tag = 'input window, operand 15, single buffered']
    #allocation19 [shape = 'u8[512]{0}', space=vmem, size = 0x400, scoped, tag = 'input window, operand 17, single buffered']
    #allocation20 [shape = 's32[1]{0}', space=sflag, size = 0x4, scoped, tag = 'scoped memory for mpnn_forward.1']
    #allocation21 [shape = 'u8[8192]{0}', space=vmem, size = 0x2000, scoped, tag = 'input window, operand 18, single buffered']
    #allocation22 [shape = 'u8[512]{0}', space=vmem, size = 0x400, scoped, tag = 'input window, operand 19, single buffered']
    #allocation23 [shape = 's32[1]{0}', space=sflag, size = 0x4, scoped, tag = 'scoped memory for mpnn_forward.1']
    #allocation24 [shape = 'u8[8192]{0}', space=vmem, size = 0x2000, scoped, tag = 'input window, operand 22, single buffered']
    #allocation25 [shape = 'u8[512]{0}', space=vmem, size = 0x400, scoped, tag = 'input window, operand 23, single buffered']
    #allocation26 [shape = 's32[1]{0}', space=sflag, size = 0x4, scoped, tag = 'scoped memory for mpnn_forward.1']
    #allocation27 [shape = 'u8[512]{0}', space=vmem, size = 0x400, scoped, tag = 'input window, operand 25, single buffered']
    %31 = vsyncpa [#allocation3], 0
    %32 = vsyncpa [#allocation5], 0
    %33 = vsyncpa [#allocation8], 0
    %34 = vsyncpa [#allocation11], 0
    %35 = vsyncpa [#allocation14], 0
    %36 = vsyncpa [#allocation17], 0
    %37 = vsyncpa [#allocation20], 0
    %38 = vsyncpa [#allocation23], 0
    %39 = vsyncpa [#allocation26], 0
    // Predicated region
    $region2: #{mpnn_forward.1} parent=1 // pred_check
      _
    $region3: #{mpnn_forward.1} parent=1 // pred_check_branch
      %41 = sbr.rel (0) target = $region5
    $region4: #{mpnn_forward.1} parent=1 // pred_region
      %s43 = ssub.s32 256, 256
      %44 = vsyncadd [#allocation3], %s43
      %s45 = sshll.u32 [#allocation2], 4
      %s46 = int_to_ptr.vmem [resolvable:$true] %s45
      %51 = dma.hbm_to_vmem [thread:$0]  %s0, 256, %s46, [#allocation3], 128, 128, 8
    $region5: #{mpnn_forward.1} parent=1 // pred_fallthru
      _
    // Predicated region
    $region6: #{mpnn_forward.1} parent=1 // pred_check
      _
    $region7: #{mpnn_forward.1} parent=1 // pred_check_branch
      %53 = sbr.rel (0) target = $region9
    $region8: #{mpnn_forward.1} parent=1 // pred_region
      _
    $region9: #{mpnn_forward.1} parent=1 // pred_fallthru
      _
    // Predicated region
    $region10: #{mpnn_forward.1} parent=1 // pred_check
      _
    $region11: #{mpnn_forward.1} parent=1 // pred_check_branch
      %55 = sbr.rel (0) target = $region13
    $region12: #{mpnn_forward.1} parent=1 // pred_region
      _
    $region13: #{mpnn_forward.1} parent=1 // pred_fallthru
      _
    // Predicated region
    $region14: #{mpnn_forward.1} parent=1 // pred_check
      _
    $region15: #{mpnn_forward.1} parent=1 // pred_check_branch
      %57 = sbr.rel (0) target = $region17
    $region16: #{mpnn_forward.1} parent=1 // pred_region
      _
    $region17: #{mpnn_forward.1} parent=1 // pred_fallthru
      _
    // Predicated region
    $region18: #{mpnn_forward.1} parent=1 // pred_check
      _
    $region19: #{mpnn_forward.1} parent=1 // pred_check_branch
      %59 = sbr.rel (0) target = $region21
    $region20: #{mpnn_forward.1} parent=1 // pred_region
      _
    $region21: #{mpnn_forward.1} parent=1 // pred_fallthru
      _
    // Predicated region
    $region22: #{mpnn_forward.1} parent=1 // pred_check
      _
    $region23: #{mpnn_forward.1} parent=1 // pred_check_branch
      %61 = sbr.rel (0) target = $region25
    $region24: #{mpnn_forward.1} parent=1 // pred_region
      %s63 = ssub.s32 128, 128
      %64 = vsyncadd [#allocation5], %s63
      %s66 = sshll.u32 [#allocation4], 4
      %s67 = int_to_ptr.vmem [resolvable:$true] %s66
      %69 = dma.hbm_to_vmem [thread:$0]  %s5, 128, %s67, [#allocation5]
    $region25: #{mpnn_forward.1} parent=1 // pred_fallthru
      _
    // Predicated region
    $region26: #{mpnn_forward.1} parent=1 // pred_check
      _
    $region27: #{mpnn_forward.1} parent=1 // pred_check_branch
      %71 = sbr.rel (0) target = $region29
    $region28: #{mpnn_forward.1} parent=1 // pred_region
      %s73 = ssub.s32 16, 16
      %74 = vsyncadd [#allocation5], %s73
      %s76 = sshll.u32 [#allocation6], 4
      %s77 = int_to_ptr.vmem [resolvable:$true] %s76
      %79 = dma.hbm_to_vmem [thread:$0]  %s6, 16, %s77, [#allocation5]
    $region29: #{mpnn_forward.1} parent=1 // pred_fallthru
      _
    // Predicated region
    $region30: #{mpnn_forward.1} parent=1 // pred_check
      _
    $region31: #{mpnn_forward.1} parent=1 // pred_check_branch
      %81 = sbr.rel (0) target = $region33
    $region32: #{mpnn_forward.1} parent=1 // pred_region
      _
    $region33: #{mpnn_forward.1} parent=1 // pred_fallthru
      _
    // Predicated region
    $region34: #{mpnn_forward.1} parent=1 // pred_check
      _
    $region35: #{mpnn_forward.1} parent=1 // pred_check_branch
      %83 = sbr.rel (0) target = $region37
    $region36: #{mpnn_forward.1} parent=1 // pred_region
      %s85 = ssub.s32 32, 32
      %86 = vsyncadd [#allocation8], %s85
      %s88 = sshll.u32 [#allocation7], 4
      %s89 = int_to_ptr.vmem [resolvable:$true] %s88
      %91 = dma.hbm_to_vmem [thread:$0]  %s8, 32, %s89, [#allocation8]
    $region37: #{mpnn_forward.1} parent=1 // pred_fallthru
      _
    // Predicated region
    $region38: #{mpnn_forward.1} parent=1 // pred_check
      _
    $region39: #{mpnn_forward.1} parent=1 // pred_check_branch
      %93 = sbr.rel (0) target = $region41
    $region40: #{mpnn_forward.1} parent=1 // pred_region
      %s95 = ssub.s32 256, 256
      %96 = vsyncadd [#allocation8], %s95
      %s97 = sshll.u32 [#allocation9], 4
      %s98 = int_to_ptr.vmem [resolvable:$true] %s97
      %103 = dma.hbm_to_vmem [thread:$0]  %s9, 256, %s98, [#allocation8], 128, 128, 8
    $region41: #{mpnn_forward.1} parent=1 // pred_fallthru
      _
    // Predicated region
    $region42: #{mpnn_forward.1} parent=1 // pred_check
      _
    $region43: #{mpnn_forward.1} parent=1 // pred_check_branch
      %105 = sbr.rel (0) target = $region45
    $region44: #{mpnn_forward.1} parent=1 // pred_region
      %s107 = ssub.s32 16, 16
      %108 = vsyncadd [#allocation11], %s107
      %s110 = sshll.u32 [#allocation10], 4
      %s111 = int_to_ptr.vmem [resolvable:$true] %s110
      %113 = dma.hbm_to_vmem [thread:$0]  %s10, 16, %s111, [#allocation11]
    $region45: #{mpnn_forward.1} parent=1 // pred_fallthru
      _
    // Predicated region
    $region46: #{mpnn_forward.1} parent=1 // pred_check
      _
    $region47: #{mpnn_forward.1} parent=1 // pred_check_branch
      %115 = sbr.rel (0) target = $region49
    $region48: #{mpnn_forward.1} parent=1 // pred_region
      %s117 = ssub.s32 256, 256
      %118 = vsyncadd [#allocation11], %s117
      %s119 = sshll.u32 [#allocation12], 4
      %s120 = int_to_ptr.vmem [resolvable:$true] %s119
      %125 = dma.hbm_to_vmem [thread:$0]  %s11, 256, %s120, [#allocation11], 128, 128, 8
    $region49: #{mpnn_forward.1} parent=1 // pred_fallthru
      _
    // Predicated region
    $region50: #{mpnn_forward.1} parent=1 // pred_check
      _
    $region51: #{mpnn_forward.1} parent=1 // pred_check_branch
      %127 = sbr.rel (0) target = $region53
    $region52: #{mpnn_forward.1} parent=1 // pred_region
      %s129 = ssub.s32 16, 16
      %130 = vsyncadd [#allocation14], %s129
      %s132 = sshll.u32 [#allocation13], 4
      %s133 = int_to_ptr.vmem [resolvable:$true] %s132
      %135 = dma.hbm_to_vmem [thread:$0]  %s12, 16, %s133, [#allocation14]
    $region53: #{mpnn_forward.1} parent=1 // pred_fallthru
      _
    // Predicated region
    $region54: #{mpnn_forward.1} parent=1 // pred_check
      _
    $region55: #{mpnn_forward.1} parent=1 // pred_check_branch
      %137 = sbr.rel (0) target = $region57
    $region56: #{mpnn_forward.1} parent=1 // pred_region
      %s139 = ssub.s32 256, 256
      %140 = vsyncadd [#allocation14], %s139
      %s141 = sshll.u32 [#allocation15], 4
      %s142 = int_to_ptr.vmem [resolvable:$true] %s141
      %147 = dma.hbm_to_vmem [thread:$0]  %s13, 256, %s142, [#allocation14], 128, 128, 8
    $region57: #{mpnn_forward.1} parent=1 // pred_fallthru
      _
    // Predicated region
    $region58: #{mpnn_forward.1} parent=1 // pred_check
      _
    $region59: #{mpnn_forward.1} parent=1 // pred_check_branch
      %149 = sbr.rel (0) target = $region61
    $region60: #{mpnn_forward.1} parent=1 // pred_region
      %s151 = ssub.s32 256, 256
      %152 = vsyncadd [#allocation17], %s151
      %s153 = sshll.u32 [#allocation16], 4
      %s154 = int_to_ptr.vmem [resolvable:$true] %s153
      %159 = dma.hbm_to_vmem [thread:$0]  %s14, 256, %s154, [#allocation17], 128, 128, 8
    $region61: #{mpnn_forward.1} parent=1 // pred_fallthru
      _
    // Predicated region
    $region62: #{mpnn_forward.1} parent=1 // pred_check
      _
    $region63: #{mpnn_forward.1} parent=1 // pred_check_branch
      %161 = sbr.rel (0) target = $region65
    $region64: #{mpnn_forward.1} parent=1 // pred_region
      %s163 = ssub.s32 16, 16
      %164 = vsyncadd [#allocation17], %s163
      %s166 = sshll.u32 [#allocation18], 4
      %s167 = int_to_ptr.vmem [resolvable:$true] %s166
      %169 = dma.hbm_to_vmem [thread:$0]  %s15, 16, %s167, [#allocation17]
    $region65: #{mpnn_forward.1} parent=1 // pred_fallthru
      _
    // Predicated region
    $region66: #{mpnn_forward.1} parent=1 // pred_check
      _
    $region67: #{mpnn_forward.1} parent=1 // pred_check_branch
      %171 = sbr.rel (0) target = $region69
    $region68: #{mpnn_forward.1} parent=1 // pred_region
      _
    $region69: #{mpnn_forward.1} parent=1 // pred_fallthru
      _
    // Predicated region
    $region70: #{mpnn_forward.1} parent=1 // pred_check
      _
    $region71: #{mpnn_forward.1} parent=1 // pred_check_branch
      %173 = sbr.rel (0) target = $region73
    $region72: #{mpnn_forward.1} parent=1 // pred_region
      %s175 = ssub.s32 16, 16
      %176 = vsyncadd [#allocation20], %s175
      %s178 = sshll.u32 [#allocation19], 4
      %s179 = int_to_ptr.vmem [resolvable:$true] %s178
      %181 = dma.hbm_to_vmem [thread:$0]  %s17, 16, %s179, [#allocation20]
    $region73: #{mpnn_forward.1} parent=1 // pred_fallthru
      _
    // Predicated region
    $region74: #{mpnn_forward.1} parent=1 // pred_check
      _
    $region75: #{mpnn_forward.1} parent=1 // pred_check_branch
      %183 = sbr.rel (0) target = $region77
    $region76: #{mpnn_forward.1} parent=1 // pred_region
      %s185 = ssub.s32 256, 256
      %186 = vsyncadd [#allocation20], %s185
      %s187 = sshll.u32 [#allocation21], 4
      %s188 = int_to_ptr.vmem [resolvable:$true] %s187
      %193 = dma.hbm_to_vmem [thread:$0]  %s18, 256, %s188, [#allocation20], 128, 128, 8
    $region77: #{mpnn_forward.1} parent=1 // pred_fallthru
      _
    // Predicated region
    $region78: #{mpnn_forward.1} parent=1 // pred_check
      _
    $region79: #{mpnn_forward.1} parent=1 // pred_check_branch
      %195 = sbr.rel (0) target = $region81
    $region80: #{mpnn_forward.1} parent=1 // pred_region
      %s197 = ssub.s32 16, 16
      %198 = vsyncadd [#allocation23], %s197
      %s200 = sshll.u32 [#allocation22], 4
      %s201 = int_to_ptr.vmem [resolvable:$true] %s200
      %203 = dma.hbm_to_vmem [thread:$0]  %s19, 16, %s201, [#allocation23]
    $region81: #{mpnn_forward.1} parent=1 // pred_fallthru
      _
    // Predicated region
    $region82: #{mpnn_forward.1} parent=1 // pred_check
      _
    $region83: #{mpnn_forward.1} parent=1 // pred_check_branch
      %205 = sbr.rel (0) target = $region85
    $region84: #{mpnn_forward.1} parent=1 // pred_region
      _
    $region85: #{mpnn_forward.1} parent=1 // pred_fallthru
      _
    // Predicated region
    $region86: #{mpnn_forward.1} parent=1 // pred_check
      _
    $region87: #{mpnn_forward.1} parent=1 // pred_check_branch
      %207 = sbr.rel (0) target = $region89
    $region88: #{mpnn_forward.1} parent=1 // pred_region
      _
    $region89: #{mpnn_forward.1} parent=1 // pred_fallthru
      _
    // Predicated region
    $region90: #{mpnn_forward.1} parent=1 // pred_check
      _
    $region91: #{mpnn_forward.1} parent=1 // pred_check_branch
      %209 = sbr.rel (0) target = $region93
    $region92: #{mpnn_forward.1} parent=1 // pred_region
      %s211 = ssub.s32 256, 256
      %212 = vsyncadd [#allocation23], %s211
      %s213 = sshll.u32 [#allocation24], 4
      %s214 = int_to_ptr.vmem [resolvable:$true] %s213
      %219 = dma.hbm_to_vmem [thread:$0]  %s22, 256, %s214, [#allocation23], 128, 128, 8
    $region93: #{mpnn_forward.1} parent=1 // pred_fallthru
      _
    // Predicated region
    $region94: #{mpnn_forward.1} parent=1 // pred_check
      _
    $region95: #{mpnn_forward.1} parent=1 // pred_check_branch
      %221 = sbr.rel (0) target = $region97
    $region96: #{mpnn_forward.1} parent=1 // pred_region
      %s223 = ssub.s32 16, 16
      %224 = vsyncadd [#allocation26], %s223
      %s226 = sshll.u32 [#allocation25], 4
      %s227 = int_to_ptr.vmem [resolvable:$true] %s226
      %229 = dma.hbm_to_vmem [thread:$0]  %s23, 16, %s227, [#allocation26]
    $region97: #{mpnn_forward.1} parent=1 // pred_fallthru
      _
    // Predicated region
    $region98: #{mpnn_forward.1} parent=1 // pred_check
      _
    $region99: #{mpnn_forward.1} parent=1 // pred_check_branch
      %231 = sbr.rel (0) target = $region101
    $region100: #{mpnn_forward.1} parent=1 // pred_region
      _
    $region101: #{mpnn_forward.1} parent=1 // pred_fallthru
      _
    // Predicated region
    $region102: #{mpnn_forward.1} parent=1 // pred_check
      _
    $region103: #{mpnn_forward.1} parent=1 // pred_check_branch
      %233 = sbr.rel (0) target = $region105
    $region104: #{mpnn_forward.1} parent=1 // pred_region
      %s235 = ssub.s32 16, 16
      %236 = vsyncadd [#allocation26], %s235
      %s238 = sshll.u32 [#allocation27], 4
      %s239 = int_to_ptr.vmem [resolvable:$true] %s238
      %241 = dma.hbm_to_vmem [thread:$0]  %s25, 16, %s239, [#allocation26]
    $region105: #{mpnn_forward.1} parent=1 // pred_fallthru
      _
    // Predicated region
    $region106: #{mpnn_forward.1} parent=1 // pred_check
      _
    $region107: #{mpnn_forward.1} parent=1 // pred_check_branch
      %243 = sbr.rel (0) target = $region109
    $region108: #{mpnn_forward.1} parent=1 // pred_region
      %244 = dma.done [#allocation3], 256
    $region109: #{mpnn_forward.1} parent=1 // pred_fallthru
      _
    // Predicated region
    $region110: #{mpnn_forward.1} parent=1 // pred_check
      _
    $region111: #{mpnn_forward.1} parent=1 // pred_check_branch
      %246 = sbr.rel (0) target = $region113
    $region112: #{mpnn_forward.1} parent=1 // pred_region
      %247 = dma.done [#allocation5], 128
    $region113: #{mpnn_forward.1} parent=1 // pred_fallthru
      _
    // Predicated region
    $region114: #{mpnn_forward.1} parent=1 // pred_check
      _
    $region115: #{mpnn_forward.1} parent=1 // pred_check_branch
      %249 = sbr.rel (0) target = $region117
    $region116: #{mpnn_forward.1} parent=1 // pred_region
      %250 = dma.done [#allocation5], 16
    $region117: #{mpnn_forward.1} parent=1 // pred_fallthru
      _
    // Predicated region
    $region118: #{mpnn_forward.1} parent=1 // pred_check
      _
    $region119: #{mpnn_forward.1} parent=1 // pred_check_branch
      %252 = sbr.rel (0) target = $region121
    $region120: #{mpnn_forward.1} parent=1 // pred_region
      %253 = dma.done [#allocation8], 32
    $region121: #{mpnn_forward.1} parent=1 // pred_fallthru
      _
    // Predicated region
    $region122: #{mpnn_forward.1} parent=1 // pred_check
      _
    $region123: #{mpnn_forward.1} parent=1 // pred_check_branch
      %255 = sbr.rel (0) target = $region125
    $region124: #{mpnn_forward.1} parent=1 // pred_region
      %256 = dma.done [#allocation8], 256
    $region125: #{mpnn_forward.1} parent=1 // pred_fallthru
      _
    // Predicated region
    $region126: #{mpnn_forward.1} parent=1 // pred_check
      _
    $region127: #{mpnn_forward.1} parent=1 // pred_check_branch
      %258 = sbr.rel (0) target = $region129
    $region128: #{mpnn_forward.1} parent=1 // pred_region
      %259 = dma.done [#allocation11], 16
    $region129: #{mpnn_forward.1} parent=1 // pred_fallthru
      _
    // Predicated region
    $region130: #{mpnn_forward.1} parent=1 // pred_check
      _
    $region131: #{mpnn_forward.1} parent=1 // pred_check_branch
      %261 = sbr.rel (0) target = $region133
    $region132: #{mpnn_forward.1} parent=1 // pred_region
      %262 = dma.done [#allocation11], 256
    $region133: #{mpnn_forward.1} parent=1 // pred_fallthru
      _
    // Predicated region
    $region134: #{mpnn_forward.1} parent=1 // pred_check
      _
    $region135: #{mpnn_forward.1} parent=1 // pred_check_branch
      %264 = sbr.rel (0) target = $region137
    $region136: #{mpnn_forward.1} parent=1 // pred_region
      %265 = dma.done [#allocation14], 16
    $region137: #{mpnn_forward.1} parent=1 // pred_fallthru
      _
    // Predicated region
    $region138: #{mpnn_forward.1} parent=1 // pred_check
      _
    $region139: #{mpnn_forward.1} parent=1 // pred_check_branch
      %267 = sbr.rel (0) target = $region141
    $region140: #{mpnn_forward.1} parent=1 // pred_region
      %268 = dma.done [#allocation14], 256
    $region141: #{mpnn_forward.1} parent=1 // pred_fallthru
      _
    // Predicated region
    $region142: #{mpnn_forward.1} parent=1 // pred_check
      _
    $region143: #{mpnn_forward.1} parent=1 // pred_check_branch
      %270 = sbr.rel (0) target = $region145
    $region144: #{mpnn_forward.1} parent=1 // pred_region
      %271 = dma.done [#allocation17], 256
    $region145: #{mpnn_forward.1} parent=1 // pred_fallthru
      _
    // Predicated region
    $region146: #{mpnn_forward.1} parent=1 // pred_check
      _
    $region147: #{mpnn_forward.1} parent=1 // pred_check_branch
      %273 = sbr.rel (0) target = $region149
    $region148: #{mpnn_forward.1} parent=1 // pred_region
      %274 = dma.done [#allocation17], 16
    $region149: #{mpnn_forward.1} parent=1 // pred_fallthru
      _
    // Predicated region
    $region150: #{mpnn_forward.1} parent=1 // pred_check
      _
    $region151: #{mpnn_forward.1} parent=1 // pred_check_branch
      %276 = sbr.rel (0) target = $region153
    $region152: #{mpnn_forward.1} parent=1 // pred_region
      %277 = dma.done [#allocation20], 16
    $region153: #{mpnn_forward.1} parent=1 // pred_fallthru
      _
    // Predicated region
    $region154: #{mpnn_forward.1} parent=1 // pred_check
      _
    $region155: #{mpnn_forward.1} parent=1 // pred_check_branch
      %279 = sbr.rel (0) target = $region157
    $region156: #{mpnn_forward.1} parent=1 // pred_region
      %280 = dma.done [#allocation20], 256
    $region157: #{mpnn_forward.1} parent=1 // pred_fallthru
      _
    // Predicated region
    $region158: #{mpnn_forward.1} parent=1 // pred_check
      _
    $region159: #{mpnn_forward.1} parent=1 // pred_check_branch
      %282 = sbr.rel (0) target = $region161
    $region160: #{mpnn_forward.1} parent=1 // pred_region
      %283 = dma.done [#allocation23], 16
    $region161: #{mpnn_forward.1} parent=1 // pred_fallthru
      _
    // Predicated region
    $region162: #{mpnn_forward.1} parent=1 // pred_check
      _
    $region163: #{mpnn_forward.1} parent=1 // pred_check_branch
      %285 = sbr.rel (0) target = $region165
    $region164: #{mpnn_forward.1} parent=1 // pred_region
      %286 = dma.done [#allocation23], 256
    $region165: #{mpnn_forward.1} parent=1 // pred_fallthru
      _
    // Predicated region
    $region166: #{mpnn_forward.1} parent=1 // pred_check
      _
    $region167: #{mpnn_forward.1} parent=1 // pred_check_branch
      %288 = sbr.rel (0) target = $region169
    $region168: #{mpnn_forward.1} parent=1 // pred_region
      %289 = dma.done [#allocation26], 16
    $region169: #{mpnn_forward.1} parent=1 // pred_fallthru
      _
    // Predicated region
    $region170: #{mpnn_forward.1} parent=1 // pred_check
      _
    $region171: #{mpnn_forward.1} parent=1 // pred_check_branch
      %291 = sbr.rel (0) target = $region173
    $region172: #{mpnn_forward.1} parent=1 // pred_region
      %292 = dma.done [#allocation26], 16
    $region173: #{mpnn_forward.1} parent=1 // pred_fallthru
      _
    %v293 = vld [vmem:[#allocation2] sm:$0xff]
    %v294 = vld [vmem:[#allocation2 + $0x8] sm:$0xff]
    %v295 = vld [vmem:[%s1] sm:$0xff]
    %v296 = vld [vmem:[%s1 + $0x8] sm:$0xff]
    %v297 = vld [vmem:[%s2] sm:$0xff]
    %v298 = vld [vmem:[%s2 + $0x8] sm:$0xff]
    %v299 = vld [vmem:[%s2 + $0x10] sm:$0xff]
    %v300 = vld [vmem:[%s2 + $0x18] sm:$0xff]
    %v301 = vld [vmem:[%s4] sm:$0xff]
    %v302 = vld [vmem:[%s4 + $0x8] sm:$0xff]
    %v303 = vld [vmem:[%s4 + $0x10] sm:$0xff]
    %v304 = vld [vmem:[%s4 + $0x18] sm:$0xff]
    %v305 = vld [vmem:[#allocation4] sm:$0xff]
    %v306 = vld [vmem:[#allocation6] sm:$0x1]
    %v308 = vlaneseq
    %v309 = vshrl.u32 %v308, 7
    %v310 = vsub.s32 0, %v309
    %v311 = vrot.slane %v306, %v310
    %vm313 = vcmask 64512
    %v315 = vsel %vm313, %v301, 0
    %v318 = vsel %vm313, %v302, 0
    %v321 = vsel %vm313, %v303, 0
    %v324 = vsel %vm313, %v304, 0
    %326 = vmatprep.subr.mxu0 0.0
    %327 = vmatpush1.msra.mxu0 0.0
    %328 = vmatprep.subr.mxu0 0.0
    %329 = vmatpush1.msra.mxu0 0.0
    %330 = vmatprep.subr.mxu0 0.0
    %331 = vmatpush1.msra.mxu0 0.0
    %332 = vmatprep.subr.mxu0 0.0
    %333 = vmatpush1.msra.mxu0 0.0
    %334 = vmatprep.subr.mxu0 0.0
    %335 = vmatpush1.msra.mxu0 0.0
    %336 = vmatprep.subr.mxu0 0.0
    %337 = vmatpush1.msra.mxu0 0.0
    %338 = vmatprep.subr.mxu0 0.0
    %339 = vmatpush1.msra.mxu0 0.0
    %340 = vmatprep.subr.mxu0 0.0
    %341 = vmatpush1.msra.mxu0 0.0
    %342 = vmatprep.subr.mxu0 0.0
    %343 = vmatpush1.msra.mxu0 0.0
    %344 = vmatprep.subr.mxu0 0.0
    %345 = vmatpush1.msra.mxu0 0.0
    %346 = vmatprep.subr.mxu0 0.0
    %347 = vmatpush1.msra.mxu0 0.0
    %348 = vmatprep.subr.mxu0 0.0
    %349 = vmatpush1.msra.mxu0 0.0
    %350 = vmatprep.subr.mxu0 0.0
    %351 = vmatpush1.msra.mxu0 0.0
    %352 = vmatprep.subr.mxu0 0.0
    %353 = vmatpush1.msra.mxu0 0.0
    %354 = vmatprep.subr.mxu0 0.0
    %355 = vmatpush1.msra.mxu0 0.0
    %356 = vmatprep.subr.mxu0 0.0
    %357 = vmatpush1.msra.mxu0 %v305
    %358 = vmatprep.subr.mxu0 0.0
    %359 = vmatpush2.msra.mxu0 0.0
    %360 = vmatprep.subr.mxu0 0.0
    %361 = vmatpush2.msra.mxu0 0.0
    %362 = vmatprep.subr.mxu0 0.0
    %363 = vmatpush2.msra.mxu0 0.0
    %364 = vmatprep.subr.mxu0 0.0
    %365 = vmatpush2.msra.mxu0 0.0
    %366 = vmatprep.subr.mxu0 0.0
    %367 = vmatpush2.msra.mxu0 0.0
    %368 = vmatprep.subr.mxu0 0.0
    %369 = vmatpush2.msra.mxu0 0.0
    %370 = vmatprep.subr.mxu0 0.0
    %371 = vmatpush2.msra.mxu0 0.0
    %372 = vmatprep.subr.mxu0 0.0
    %373 = vmatpush2.msra.mxu0 0.0
    %374 = vmatprep.subr.mxu0 0.0
    %375 = vmatpush2.msra.mxu0 0.0
    %376 = vmatprep.subr.mxu0 0.0
    %377 = vmatpush2.msra.mxu0 0.0
    %378 = vmatprep.subr.mxu0 0.0
    %379 = vmatpush2.msra.mxu0 0.0
    %380 = vmatprep.subr.mxu0 0.0
    %381 = vmatpush2.msra.mxu0 0.0
    %382 = vmatprep.subr.mxu0 0.0
    %383 = vmatpush2.msra.mxu0 0.0
    %384 = vmatprep.subr.mxu0 0.0
    %385 = vmatpush2.msra.mxu0 0.0
    %386 = vmatprep.subr.mxu0 0.0
    %387 = vmatpush2.msra.mxu0 0.0
    %388 = vmatprep.subr.mxu0 0.0
    %389 = vmatpush2.msra.mxu0 0.0
    %390 = vmatprep.mubr.f32.mxu0 0.0
    %391 = vmatmul.mubr.f32.gmra.mxu0 %v315
    %v392 = vpop.f32.mrf.mxu0
    %v393 = vadd.f32 %v311, %v392
    %v394 = vpop.f32.mrf.mxu0
    %395 = vmatprep.mubr.f32.mxu0 0.0
    %396 = vmatmul.mubr.f32.gmra.mxu0 %v318
    %v397 = vpop.f32.mrf.mxu0
    %v398 = vadd.f32 %v311, %v397
    %v399 = vpop.f32.mrf.mxu0
    %400 = vmatprep.mubr.f32.mxu0 0.0
    %401 = vmatmul.mubr.f32.gmra.mxu0 %v321
    %v402 = vpop.f32.mrf.mxu0
    %v403 = vadd.f32 %v311, %v402
    %v404 = vpop.f32.mrf.mxu0
    %405 = vmatprep.mubr.f32.mxu0 0.0
    %406 = vmatmul.mubr.f32.gmra.mxu0 %v324
    %v407 = vpop.f32.mrf.mxu0
    %v408 = vadd.f32 %v311, %v407
    %v409 = vpop.f32.mrf.mxu0
    %410 = vdwg.mxu0
    %v411 = vmax.f32 %v393, 0.0
    %v412 = vmax.f32 %v398, 0.0
    %v413 = vmax.f32 %v403, 0.0
    %v414 = vmax.f32 %v408, 0.0
    %v415 = vld [vmem:[%s7] sm:$0xff]
    %v416 = vld [vmem:[%s7 + $0x8] sm:$0xff]
    %v417 = vld [vmem:[%s7 + $0x10] sm:$0xff]
    %v418 = vld [vmem:[%s7 + $0x18] sm:$0xff]
    %v419 = vld [vmem:[%s7 + $0x20] sm:$0xff]
    %v420 = vld [vmem:[%s7 + $0x28] sm:$0xff]
    %v421 = vld [vmem:[%s7 + $0x30] sm:$0xff]
    %v422 = vld [vmem:[%s7 + $0x38] sm:$0xff]
    %v423 = vld [vmem:[%s7 + $0x40] sm:$0xff]
    %v424 = vld [vmem:[%s7 + $0x48] sm:$0xff]
    %v425 = vld [vmem:[%s7 + $0x50] sm:$0xff]
    %v426 = vld [vmem:[%s7 + $0x58] sm:$0xff]
    %v427 = vld [vmem:[%s7 + $0x60] sm:$0xff]
    %v428 = vld [vmem:[%s7 + $0x68] sm:$0xff]
    %v429 = vld [vmem:[%s7 + $0x70] sm:$0xff]
    %v430 = vld [vmem:[%s7 + $0x78] sm:$0xff]
    %v431 = vld [vmem:[%s7 + $0x80] sm:$0xff]
    %v432 = vld [vmem:[%s7 + $0x88] sm:$0xff]
    %v433 = vld [vmem:[%s7 + $0x90] sm:$0xff]
    %v434 = vld [vmem:[%s7 + $0x98] sm:$0xff]
    %v435 = vld [vmem:[%s7 + $0xa0] sm:$0xff]
    %v436 = vld [vmem:[%s7 + $0xa8] sm:$0xff]
    %v437 = vld [vmem:[%s7 + $0xb0] sm:$0xff]
    %v438 = vld [vmem:[%s7 + $0xb8] sm:$0xff]
    %v439 = vld [vmem:[%s7 + $0xc0] sm:$0xff]
    %v440 = vld [vmem:[%s7 + $0xc8] sm:$0xff]
    %v441 = vld [vmem:[%s7 + $0xd0] sm:$0xff]
    %v442 = vld [vmem:[%s7 + $0xd8] sm:$0xff]
    %v443 = vld [vmem:[%s7 + $0xe0] sm:$0xff]
    %v444 = vld [vmem:[%s7 + $0xe8] sm:$0xff]
    %v445 = vld [vmem:[%s7 + $0xf0] sm:$0xff]
    %v446 = vld [vmem:[%s7 + $0xf8] sm:$0xff]
    %v447 = vld [vmem:[#allocation7] sm:$0x3]
    %v449 = vlaneseq
    %v450 = vshrl.u32 %v449, 7
    %v451 = vsub.s32 0, %v450
    %v452 = vrot.slane %v447, %v451
    %v453 = vlaneseq
    %v454 = vshrl.u32 %v453, 7
    %v455 = vsub.s32 1, %v454
    %v456 = vrot.slane %v447, %v455
    %459 = vmatprep.subr.mxu0 %v446
    %460 = vmatpush1.msra.mxu0 %v445
    %461 = vmatprep.subr.mxu0 %v444
    %462 = vmatpush1.msra.mxu0 %v443
    %463 = vmatprep.subr.mxu0 %v442
    %464 = vmatpush1.msra.mxu0 %v441
    %465 = vmatprep.subr.mxu0 %v440
    %466 = vmatpush1.msra.mxu0 %v439
    %467 = vmatprep.subr.mxu0 %v438
    %468 = vmatpush1.msra.mxu0 %v437
    %469 = vmatprep.subr.mxu0 %v436
    %470 = vmatpush1.msra.mxu0 %v435
    %471 = vmatprep.subr.mxu0 %v434
    %472 = vmatpush1.msra.mxu0 %v433
    %473 = vmatprep.subr.mxu0 %v432
    %474 = vmatpush1.msra.mxu0 %v431
    %475 = vmatprep.subr.mxu0 %v430
    %476 = vmatpush1.msra.mxu0 %v429
    %477 = vmatprep.subr.mxu0 %v428
    %478 = vmatpush1.msra.mxu0 %v427
    %479 = vmatprep.subr.mxu0 %v426
    %480 = vmatpush1.msra.mxu0 %v425
    %481 = vmatprep.subr.mxu0 %v424
    %482 = vmatpush1.msra.mxu0 %v423
    %483 = vmatprep.subr.mxu0 %v422
    %484 = vmatpush1.msra.mxu0 %v421
    %485 = vmatprep.subr.mxu0 %v420
    %486 = vmatpush1.msra.mxu0 %v419
    %487 = vmatprep.subr.mxu0 %v418
    %488 = vmatpush1.msra.mxu0 %v417
    %489 = vmatprep.subr.mxu0 %v416
    %490 = vmatpush1.msra.mxu0 %v415
    %491 = vmatprep.subr.mxu0 0.0
    %492 = vmatpush2.msra.mxu0 0.0
    %493 = vmatprep.subr.mxu0 0.0
    %494 = vmatpush2.msra.mxu0 0.0
    %495 = vmatprep.subr.mxu0 0.0
    %496 = vmatpush2.msra.mxu0 0.0
    %497 = vmatprep.subr.mxu0 0.0
    %498 = vmatpush2.msra.mxu0 0.0
    %499 = vmatprep.subr.mxu0 0.0
    %500 = vmatpush2.msra.mxu0 0.0
    %501 = vmatprep.subr.mxu0 0.0
    %502 = vmatpush2.msra.mxu0 0.0
    %503 = vmatprep.subr.mxu0 0.0
    %504 = vmatpush2.msra.mxu0 0.0
    %505 = vmatprep.subr.mxu0 0.0
    %506 = vmatpush2.msra.mxu0 0.0
    %507 = vmatprep.subr.mxu0 0.0
    %508 = vmatpush2.msra.mxu0 0.0
    %509 = vmatprep.subr.mxu0 0.0
    %510 = vmatpush2.msra.mxu0 0.0
    %511 = vmatprep.subr.mxu0 0.0
    %512 = vmatpush2.msra.mxu0 0.0
    %513 = vmatprep.subr.mxu0 0.0
    %514 = vmatpush2.msra.mxu0 0.0
    %515 = vmatprep.subr.mxu0 0.0
    %516 = vmatpush2.msra.mxu0 0.0
    %517 = vmatprep.subr.mxu0 0.0
    %518 = vmatpush2.msra.mxu0 0.0
    %519 = vmatprep.subr.mxu0 0.0
    %520 = vmatpush2.msra.mxu0 0.0
    %521 = vmatprep.subr.mxu0 0.0
    %522 = vmatpush2.msra.mxu0 0.0
    %523 = vmatprep.mubr.f32.mxu0 0.0
    %524 = vmatmul.mubr.f32.gmra.mxu0 %v411
    %v525 = vpop.f32.mrf.mxu0
    %v526 = vadd.f32 %v452, %v525
    %v527 = vpop.f32.mrf.mxu0
    %v528 = vadd.f32 %v456, %v527
    %529 = vmatprep.mubr.f32.mxu0 0.0
    %530 = vmatmul.mubr.f32.gmra.mxu0 %v412
    %v531 = vpop.f32.mrf.mxu0
    %v532 = vadd.f32 %v452, %v531
    %v533 = vpop.f32.mrf.mxu0
    %v534 = vadd.f32 %v456, %v533
    %535 = vmatprep.mubr.f32.mxu0 0.0
    %536 = vmatmul.mubr.f32.gmra.mxu0 %v413
    %v537 = vpop.f32.mrf.mxu0
    %v538 = vadd.f32 %v452, %v537
    %v539 = vpop.f32.mrf.mxu0
    %v540 = vadd.f32 %v456, %v539
    %541 = vmatprep.mubr.f32.mxu0 0.0
    %542 = vmatmul.mubr.f32.gmra.mxu0 %v414
    %v543 = vpop.f32.mrf.mxu0
    %v544 = vadd.f32 %v452, %v543
    %v545 = vpop.f32.mrf.mxu0
    %v546 = vadd.f32 %v456, %v545
    %547 = vdwg.mxu0
    %v548 = vld [vmem:[#allocation9] sm:$0xff]
    %v549 = vld [vmem:[#allocation9 + $0x8] sm:$0xff]
    %v550 = vld [vmem:[#allocation10] sm:$0x1]
    %v551 = vld [vmem:[#allocation12] sm:$0xff]
    %v552 = vld [vmem:[#allocation12 + $0x8] sm:$0xff]
    %v553 = vld [vmem:[#allocation13] sm:$0x1]
    %vm554 = vcmask 130048
    %v556 = vsel %vm554, %v297, 0
    %v559 = vsel %vm554, %v298, 0
    %v562 = vsel %vm554, %v299, 0
    %v565 = vsel %vm554, %v300, 0
    %567 = vmatprep.subr.mxu0 0.0
    %568 = vmatpush1.msra.mxu0 0.0
    %569 = vmatprep.subr.mxu0 0.0
    %570 = vmatpush1.msra.mxu0 0.0
    %571 = vmatprep.subr.mxu0 0.0
    %572 = vmatpush1.msra.mxu0 0.0
    %573 = vmatprep.subr.mxu0 0.0
    %574 = vmatpush1.msra.mxu0 0.0
    %575 = vmatprep.subr.mxu0 0.0
    %576 = vmatpush1.msra.mxu0 0.0
    %577 = vmatprep.subr.mxu0 0.0
    %578 = vmatpush1.msra.mxu0 0.0
    %579 = vmatprep.subr.mxu0 0.0
    %580 = vmatpush1.msra.mxu0 0.0
    %581 = vmatprep.subr.mxu0 0.0
    %582 = vmatpush1.msra.mxu0 0.0
    %583 = vmatprep.subr.mxu0 0.0
    %584 = vmatpush1.msra.mxu0 0.0
    %585 = vmatprep.subr.mxu0 0.0
    %586 = vmatpush1.msra.mxu0 0.0
    %587 = vmatprep.subr.mxu0 0.0
    %588 = vmatpush1.msra.mxu0 0.0
    %589 = vmatprep.subr.mxu0 0.0
    %590 = vmatpush1.msra.mxu0 0.0
    %591 = vmatprep.subr.mxu0 0.0
    %592 = vmatpush1.msra.mxu0 0.0
    %593 = vmatprep.subr.mxu0 0.0
    %594 = vmatpush1.msra.mxu0 0.0
    %595 = vmatprep.subr.mxu0 0.0
    %596 = vmatpush1.msra.mxu0 %v294
    %597 = vmatprep.subr.mxu0 0.0
    %598 = vmatpush1.msra.mxu0 %v293
    %599 = vmatprep.subr.mxu0 0.0
    %600 = vmatpush2.msra.mxu0 0.0
    %601 = vmatprep.subr.mxu0 0.0
    %602 = vmatpush2.msra.mxu0 0.0
    %603 = vmatprep.subr.mxu0 0.0
    %604 = vmatpush2.msra.mxu0 0.0
    %605 = vmatprep.subr.mxu0 0.0
    %606 = vmatpush2.msra.mxu0 0.0
    %607 = vmatprep.subr.mxu0 0.0
    %608 = vmatpush2.msra.mxu0 0.0
    %609 = vmatprep.subr.mxu0 0.0
    %610 = vmatpush2.msra.mxu0 0.0
    %611 = vmatprep.subr.mxu0 0.0
    %612 = vmatpush2.msra.mxu0 0.0
    %613 = vmatprep.subr.mxu0 0.0
    %614 = vmatpush2.msra.mxu0 0.0
    %615 = vmatprep.subr.mxu0 0.0
    %616 = vmatpush2.msra.mxu0 0.0
    %617 = vmatprep.subr.mxu0 0.0
    %618 = vmatpush2.msra.mxu0 0.0
    %619 = vmatprep.subr.mxu0 0.0
    %620 = vmatpush2.msra.mxu0 0.0
    %621 = vmatprep.subr.mxu0 0.0
    %622 = vmatpush2.msra.mxu0 0.0
    %623 = vmatprep.subr.mxu0 0.0
    %624 = vmatpush2.msra.mxu0 0.0
    %625 = vmatprep.subr.mxu0 0.0
    %626 = vmatpush2.msra.mxu0 0.0
    %627 = vmatprep.subr.mxu0 0.0
    %628 = vmatpush2.msra.mxu0 0.0
    %629 = vmatprep.subr.mxu0 0.0
    %630 = vmatpush2.msra.mxu0 0.0
    %631 = vmatprep.mubr.f32.mxu0 0.0
    %632 = vmatmul.mubr.f32.gmra.mxu0 %v556
    %v633 = vpop.f32.mrf.mxu0
    %v634 = vadd.f32 0.0, %v633
    %v635 = vpop.f32.mrf.mxu0
    %636 = vmatprep.mubr.f32.mxu0 0.0
    %637 = vmatmul.mubr.f32.gmra.mxu0 %v559
    %v638 = vpop.f32.mrf.mxu0
    %v639 = vadd.f32 0.0, %v638
    %v640 = vpop.f32.mrf.mxu0
    %641 = vmatprep.mubr.f32.mxu0 0.0
    %642 = vmatmul.mubr.f32.gmra.mxu0 %v562
    %v643 = vpop.f32.mrf.mxu0
    %v644 = vadd.f32 0.0, %v643
    %v645 = vpop.f32.mrf.mxu0
    %646 = vmatprep.mubr.f32.mxu0 0.0
    %647 = vmatmul.mubr.f32.gmra.mxu0 %v565
    %v648 = vpop.f32.mrf.mxu0
    %v649 = vadd.f32 0.0, %v648
    %v650 = vpop.f32.mrf.mxu0
    %651 = vdwg.mxu0
    %653 = vset.pattern.permute.xlu0 0
    %654 = vperm.xlu0 %653, %v634
    %v655 = vpop.permute.xlu0 %654
    %658 = vset.pattern.permute.xlu0 0
    %659 = vperm.xlu0 %658, %v639
    %v660 = vpop.permute.xlu0 %659
    %663 = vset.pattern.permute.xlu0 0
    %664 = vperm.xlu0 %663, %v644
    %v665 = vpop.permute.xlu0 %664
    %668 = vset.pattern.permute.xlu0 0
    %669 = vperm.xlu0 %668, %v649
    %v670 = vpop.permute.xlu0 %669
    %v672 = vmul.f32 %v655, %v526
    %v673 = vmul.f32 %v660, %v532
    %v674 = vmul.f32 %v665, %v538
    %v675 = vmul.f32 %v670, %v544
    %v676 = vadd.f32 %v672, 0.0
    %v677 = vadd.f32 %v673, 0.0
    %v678 = vadd.f32 %v674, 0.0
    %v679 = vadd.f32 %v675, 0.0
    %680 = vset.pattern.permute.xlu0 1
    %681 = vperm.xlu0 %680, %v634
    %v682 = vpop.permute.xlu0 %681
    %684 = vset.pattern.permute.xlu0 1
    %685 = vperm.xlu0 %684, %v639
    %v686 = vpop.permute.xlu0 %685
    %688 = vset.pattern.permute.xlu0 1
    %689 = vperm.xlu0 %688, %v644
    %v690 = vpop.permute.xlu0 %689
    %692 = vset.pattern.permute.xlu0 1
    %693 = vperm.xlu0 %692, %v649
    %v694 = vpop.permute.xlu0 %693
    %v696 = vmul.f32 %v682, %v526
    %v697 = vmul.f32 %v686, %v532
    %v698 = vmul.f32 %v690, %v538
    %v699 = vmul.f32 %v694, %v544
    %704 = vrot.lane.b32.xlu0 %v696, 112
    %v705 = vpop.permute.xlu0 %704
    %706 = vrot.lane.b32.xlu0 %v697, 112
    %v707 = vpop.permute.xlu0 %706
    %708 = vrot.lane.b32.xlu0 %v698, 112
    %v709 = vpop.permute.xlu0 %708
    %710 = vrot.lane.b32.xlu0 %v699, 112
    %v711 = vpop.permute.xlu0 %710
    %v716 = vadd.f32 %v676, %v705
    %v717 = vadd.f32 %v677, %v707
    %v718 = vadd.f32 %v678, %v709
    %v719 = vadd.f32 %v679, %v711
    %720 = vset.pattern.permute.xlu0 2
    %721 = vperm.xlu0 %720, %v634
    %v722 = vpop.permute.xlu0 %721
    %724 = vset.pattern.permute.xlu0 2
    %725 = vperm.xlu0 %724, %v639
    %v726 = vpop.permute.xlu0 %725
    %728 = vset.pattern.permute.xlu0 2
    %729 = vperm.xlu0 %728, %v644
    %v730 = vpop.permute.xlu0 %729
    %732 = vset.pattern.permute.xlu0 2
    %733 = vperm.xlu0 %732, %v649
    %v734 = vpop.permute.xlu0 %733
    %v736 = vmul.f32 %v722, %v526
    %v737 = vmul.f32 %v726, %v532
    %v738 = vmul.f32 %v730, %v538
    %v739 = vmul.f32 %v734, %v544
    %744 = vrot.lane.b32.xlu0 %v736, 96
    %v745 = vpop.permute.xlu0 %744
    %746 = vrot.lane.b32.xlu0 %v737, 96
    %v747 = vpop.permute.xlu0 %746
    %748 = vrot.lane.b32.xlu0 %v738, 96
    %v749 = vpop.permute.xlu0 %748
    %750 = vrot.lane.b32.xlu0 %v739, 96
    %v751 = vpop.permute.xlu0 %750
    %v756 = vadd.f32 %v716, %v745
    %v757 = vadd.f32 %v717, %v747
    %v758 = vadd.f32 %v718, %v749
    %v759 = vadd.f32 %v719, %v751
    %760 = vset.pattern.permute.xlu0 3
    %761 = vperm.xlu0 %760, %v634
    %v762 = vpop.permute.xlu0 %761
    %764 = vset.pattern.permute.xlu0 3
    %765 = vperm.xlu0 %764, %v639
    %v766 = vpop.permute.xlu0 %765
    %768 = vset.pattern.permute.xlu0 3
    %769 = vperm.xlu0 %768, %v644
    %v770 = vpop.permute.xlu0 %769
    %772 = vset.pattern.permute.xlu0 3
    %773 = vperm.xlu0 %772, %v649
    %v774 = vpop.permute.xlu0 %773
    %v776 = vmul.f32 %v762, %v526
    %v777 = vmul.f32 %v766, %v532
    %v778 = vmul.f32 %v770, %v538
    %v779 = vmul.f32 %v774, %v544
    %784 = vrot.lane.b32.xlu0 %v776, 80
    %v785 = vpop.permute.xlu0 %784
    %786 = vrot.lane.b32.xlu0 %v777, 80
    %v787 = vpop.permute.xlu0 %786
    %788 = vrot.lane.b32.xlu0 %v778, 80
    %v789 = vpop.permute.xlu0 %788
    %790 = vrot.lane.b32.xlu0 %v779, 80
    %v791 = vpop.permute.xlu0 %790
    %v796 = vadd.f32 %v756, %v785
    %v797 = vadd.f32 %v757, %v787
    %v798 = vadd.f32 %v758, %v789
    %v799 = vadd.f32 %v759, %v791
    %800 = vset.pattern.permute.xlu0 4
    %801 = vperm.xlu0 %800, %v634
    %v802 = vpop.permute.xlu0 %801
    %804 = vset.pattern.permute.xlu0 4
    %805 = vperm.xlu0 %804, %v639
    %v806 = vpop.permute.xlu0 %805
    %808 = vset.pattern.permute.xlu0 4
    %809 = vperm.xlu0 %808, %v644
    %v810 = vpop.permute.xlu0 %809
    %812 = vset.pattern.permute.xlu0 4
    %813 = vperm.xlu0 %812, %v649
    %v814 = vpop.permute.xlu0 %813
    %v816 = vmul.f32 %v802, %v526
    %v817 = vmul.f32 %v806, %v532
    %v818 = vmul.f32 %v810, %v538
    %v819 = vmul.f32 %v814, %v544
    %824 = vrot.lane.b32.xlu0 %v816, 64
    %v825 = vpop.permute.xlu0 %824
    %826 = vrot.lane.b32.xlu0 %v817, 64
    %v827 = vpop.permute.xlu0 %826
    %828 = vrot.lane.b32.xlu0 %v818, 64
    %v829 = vpop.permute.xlu0 %828
    %830 = vrot.lane.b32.xlu0 %v819, 64
    %v831 = vpop.permute.xlu0 %830
    %v836 = vadd.f32 %v796, %v825
    %v837 = vadd.f32 %v797, %v827
    %v838 = vadd.f32 %v798, %v829
    %v839 = vadd.f32 %v799, %v831
    %840 = vset.pattern.permute.xlu0 5
    %841 = vperm.xlu0 %840, %v634
    %v842 = vpop.permute.xlu0 %841
    %844 = vset.pattern.permute.xlu0 5
    %845 = vperm.xlu0 %844, %v639
    %v846 = vpop.permute.xlu0 %845
    %848 = vset.pattern.permute.xlu0 5
    %849 = vperm.xlu0 %848, %v644
    %v850 = vpop.permute.xlu0 %849
    %852 = vset.pattern.permute.xlu0 5
    %853 = vperm.xlu0 %852, %v649
    %v854 = vpop.permute.xlu0 %853
    %v856 = vmul.f32 %v842, %v526
    %v857 = vmul.f32 %v846, %v532
    %v858 = vmul.f32 %v850, %v538
    %v859 = vmul.f32 %v854, %v544
    %864 = vrot.lane.b32.xlu0 %v856, 48
    %v865 = vpop.permute.xlu0 %864
    %866 = vrot.lane.b32.xlu0 %v857, 48
    %v867 = vpop.permute.xlu0 %866
    %868 = vrot.lane.b32.xlu0 %v858, 48
    %v869 = vpop.permute.xlu0 %868
    %870 = vrot.lane.b32.xlu0 %v859, 48
    %v871 = vpop.permute.xlu0 %870
    %v876 = vadd.f32 %v836, %v865
    %v877 = vadd.f32 %v837, %v867
    %v878 = vadd.f32 %v838, %v869
    %v879 = vadd.f32 %v839, %v871
    %880 = vset.pattern.permute.xlu0 6
    %881 = vperm.xlu0 %880, %v634
    %v882 = vpop.permute.xlu0 %881
    %884 = vset.pattern.permute.xlu0 6
    %885 = vperm.xlu0 %884, %v639
    %v886 = vpop.permute.xlu0 %885
    %888 = vset.pattern.permute.xlu0 6
    %889 = vperm.xlu0 %888, %v644
    %v890 = vpop.permute.xlu0 %889
    %892 = vset.pattern.permute.xlu0 6
    %893 = vperm.xlu0 %892, %v649
    %v894 = vpop.permute.xlu0 %893
    %v896 = vmul.f32 %v882, %v526
    %v897 = vmul.f32 %v886, %v532
    %v898 = vmul.f32 %v890, %v538
    %v899 = vmul.f32 %v894, %v544
    %904 = vrot.lane.b32.xlu0 %v896, 32
    %v905 = vpop.permute.xlu0 %904
    %906 = vrot.lane.b32.xlu0 %v897, 32
    %v907 = vpop.permute.xlu0 %906
    %908 = vrot.lane.b32.xlu0 %v898, 32
    %v909 = vpop.permute.xlu0 %908
    %910 = vrot.lane.b32.xlu0 %v899, 32
    %v911 = vpop.permute.xlu0 %910
    %v916 = vadd.f32 %v876, %v905
    %v917 = vadd.f32 %v877, %v907
    %v918 = vadd.f32 %v878, %v909
    %v919 = vadd.f32 %v879, %v911
    %920 = vset.pattern.permute.xlu0 7
    %921 = vperm.xlu0 %920, %v634
    %v922 = vpop.permute.xlu0 %921
    %924 = vset.pattern.permute.xlu0 7
    %925 = vperm.xlu0 %924, %v639
    %v926 = vpop.permute.xlu0 %925
    %928 = vset.pattern.permute.xlu0 7
    %929 = vperm.xlu0 %928, %v644
    %v930 = vpop.permute.xlu0 %929
    %932 = vset.pattern.permute.xlu0 7
    %933 = vperm.xlu0 %932, %v649
    %v934 = vpop.permute.xlu0 %933
    %v936 = vmul.f32 %v922, %v526
    %v937 = vmul.f32 %v926, %v532
    %v938 = vmul.f32 %v930, %v538
    %v939 = vmul.f32 %v934, %v544
    %944 = vrot.lane.b32.xlu0 %v936, 16
    %v945 = vpop.permute.xlu0 %944
    %946 = vrot.lane.b32.xlu0 %v937, 16
    %v947 = vpop.permute.xlu0 %946
    %948 = vrot.lane.b32.xlu0 %v938, 16
    %v949 = vpop.permute.xlu0 %948
    %950 = vrot.lane.b32.xlu0 %v939, 16
    %v951 = vpop.permute.xlu0 %950
    %v956 = vadd.f32 %v916, %v945
    %v957 = vadd.f32 %v917, %v947
    %v958 = vadd.f32 %v918, %v949
    %v959 = vadd.f32 %v919, %v951
    %960 = vset.pattern.permute.xlu0 8
    %961 = vperm.xlu0 %960, %v634
    %v962 = vpop.permute.xlu0 %961
    %964 = vset.pattern.permute.xlu0 8
    %965 = vperm.xlu0 %964, %v639
    %v966 = vpop.permute.xlu0 %965
    %968 = vset.pattern.permute.xlu0 8
    %969 = vperm.xlu0 %968, %v644
    %v970 = vpop.permute.xlu0 %969
    %972 = vset.pattern.permute.xlu0 8
    %973 = vperm.xlu0 %972, %v649
    %v974 = vpop.permute.xlu0 %973
    %v976 = vmul.f32 %v962, %v528
    %v977 = vmul.f32 %v966, %v534
    %v978 = vmul.f32 %v970, %v540
    %v979 = vmul.f32 %v974, %v546
    %v980 = vadd.f32 %v956, %v976
    %v981 = vadd.f32 %v957, %v977
    %v982 = vadd.f32 %v958, %v978
    %v983 = vadd.f32 %v959, %v979
    %984 = vset.pattern.permute.xlu0 9
    %985 = vperm.xlu0 %984, %v634
    %v986 = vpop.permute.xlu0 %985
    %988 = vset.pattern.permute.xlu0 9
    %989 = vperm.xlu0 %988, %v639
    %v990 = vpop.permute.xlu0 %989
    %992 = vset.pattern.permute.xlu0 9
    %993 = vperm.xlu0 %992, %v644
    %v994 = vpop.permute.xlu0 %993
    %996 = vset.pattern.permute.xlu0 9
    %997 = vperm.xlu0 %996, %v649
    %v998 = vpop.permute.xlu0 %997
    %v1000 = vmul.f32 %v986, %v528
    %v1001 = vmul.f32 %v990, %v534
    %v1002 = vmul.f32 %v994, %v540
    %v1003 = vmul.f32 %v998, %v546
    %1008 = vrot.lane.b32.xlu0 %v1000, 112
    %v1009 = vpop.permute.xlu0 %1008
    %1010 = vrot.lane.b32.xlu0 %v1001, 112
    %v1011 = vpop.permute.xlu0 %1010
    %1012 = vrot.lane.b32.xlu0 %v1002, 112
    %v1013 = vpop.permute.xlu0 %1012
    %1014 = vrot.lane.b32.xlu0 %v1003, 112
    %v1015 = vpop.permute.xlu0 %1014
    %v1020 = vadd.f32 %v980, %v1009
    %v1021 = vadd.f32 %v981, %v1011
    %v1022 = vadd.f32 %v982, %v1013
    %v1023 = vadd.f32 %v983, %v1015
    %1024 = vset.pattern.permute.xlu0 10
    %1025 = vperm.xlu0 %1024, %v634
    %v1026 = vpop.permute.xlu0 %1025
    %1028 = vset.pattern.permute.xlu0 10
    %1029 = vperm.xlu0 %1028, %v639
    %v1030 = vpop.permute.xlu0 %1029
    %1032 = vset.pattern.permute.xlu0 10
    %1033 = vperm.xlu0 %1032, %v644
    %v1034 = vpop.permute.xlu0 %1033
    %1036 = vset.pattern.permute.xlu0 10
    %1037 = vperm.xlu0 %1036, %v649
    %v1038 = vpop.permute.xlu0 %1037
    %v1040 = vmul.f32 %v1026, %v528
    %v1041 = vmul.f32 %v1030, %v534
    %v1042 = vmul.f32 %v1034, %v540
    %v1043 = vmul.f32 %v1038, %v546
    %1048 = vrot.lane.b32.xlu0 %v1040, 96
    %v1049 = vpop.permute.xlu0 %1048
    %1050 = vrot.lane.b32.xlu0 %v1041, 96
    %v1051 = vpop.permute.xlu0 %1050
    %1052 = vrot.lane.b32.xlu0 %v1042, 96
    %v1053 = vpop.permute.xlu0 %1052
    %1054 = vrot.lane.b32.xlu0 %v1043, 96
    %v1055 = vpop.permute.xlu0 %1054
    %v1060 = vadd.f32 %v1020, %v1049
    %v1061 = vadd.f32 %v1021, %v1051
    %v1062 = vadd.f32 %v1022, %v1053
    %v1063 = vadd.f32 %v1023, %v1055
    %1064 = vset.pattern.permute.xlu0 11
    %1065 = vperm.xlu0 %1064, %v634
    %v1066 = vpop.permute.xlu0 %1065
    %1068 = vset.pattern.permute.xlu0 11
    %1069 = vperm.xlu0 %1068, %v639
    %v1070 = vpop.permute.xlu0 %1069
    %1072 = vset.pattern.permute.xlu0 11
    %1073 = vperm.xlu0 %1072, %v644
    %v1074 = vpop.permute.xlu0 %1073
    %1076 = vset.pattern.permute.xlu0 11
    %1077 = vperm.xlu0 %1076, %v649
    %v1078 = vpop.permute.xlu0 %1077
    %v1080 = vmul.f32 %v1066, %v528
    %v1081 = vmul.f32 %v1070, %v534
    %v1082 = vmul.f32 %v1074, %v540
    %v1083 = vmul.f32 %v1078, %v546
    %1088 = vrot.lane.b32.xlu0 %v1080, 80
    %v1089 = vpop.permute.xlu0 %1088
    %1090 = vrot.lane.b32.xlu0 %v1081, 80
    %v1091 = vpop.permute.xlu0 %1090
    %1092 = vrot.lane.b32.xlu0 %v1082, 80
    %v1093 = vpop.permute.xlu0 %1092
    %1094 = vrot.lane.b32.xlu0 %v1083, 80
    %v1095 = vpop.permute.xlu0 %1094
    %v1100 = vadd.f32 %v1060, %v1089
    %v1101 = vadd.f32 %v1061, %v1091
    %v1102 = vadd.f32 %v1062, %v1093
    %v1103 = vadd.f32 %v1063, %v1095
    %1104 = vset.pattern.permute.xlu0 12
    %1105 = vperm.xlu0 %1104, %v634
    %v1106 = vpop.permute.xlu0 %1105
    %1108 = vset.pattern.permute.xlu0 12
    %1109 = vperm.xlu0 %1108, %v639
    %v1110 = vpop.permute.xlu0 %1109
    %1112 = vset.pattern.permute.xlu0 12
    %1113 = vperm.xlu0 %1112, %v644
    %v1114 = vpop.permute.xlu0 %1113
    %1116 = vset.pattern.permute.xlu0 12
    %1117 = vperm.xlu0 %1116, %v649
    %v1118 = vpop.permute.xlu0 %1117
    %v1120 = vmul.f32 %v1106, %v528
    %v1121 = vmul.f32 %v1110, %v534
    %v1122 = vmul.f32 %v1114, %v540
    %v1123 = vmul.f32 %v1118, %v546
    %1128 = vrot.lane.b32.xlu0 %v1120, 64
    %v1129 = vpop.permute.xlu0 %1128
    %1130 = vrot.lane.b32.xlu0 %v1121, 64
    %v1131 = vpop.permute.xlu0 %1130
    %1132 = vrot.lane.b32.xlu0 %v1122, 64
    %v1133 = vpop.permute.xlu0 %1132
    %1134 = vrot.lane.b32.xlu0 %v1123, 64
    %v1135 = vpop.permute.xlu0 %1134
    %v1140 = vadd.f32 %v1100, %v1129
    %v1141 = vadd.f32 %v1101, %v1131
    %v1142 = vadd.f32 %v1102, %v1133
    %v1143 = vadd.f32 %v1103, %v1135
    %1144 = vset.pattern.permute.xlu0 13
    %1145 = vperm.xlu0 %1144, %v634
    %v1146 = vpop.permute.xlu0 %1145
    %1148 = vset.pattern.permute.xlu0 13
    %1149 = vperm.xlu0 %1148, %v639
    %v1150 = vpop.permute.xlu0 %1149
    %1152 = vset.pattern.permute.xlu0 13
    %1153 = vperm.xlu0 %1152, %v644
    %v1154 = vpop.permute.xlu0 %1153
    %1156 = vset.pattern.permute.xlu0 13
    %1157 = vperm.xlu0 %1156, %v649
    %v1158 = vpop.permute.xlu0 %1157
    %v1160 = vmul.f32 %v1146, %v528
    %v1161 = vmul.f32 %v1150, %v534
    %v1162 = vmul.f32 %v1154, %v540
    %v1163 = vmul.f32 %v1158, %v546
    %1168 = vrot.lane.b32.xlu0 %v1160, 48
    %v1169 = vpop.permute.xlu0 %1168
    %1170 = vrot.lane.b32.xlu0 %v1161, 48
    %v1171 = vpop.permute.xlu0 %1170
    %1172 = vrot.lane.b32.xlu0 %v1162, 48
    %v1173 = vpop.permute.xlu0 %1172
    %1174 = vrot.lane.b32.xlu0 %v1163, 48
    %v1175 = vpop.permute.xlu0 %1174
    %v1180 = vadd.f32 %v1140, %v1169
    %v1181 = vadd.f32 %v1141, %v1171
    %v1182 = vadd.f32 %v1142, %v1173
    %v1183 = vadd.f32 %v1143, %v1175
    %1184 = vset.pattern.permute.xlu0 14
    %1185 = vperm.xlu0 %1184, %v634
    %v1186 = vpop.permute.xlu0 %1185
    %1188 = vset.pattern.permute.xlu0 14
    %1189 = vperm.xlu0 %1188, %v639
    %v1190 = vpop.permute.xlu0 %1189
    %1192 = vset.pattern.permute.xlu0 14
    %1193 = vperm.xlu0 %1192, %v644
    %v1194 = vpop.permute.xlu0 %1193
    %1196 = vset.pattern.permute.xlu0 14
    %1197 = vperm.xlu0 %1196, %v649
    %v1198 = vpop.permute.xlu0 %1197
    %v1200 = vmul.f32 %v1186, %v528
    %v1201 = vmul.f32 %v1190, %v534
    %v1202 = vmul.f32 %v1194, %v540
    %v1203 = vmul.f32 %v1198, %v546
    %1208 = vrot.lane.b32.xlu0 %v1200, 32
    %v1209 = vpop.permute.xlu0 %1208
    %1210 = vrot.lane.b32.xlu0 %v1201, 32
    %v1211 = vpop.permute.xlu0 %1210
    %1212 = vrot.lane.b32.xlu0 %v1202, 32
    %v1213 = vpop.permute.xlu0 %1212
    %1214 = vrot.lane.b32.xlu0 %v1203, 32
    %v1215 = vpop.permute.xlu0 %1214
    %v1220 = vadd.f32 %v1180, %v1209
    %v1221 = vadd.f32 %v1181, %v1211
    %v1222 = vadd.f32 %v1182, %v1213
    %v1223 = vadd.f32 %v1183, %v1215
    %1224 = vset.pattern.permute.xlu0 15
    %1225 = vperm.xlu0 %1224, %v634
    %v1226 = vpop.permute.xlu0 %1225
    %1228 = vset.pattern.permute.xlu0 15
    %1229 = vperm.xlu0 %1228, %v639
    %v1230 = vpop.permute.xlu0 %1229
    %1232 = vset.pattern.permute.xlu0 15
    %1233 = vperm.xlu0 %1232, %v644
    %v1234 = vpop.permute.xlu0 %1233
    %1236 = vset.pattern.permute.xlu0 15
    %1237 = vperm.xlu0 %1236, %v649
    %v1238 = vpop.permute.xlu0 %1237
    %v1240 = vmul.f32 %v1226, %v528
    %v1241 = vmul.f32 %v1230, %v534
    %v1242 = vmul.f32 %v1234, %v540
    %v1243 = vmul.f32 %v1238, %v546
    %1248 = vrot.lane.b32.xlu0 %v1240, 16
    %v1249 = vpop.permute.xlu0 %1248
    %1250 = vrot.lane.b32.xlu0 %v1241, 16
    %v1251 = vpop.permute.xlu0 %1250
    %1252 = vrot.lane.b32.xlu0 %v1242, 16
    %v1253 = vpop.permute.xlu0 %1252
    %1254 = vrot.lane.b32.xlu0 %v1243, 16
    %v1255 = vpop.permute.xlu0 %1254
    %v1260 = vadd.f32 %v1220, %v1249
    %v1261 = vadd.f32 %v1221, %v1251
    %v1262 = vadd.f32 %v1222, %v1253
    %v1263 = vadd.f32 %v1223, %v1255
    %vm1264 = vcmask 261120
    %v1266 = vsel %vm1264, %v295, 0
    %v1269 = vsel %vm1264, %v296, 0
    %1271 = vmatprep.subr.mxu0 0.0
    %1272 = vmatpush1.msra.mxu0 0.0
    %1273 = vmatprep.subr.mxu0 0.0
    %1274 = vmatpush1.msra.mxu0 0.0
    %1275 = vmatprep.subr.mxu0 0.0
    %1276 = vmatpush1.msra.mxu0 0.0
    %1277 = vmatprep.subr.mxu0 0.0
    %1278 = vmatpush1.msra.mxu0 0.0
    %1279 = vmatprep.subr.mxu0 0.0
    %1280 = vmatpush1.msra.mxu0 0.0
    %1281 = vmatprep.subr.mxu0 0.0
    %1282 = vmatpush1.msra.mxu0 0.0
    %1283 = vmatprep.subr.mxu0 0.0
    %1284 = vmatpush1.msra.mxu0 0.0
    %1285 = vmatprep.subr.mxu0 0.0
    %1286 = vmatpush1.msra.mxu0 0.0
    %1287 = vmatprep.subr.mxu0 0.0
    %1288 = vmatpush1.msra.mxu0 0.0
    %1289 = vmatprep.subr.mxu0 0.0
    %1290 = vmatpush1.msra.mxu0 0.0
    %1291 = vmatprep.subr.mxu0 0.0
    %1292 = vmatpush1.msra.mxu0 0.0
    %1293 = vmatprep.subr.mxu0 0.0
    %1294 = vmatpush1.msra.mxu0 0.0
    %1295 = vmatprep.subr.mxu0 0.0
    %1296 = vmatpush1.msra.mxu0 %v1263
    %1297 = vmatprep.subr.mxu0 0.0
    %1298 = vmatpush1.msra.mxu0 %v1262
    %1299 = vmatprep.subr.mxu0 0.0
    %1300 = vmatpush1.msra.mxu0 %v1261
    %1301 = vmatprep.subr.mxu0 0.0
    %1302 = vmatpush1.msra.mxu0 %v1260
    %1303 = vmatprep.subr.mxu0 0.0
    %1304 = vmatpush2.msra.mxu0 0.0
    %1305 = vmatprep.subr.mxu0 0.0
    %1306 = vmatpush2.msra.mxu0 0.0
    %1307 = vmatprep.subr.mxu0 0.0
    %1308 = vmatpush2.msra.mxu0 0.0
    %1309 = vmatprep.subr.mxu0 0.0
    %1310 = vmatpush2.msra.mxu0 0.0
    %1311 = vmatprep.subr.mxu0 0.0
    %1312 = vmatpush2.msra.mxu0 0.0
    %1313 = vmatprep.subr.mxu0 0.0
    %1314 = vmatpush2.msra.mxu0 0.0
    %1315 = vmatprep.subr.mxu0 0.0
    %1316 = vmatpush2.msra.mxu0 0.0
    %1317 = vmatprep.subr.mxu0 0.0
    %1318 = vmatpush2.msra.mxu0 0.0
    %1319 = vmatprep.subr.mxu0 0.0
    %1320 = vmatpush2.msra.mxu0 0.0
    %1321 = vmatprep.subr.mxu0 0.0
    %1322 = vmatpush2.msra.mxu0 0.0
    %1323 = vmatprep.subr.mxu0 0.0
    %1324 = vmatpush2.msra.mxu0 0.0
    %1325 = vmatprep.subr.mxu0 0.0
    %1326 = vmatpush2.msra.mxu0 0.0
    %1327 = vmatprep.subr.mxu0 0.0
    %1328 = vmatpush2.msra.mxu0 0.0
    %1329 = vmatprep.subr.mxu0 0.0
    %1330 = vmatpush2.msra.mxu0 0.0
    %1331 = vmatprep.subr.mxu0 0.0
    %1332 = vmatpush2.msra.mxu0 0.0
    %1333 = vmatprep.subr.mxu0 0.0
    %1334 = vmatpush2.msra.mxu0 0.0
    %1335 = vmatprep.mubr.f32.mxu0 0.0
    %1336 = vmatmul.mubr.f32.gmra.mxu0 %v1266
    %v1337 = vpop.f32.mrf.mxu0
    %v1338 = vadd.f32 0.0, %v1337
    %v1339 = vpop.f32.mrf.mxu0
    %1340 = vmatprep.mubr.f32.mxu0 0.0
    %1341 = vmatmul.mubr.f32.gmra.mxu0 %v1269
    %v1342 = vpop.f32.mrf.mxu0
    %v1343 = vadd.f32 0.0, %v1342
    %v1344 = vpop.f32.mrf.mxu0
    %1345 = vdwg.mxu0
    %v1347 = vlaneseq
    %v1348 = vshrl.u32 %v1347, 7
    %v1349 = vsub.s32 0, %v1348
    %v1350 = vrot.slane %v550, %v1349
    %v1353 = vsel %vm554, %v1338, 0
    %v1356 = vsel %vm554, %v1343, 0
    %1358 = vmatprep.subr.mxu0 0.0
    %1359 = vmatpush1.msra.mxu0 0.0
    %1360 = vmatprep.subr.mxu0 0.0
    %1361 = vmatpush1.msra.mxu0 0.0
    %1362 = vmatprep.subr.mxu0 0.0
    %1363 = vmatpush1.msra.mxu0 0.0
    %1364 = vmatprep.subr.mxu0 0.0
    %1365 = vmatpush1.msra.mxu0 0.0
    %1366 = vmatprep.subr.mxu0 0.0
    %1367 = vmatpush1.msra.mxu0 0.0
    %1368 = vmatprep.subr.mxu0 0.0
    %1369 = vmatpush1.msra.mxu0 0.0
    %1370 = vmatprep.subr.mxu0 0.0
    %1371 = vmatpush1.msra.mxu0 0.0
    %1372 = vmatprep.subr.mxu0 0.0
    %1373 = vmatpush1.msra.mxu0 0.0
    %1374 = vmatprep.subr.mxu0 0.0
    %1375 = vmatpush1.msra.mxu0 0.0
    %1376 = vmatprep.subr.mxu0 0.0
    %1377 = vmatpush1.msra.mxu0 0.0
    %1378 = vmatprep.subr.mxu0 0.0
    %1379 = vmatpush1.msra.mxu0 0.0
    %1380 = vmatprep.subr.mxu0 0.0
    %1381 = vmatpush1.msra.mxu0 0.0
    %1382 = vmatprep.subr.mxu0 0.0
    %1383 = vmatpush1.msra.mxu0 0.0
    %1384 = vmatprep.subr.mxu0 0.0
    %1385 = vmatpush1.msra.mxu0 0.0
    %1386 = vmatprep.subr.mxu0 0.0
    %1387 = vmatpush1.msra.mxu0 %v549
    %1388 = vmatprep.subr.mxu0 0.0
    %1389 = vmatpush1.msra.mxu0 %v548
    %1390 = vmatprep.subr.mxu0 0.0
    %1391 = vmatpush2.msra.mxu0 0.0
    %1392 = vmatprep.subr.mxu0 0.0
    %1393 = vmatpush2.msra.mxu0 0.0
    %1394 = vmatprep.subr.mxu0 0.0
    %1395 = vmatpush2.msra.mxu0 0.0
    %1396 = vmatprep.subr.mxu0 0.0
    %1397 = vmatpush2.msra.mxu0 0.0
    %1398 = vmatprep.subr.mxu0 0.0
    %1399 = vmatpush2.msra.mxu0 0.0
    %1400 = vmatprep.subr.mxu0 0.0
    %1401 = vmatpush2.msra.mxu0 0.0
    %1402 = vmatprep.subr.mxu0 0.0
    %1403 = vmatpush2.msra.mxu0 0.0
    %1404 = vmatprep.subr.mxu0 0.0
    %1405 = vmatpush2.msra.mxu0 0.0
    %1406 = vmatprep.subr.mxu0 0.0
    %1407 = vmatpush2.msra.mxu0 0.0
    %1408 = vmatprep.subr.mxu0 0.0
    %1409 = vmatpush2.msra.mxu0 0.0
    %1410 = vmatprep.subr.mxu0 0.0
    %1411 = vmatpush2.msra.mxu0 0.0
    %1412 = vmatprep.subr.mxu0 0.0
    %1413 = vmatpush2.msra.mxu0 0.0
    %1414 = vmatprep.subr.mxu0 0.0
    %1415 = vmatpush2.msra.mxu0 0.0
    %1416 = vmatprep.subr.mxu0 0.0
    %1417 = vmatpush2.msra.mxu0 0.0
    %1418 = vmatprep.subr.mxu0 0.0
    %1419 = vmatpush2.msra.mxu0 0.0
    %1420 = vmatprep.subr.mxu0 0.0
    %1421 = vmatpush2.msra.mxu0 0.0
    %1422 = vmatprep.mubr.f32.mxu0 0.0
    %1423 = vmatmul.mubr.f32.gmra.mxu0 %v1353
    %v1424 = vpop.f32.mrf.mxu0
    %v1425 = vadd.f32 %v1350, %v1424
    %v1426 = vpop.f32.mrf.mxu0
    %1427 = vmatprep.mubr.f32.mxu0 0.0
    %1428 = vmatmul.mubr.f32.gmra.mxu0 %v1356
    %v1429 = vpop.f32.mrf.mxu0
    %v1430 = vadd.f32 %v1350, %v1429
    %v1431 = vpop.f32.mrf.mxu0
    %1432 = vdwg.mxu0
    %v1434 = vlaneseq
    %v1435 = vshrl.u32 %v1434, 7
    %v1436 = vsub.s32 0, %v1435
    %v1437 = vrot.slane %v553, %v1436
    %v1440 = vsel %vm554, %v293, 0
    %v1443 = vsel %vm554, %v294, 0
    %1445 = vmatprep.subr.mxu0 0.0
    %1446 = vmatpush1.msra.mxu0 0.0
    %1447 = vmatprep.subr.mxu0 0.0
    %1448 = vmatpush1.msra.mxu0 0.0
    %1449 = vmatprep.subr.mxu0 0.0
    %1450 = vmatpush1.msra.mxu0 0.0
    %1451 = vmatprep.subr.mxu0 0.0
    %1452 = vmatpush1.msra.mxu0 0.0
    %1453 = vmatprep.subr.mxu0 0.0
    %1454 = vmatpush1.msra.mxu0 0.0
    %1455 = vmatprep.subr.mxu0 0.0
    %1456 = vmatpush1.msra.mxu0 0.0
    %1457 = vmatprep.subr.mxu0 0.0
    %1458 = vmatpush1.msra.mxu0 0.0
    %1459 = vmatprep.subr.mxu0 0.0
    %1460 = vmatpush1.msra.mxu0 0.0
    %1461 = vmatprep.subr.mxu0 0.0
    %1462 = vmatpush1.msra.mxu0 0.0
    %1463 = vmatprep.subr.mxu0 0.0
    %1464 = vmatpush1.msra.mxu0 0.0
    %1465 = vmatprep.subr.mxu0 0.0
    %1466 = vmatpush1.msra.mxu0 0.0
    %1467 = vmatprep.subr.mxu0 0.0
    %1468 = vmatpush1.msra.mxu0 0.0
    %1469 = vmatprep.subr.mxu0 0.0
    %1470 = vmatpush1.msra.mxu0 0.0
    %1471 = vmatprep.subr.mxu0 0.0
    %1472 = vmatpush1.msra.mxu0 0.0
    %1473 = vmatprep.subr.mxu0 0.0
    %1474 = vmatpush1.msra.mxu0 %v552
    %1475 = vmatprep.subr.mxu0 0.0
    %1476 = vmatpush1.msra.mxu0 %v551
    %1477 = vmatprep.subr.mxu0 0.0
    %1478 = vmatpush2.msra.mxu0 0.0
    %1479 = vmatprep.subr.mxu0 0.0
    %1480 = vmatpush2.msra.mxu0 0.0
    %1481 = vmatprep.subr.mxu0 0.0
    %1482 = vmatpush2.msra.mxu0 0.0
    %1483 = vmatprep.subr.mxu0 0.0
    %1484 = vmatpush2.msra.mxu0 0.0
    %1485 = vmatprep.subr.mxu0 0.0
    %1486 = vmatpush2.msra.mxu0 0.0
    %1487 = vmatprep.subr.mxu0 0.0
    %1488 = vmatpush2.msra.mxu0 0.0
    %1489 = vmatprep.subr.mxu0 0.0
    %1490 = vmatpush2.msra.mxu0 0.0
    %1491 = vmatprep.subr.mxu0 0.0
    %1492 = vmatpush2.msra.mxu0 0.0
    %1493 = vmatprep.subr.mxu0 0.0
    %1494 = vmatpush2.msra.mxu0 0.0
    %1495 = vmatprep.subr.mxu0 0.0
    %1496 = vmatpush2.msra.mxu0 0.0
    %1497 = vmatprep.subr.mxu0 0.0
    %1498 = vmatpush2.msra.mxu0 0.0
    %1499 = vmatprep.subr.mxu0 0.0
    %1500 = vmatpush2.msra.mxu0 0.0
    %1501 = vmatprep.subr.mxu0 0.0
    %1502 = vmatpush2.msra.mxu0 0.0
    %1503 = vmatprep.subr.mxu0 0.0
    %1504 = vmatpush2.msra.mxu0 0.0
    %1505 = vmatprep.subr.mxu0 0.0
    %1506 = vmatpush2.msra.mxu0 0.0
    %1507 = vmatprep.subr.mxu0 0.0
    %1508 = vmatpush2.msra.mxu0 0.0
    %1509 = vmatprep.mubr.f32.mxu0 0.0
    %1510 = vmatmul.mubr.f32.gmra.mxu0 %v1440
    %v1511 = vpop.f32.mrf.mxu0
    %v1512 = vadd.f32 %v1437, %v1511
    %v1513 = vpop.f32.mrf.mxu0
    %1514 = vmatprep.mubr.f32.mxu0 0.0
    %1515 = vmatmul.mubr.f32.gmra.mxu0 %v1443
    %v1516 = vpop.f32.mrf.mxu0
    %v1517 = vadd.f32 %v1437, %v1516
    %v1518 = vpop.f32.mrf.mxu0
    %1519 = vdwg.mxu0
    %v1520 = vadd.f32 %v1425, %v1512
    %v1521 = vadd.f32 %v1430, %v1517
    %v1522 = vxor.u32 %v1520, 2147483648
    %v1523 = vxor.u32 %v1521, 2147483648
    %v1524 = vmul.f32 %v1522, 1.442695
    %v1525 = vpow.pop %v1524
    %v1526 = vmul.f32 %v1523, 1.442695
    %v1527 = vpow.pop %v1526
    %v1528 = vadd.f32 %v1525, 1.0
    %v1529 = vadd.f32 %v1527, 1.0
    %v1530 = vrcp.pop %v1528
    %v1531 = vmul.f32 1.0, %v1530
    %v1532 = vrcp.pop %v1529
    %v1533 = vmul.f32 1.0, %v1532
    %1536 = vrot.lane.b32.xlu0 %v1512, 96
    %v1537 = vpop.permute.xlu0 %1536
    %1538 = vrot.lane.b32.xlu0 %v1517, 96
    %v1539 = vpop.permute.xlu0 %1538
    %v1542 = vmul.f32 %v1531, %v1537
    %v1543 = vmul.f32 %v1533, %v1539
    %1546 = vrot.lane.b32.xlu0 %v1542, 32
    %v1547 = vpop.permute.xlu0 %1546
    %1548 = vrot.lane.b32.xlu0 %v1543, 32
    %v1549 = vpop.permute.xlu0 %1548
    %v1552 = vadd.f32 %v1425, %v1547
    %v1553 = vadd.f32 %v1430, %v1549
    %v1554 = vtanh.pop %v1552
    %v1555 = vtanh.pop %v1553
    %v1556 = vsub.f32 1.0, %v1531
    %v1557 = vsub.f32 1.0, %v1533
    %1560 = vrot.lane.b32.xlu0 %v1554, 112
    %v1561 = vpop.permute.xlu0 %1560
    %1562 = vrot.lane.b32.xlu0 %v1555, 112
    %v1563 = vpop.permute.xlu0 %1562
    %v1566 = vmul.f32 %v1556, %v1561
    %v1567 = vmul.f32 %v1557, %v1563
    %1568 = vrot.lane.b32.xlu0 %v293, 16
    %v1569 = vpop.permute.xlu0 %1568
    %1570 = vrot.lane.b32.xlu0 %v294, 16
    %v1571 = vpop.permute.xlu0 %1570
    %v1574 = vmul.f32 %v1531, %v1569
    %v1575 = vmul.f32 %v1533, %v1571
    %v1576 = vadd.f32 %v1566, %v1574
    %v1577 = vadd.f32 %v1567, %v1575
    %1580 = vrot.lane.b32.xlu0 %v1576, 112
    %v1581 = vpop.permute.xlu0 %1580
    %1582 = vrot.lane.b32.xlu0 %v1577, 112
    %v1583 = vpop.permute.xlu0 %1582
    %1586 = vmatprep.subr.mxu0 0.0
    %1587 = vmatpush1.msra.mxu0 0.0
    %1588 = vmatprep.subr.mxu0 0.0
    %1589 = vmatpush1.msra.mxu0 0.0
    %1590 = vmatprep.subr.mxu0 0.0
    %1591 = vmatpush1.msra.mxu0 0.0
    %1592 = vmatprep.subr.mxu0 0.0
    %1593 = vmatpush1.msra.mxu0 0.0
    %1594 = vmatprep.subr.mxu0 0.0
    %1595 = vmatpush1.msra.mxu0 0.0
    %1596 = vmatprep.subr.mxu0 0.0
    %1597 = vmatpush1.msra.mxu0 0.0
    %1598 = vmatprep.subr.mxu0 0.0
    %1599 = vmatpush1.msra.mxu0 0.0
    %1600 = vmatprep.subr.mxu0 0.0
    %1601 = vmatpush1.msra.mxu0 0.0
    %1602 = vmatprep.subr.mxu0 0.0
    %1603 = vmatpush1.msra.mxu0 0.0
    %1604 = vmatprep.subr.mxu0 0.0
    %1605 = vmatpush1.msra.mxu0 0.0
    %1606 = vmatprep.subr.mxu0 0.0
    %1607 = vmatpush1.msra.mxu0 0.0
    %1608 = vmatprep.subr.mxu0 0.0
    %1609 = vmatpush1.msra.mxu0 0.0
    %1610 = vmatprep.subr.mxu0 0.0
    %1611 = vmatpush1.msra.mxu0 0.0
    %1612 = vmatprep.subr.mxu0 0.0
    %1613 = vmatpush1.msra.mxu0 0.0
    %1614 = vmatprep.subr.mxu0 0.0
    %1615 = vmatpush1.msra.mxu0 %v1583
    %1616 = vmatprep.subr.mxu0 0.0
    %1617 = vmatpush1.msra.mxu0 %v1581
    %1618 = vmatprep.subr.mxu0 0.0
    %1619 = vmatpush2.msra.mxu0 0.0
    %1620 = vmatprep.subr.mxu0 0.0
    %1621 = vmatpush2.msra.mxu0 0.0
    %1622 = vmatprep.subr.mxu0 0.0
    %1623 = vmatpush2.msra.mxu0 0.0
    %1624 = vmatprep.subr.mxu0 0.0
    %1625 = vmatpush2.msra.mxu0 0.0
    %1626 = vmatprep.subr.mxu0 0.0
    %1627 = vmatpush2.msra.mxu0 0.0
    %1628 = vmatprep.subr.mxu0 0.0
    %1629 = vmatpush2.msra.mxu0 0.0
    %1630 = vmatprep.subr.mxu0 0.0
    %1631 = vmatpush2.msra.mxu0 0.0
    %1632 = vmatprep.subr.mxu0 0.0
    %1633 = vmatpush2.msra.mxu0 0.0
    %1634 = vmatprep.subr.mxu0 0.0
    %1635 = vmatpush2.msra.mxu0 0.0
    %1636 = vmatprep.subr.mxu0 0.0
    %1637 = vmatpush2.msra.mxu0 0.0
    %1638 = vmatprep.subr.mxu0 0.0
    %1639 = vmatpush2.msra.mxu0 0.0
    %1640 = vmatprep.subr.mxu0 0.0
    %1641 = vmatpush2.msra.mxu0 0.0
    %1642 = vmatprep.subr.mxu0 0.0
    %1643 = vmatpush2.msra.mxu0 0.0
    %1644 = vmatprep.subr.mxu0 0.0
    %1645 = vmatpush2.msra.mxu0 0.0
    %1646 = vmatprep.subr.mxu0 0.0
    %1647 = vmatpush2.msra.mxu0 0.0
    %1648 = vmatprep.subr.mxu0 0.0
    %1649 = vmatpush2.msra.mxu0 0.0
    %1650 = vmatprep.mubr.f32.mxu0 0.0
    %1651 = vmatmul.mubr.f32.gmra.mxu0 %v556
    %v1652 = vpop.f32.mrf.mxu0
    %v1653 = vadd.f32 0.0, %v1652
    %v1654 = vpop.f32.mrf.mxu0
    %1655 = vmatprep.mubr.f32.mxu0 0.0
    %1656 = vmatmul.mubr.f32.gmra.mxu0 %v559
    %v1657 = vpop.f32.mrf.mxu0
    %v1658 = vadd.f32 0.0, %v1657
    %v1659 = vpop.f32.mrf.mxu0
    %1660 = vmatprep.mubr.f32.mxu0 0.0
    %1661 = vmatmul.mubr.f32.gmra.mxu0 %v562
    %v1662 = vpop.f32.mrf.mxu0
    %v1663 = vadd.f32 0.0, %v1662
    %v1664 = vpop.f32.mrf.mxu0
    %1665 = vmatprep.mubr.f32.mxu0 0.0
    %1666 = vmatmul.mubr.f32.gmra.mxu0 %v565
    %v1667 = vpop.f32.mrf.mxu0
    %v1668 = vadd.f32 0.0, %v1667
    %v1669 = vpop.f32.mrf.mxu0
    %1670 = vdwg.mxu0
    %1672 = vset.pattern.permute.xlu0 0
    %1673 = vperm.xlu0 %1672, %v1653
    %v1674 = vpop.permute.xlu0 %1673
    %1677 = vset.pattern.permute.xlu0 0
    %1678 = vperm.xlu0 %1677, %v1658
    %v1679 = vpop.permute.xlu0 %1678
    %1682 = vset.pattern.permute.xlu0 0
    %1683 = vperm.xlu0 %1682, %v1663
    %v1684 = vpop.permute.xlu0 %1683
    %1687 = vset.pattern.permute.xlu0 0
    %1688 = vperm.xlu0 %1687, %v1668
    %v1689 = vpop.permute.xlu0 %1688
    %v1691 = vmul.f32 %v1674, %v526
    %v1692 = vmul.f32 %v1679, %v532
    %v1693 = vmul.f32 %v1684, %v538
    %v1694 = vmul.f32 %v1689, %v544
    %v1695 = vadd.f32 %v1691, 0.0
    %v1696 = vadd.f32 %v1692, 0.0
    %v1697 = vadd.f32 %v1693, 0.0
    %v1698 = vadd.f32 %v1694, 0.0
    %1699 = vset.pattern.permute.xlu0 1
    %1700 = vperm.xlu0 %1699, %v1653
    %v1701 = vpop.permute.xlu0 %1700
    %1703 = vset.pattern.permute.xlu0 1
    %1704 = vperm.xlu0 %1703, %v1658
    %v1705 = vpop.permute.xlu0 %1704
    %1707 = vset.pattern.permute.xlu0 1
    %1708 = vperm.xlu0 %1707, %v1663
    %v1709 = vpop.permute.xlu0 %1708
    %1711 = vset.pattern.permute.xlu0 1
    %1712 = vperm.xlu0 %1711, %v1668
    %v1713 = vpop.permute.xlu0 %1712
    %v1715 = vmul.f32 %v1701, %v526
    %v1716 = vmul.f32 %v1705, %v532
    %v1717 = vmul.f32 %v1709, %v538
    %v1718 = vmul.f32 %v1713, %v544
    %1723 = vrot.lane.b32.xlu0 %v1715, 112
    %v1724 = vpop.permute.xlu0 %1723
    %1725 = vrot.lane.b32.xlu0 %v1716, 112
    %v1726 = vpop.permute.xlu0 %1725
    %1727 = vrot.lane.b32.xlu0 %v1717, 112
    %v1728 = vpop.permute.xlu0 %1727
    %1729 = vrot.lane.b32.xlu0 %v1718, 112
    %v1730 = vpop.permute.xlu0 %1729
    %v1735 = vadd.f32 %v1695, %v1724
    %v1736 = vadd.f32 %v1696, %v1726
    %v1737 = vadd.f32 %v1697, %v1728
    %v1738 = vadd.f32 %v1698, %v1730
    %1739 = vset.pattern.permute.xlu0 2
    %1740 = vperm.xlu0 %1739, %v1653
    %v1741 = vpop.permute.xlu0 %1740
    %1743 = vset.pattern.permute.xlu0 2
    %1744 = vperm.xlu0 %1743, %v1658
    %v1745 = vpop.permute.xlu0 %1744
    %1747 = vset.pattern.permute.xlu0 2
    %1748 = vperm.xlu0 %1747, %v1663
    %v1749 = vpop.permute.xlu0 %1748
    %1751 = vset.pattern.permute.xlu0 2
    %1752 = vperm.xlu0 %1751, %v1668
    %v1753 = vpop.permute.xlu0 %1752
    %v1755 = vmul.f32 %v1741, %v526
    %v1756 = vmul.f32 %v1745, %v532
    %v1757 = vmul.f32 %v1749, %v538
    %v1758 = vmul.f32 %v1753, %v544
    %1763 = vrot.lane.b32.xlu0 %v1755, 96
    %v1764 = vpop.permute.xlu0 %1763
    %1765 = vrot.lane.b32.xlu0 %v1756, 96
    %v1766 = vpop.permute.xlu0 %1765
    %1767 = vrot.lane.b32.xlu0 %v1757, 96
    %v1768 = vpop.permute.xlu0 %1767
    %1769 = vrot.lane.b32.xlu0 %v1758, 96
    %v1770 = vpop.permute.xlu0 %1769
    %v1775 = vadd.f32 %v1735, %v1764
    %v1776 = vadd.f32 %v1736, %v1766
    %v1777 = vadd.f32 %v1737, %v1768
    %v1778 = vadd.f32 %v1738, %v1770
    %1779 = vset.pattern.permute.xlu0 3
    %1780 = vperm.xlu0 %1779, %v1653
    %v1781 = vpop.permute.xlu0 %1780
    %1783 = vset.pattern.permute.xlu0 3
    %1784 = vperm.xlu0 %1783, %v1658
    %v1785 = vpop.permute.xlu0 %1784
    %1787 = vset.pattern.permute.xlu0 3
    %1788 = vperm.xlu0 %1787, %v1663
    %v1789 = vpop.permute.xlu0 %1788
    %1791 = vset.pattern.permute.xlu0 3
    %1792 = vperm.xlu0 %1791, %v1668
    %v1793 = vpop.permute.xlu0 %1792
    %v1795 = vmul.f32 %v1781, %v526
    %v1796 = vmul.f32 %v1785, %v532
    %v1797 = vmul.f32 %v1789, %v538
    %v1798 = vmul.f32 %v1793, %v544
    %1803 = vrot.lane.b32.xlu0 %v1795, 80
    %v1804 = vpop.permute.xlu0 %1803
    %1805 = vrot.lane.b32.xlu0 %v1796, 80
    %v1806 = vpop.permute.xlu0 %1805
    %1807 = vrot.lane.b32.xlu0 %v1797, 80
    %v1808 = vpop.permute.xlu0 %1807
    %1809 = vrot.lane.b32.xlu0 %v1798, 80
    %v1810 = vpop.permute.xlu0 %1809
    %v1815 = vadd.f32 %v1775, %v1804
    %v1816 = vadd.f32 %v1776, %v1806
    %v1817 = vadd.f32 %v1777, %v1808
    %v1818 = vadd.f32 %v1778, %v1810
    %1819 = vset.pattern.permute.xlu0 4
    %1820 = vperm.xlu0 %1819, %v1653
    %v1821 = vpop.permute.xlu0 %1820
    %1823 = vset.pattern.permute.xlu0 4
    %1824 = vperm.xlu0 %1823, %v1658
    %v1825 = vpop.permute.xlu0 %1824
    %1827 = vset.pattern.permute.xlu0 4
    %1828 = vperm.xlu0 %1827, %v1663
    %v1829 = vpop.permute.xlu0 %1828
    %1831 = vset.pattern.permute.xlu0 4
    %1832 = vperm.xlu0 %1831, %v1668
    %v1833 = vpop.permute.xlu0 %1832
    %v1835 = vmul.f32 %v1821, %v526
    %v1836 = vmul.f32 %v1825, %v532
    %v1837 = vmul.f32 %v1829, %v538
    %v1838 = vmul.f32 %v1833, %v544
    %1843 = vrot.lane.b32.xlu0 %v1835, 64
    %v1844 = vpop.permute.xlu0 %1843
    %1845 = vrot.lane.b32.xlu0 %v1836, 64
    %v1846 = vpop.permute.xlu0 %1845
    %1847 = vrot.lane.b32.xlu0 %v1837, 64
    %v1848 = vpop.permute.xlu0 %1847
    %1849 = vrot.lane.b32.xlu0 %v1838, 64
    %v1850 = vpop.permute.xlu0 %1849
    %v1855 = vadd.f32 %v1815, %v1844
    %v1856 = vadd.f32 %v1816, %v1846
    %v1857 = vadd.f32 %v1817, %v1848
    %v1858 = vadd.f32 %v1818, %v1850
    %1859 = vset.pattern.permute.xlu0 5
    %1860 = vperm.xlu0 %1859, %v1653
    %v1861 = vpop.permute.xlu0 %1860
    %1863 = vset.pattern.permute.xlu0 5
    %1864 = vperm.xlu0 %1863, %v1658
    %v1865 = vpop.permute.xlu0 %1864
    %1867 = vset.pattern.permute.xlu0 5
    %1868 = vperm.xlu0 %1867, %v1663
    %v1869 = vpop.permute.xlu0 %1868
    %1871 = vset.pattern.permute.xlu0 5
    %1872 = vperm.xlu0 %1871, %v1668
    %v1873 = vpop.permute.xlu0 %1872
    %v1875 = vmul.f32 %v1861, %v526
    %v1876 = vmul.f32 %v1865, %v532
    %v1877 = vmul.f32 %v1869, %v538
    %v1878 = vmul.f32 %v1873, %v544
    %1883 = vrot.lane.b32.xlu0 %v1875, 48
    %v1884 = vpop.permute.xlu0 %1883
    %1885 = vrot.lane.b32.xlu0 %v1876, 48
    %v1886 = vpop.permute.xlu0 %1885
    %1887 = vrot.lane.b32.xlu0 %v1877, 48
    %v1888 = vpop.permute.xlu0 %1887
    %1889 = vrot.lane.b32.xlu0 %v1878, 48
    %v1890 = vpop.permute.xlu0 %1889
    %v1895 = vadd.f32 %v1855, %v1884
    %v1896 = vadd.f32 %v1856, %v1886
    %v1897 = vadd.f32 %v1857, %v1888
    %v1898 = vadd.f32 %v1858, %v1890
    %1899 = vset.pattern.permute.xlu0 6
    %1900 = vperm.xlu0 %1899, %v1653
    %v1901 = vpop.permute.xlu0 %1900
    %1903 = vset.pattern.permute.xlu0 6
    %1904 = vperm.xlu0 %1903, %v1658
    %v1905 = vpop.permute.xlu0 %1904
    %1907 = vset.pattern.permute.xlu0 6
    %1908 = vperm.xlu0 %1907, %v1663
    %v1909 = vpop.permute.xlu0 %1908
    %1911 = vset.pattern.permute.xlu0 6
    %1912 = vperm.xlu0 %1911, %v1668
    %v1913 = vpop.permute.xlu0 %1912
    %v1915 = vmul.f32 %v1901, %v526
    %v1916 = vmul.f32 %v1905, %v532
    %v1917 = vmul.f32 %v1909, %v538
    %v1918 = vmul.f32 %v1913, %v544
    %1923 = vrot.lane.b32.xlu0 %v1915, 32
    %v1924 = vpop.permute.xlu0 %1923
    %1925 = vrot.lane.b32.xlu0 %v1916, 32
    %v1926 = vpop.permute.xlu0 %1925
    %1927 = vrot.lane.b32.xlu0 %v1917, 32
    %v1928 = vpop.permute.xlu0 %1927
    %1929 = vrot.lane.b32.xlu0 %v1918, 32
    %v1930 = vpop.permute.xlu0 %1929
    %v1935 = vadd.f32 %v1895, %v1924
    %v1936 = vadd.f32 %v1896, %v1926
    %v1937 = vadd.f32 %v1897, %v1928
    %v1938 = vadd.f32 %v1898, %v1930
    %1939 = vset.pattern.permute.xlu0 7
    %1940 = vperm.xlu0 %1939, %v1653
    %v1941 = vpop.permute.xlu0 %1940
    %1943 = vset.pattern.permute.xlu0 7
    %1944 = vperm.xlu0 %1943, %v1658
    %v1945 = vpop.permute.xlu0 %1944
    %1947 = vset.pattern.permute.xlu0 7
    %1948 = vperm.xlu0 %1947, %v1663
    %v1949 = vpop.permute.xlu0 %1948
    %1951 = vset.pattern.permute.xlu0 7
    %1952 = vperm.xlu0 %1951, %v1668
    %v1953 = vpop.permute.xlu0 %1952
    %v1955 = vmul.f32 %v1941, %v526
    %v1956 = vmul.f32 %v1945, %v532
    %v1957 = vmul.f32 %v1949, %v538
    %v1958 = vmul.f32 %v1953, %v544
    %1963 = vrot.lane.b32.xlu0 %v1955, 16
    %v1964 = vpop.permute.xlu0 %1963
    %1965 = vrot.lane.b32.xlu0 %v1956, 16
    %v1966 = vpop.permute.xlu0 %1965
    %1967 = vrot.lane.b32.xlu0 %v1957, 16
    %v1968 = vpop.permute.xlu0 %1967
    %1969 = vrot.lane.b32.xlu0 %v1958, 16
    %v1970 = vpop.permute.xlu0 %1969
    %v1975 = vadd.f32 %v1935, %v1964
    %v1976 = vadd.f32 %v1936, %v1966
    %v1977 = vadd.f32 %v1937, %v1968
    %v1978 = vadd.f32 %v1938, %v1970
    %1979 = vset.pattern.permute.xlu0 8
    %1980 = vperm.xlu0 %1979, %v1653
    %v1981 = vpop.permute.xlu0 %1980
    %1983 = vset.pattern.permute.xlu0 8
    %1984 = vperm.xlu0 %1983, %v1658
    %v1985 = vpop.permute.xlu0 %1984
    %1987 = vset.pattern.permute.xlu0 8
    %1988 = vperm.xlu0 %1987, %v1663
    %v1989 = vpop.permute.xlu0 %1988
    %1991 = vset.pattern.permute.xlu0 8
    %1992 = vperm.xlu0 %1991, %v1668
    %v1993 = vpop.permute.xlu0 %1992
    %v1995 = vmul.f32 %v1981, %v528
    %v1996 = vmul.f32 %v1985, %v534
    %v1997 = vmul.f32 %v1989, %v540
    %v1998 = vmul.f32 %v1993, %v546
    %v1999 = vadd.f32 %v1975, %v1995
    %v2000 = vadd.f32 %v1976, %v1996
    %v2001 = vadd.f32 %v1977, %v1997
    %v2002 = vadd.f32 %v1978, %v1998
    %2003 = vset.pattern.permute.xlu0 9
    %2004 = vperm.xlu0 %2003, %v1653
    %v2005 = vpop.permute.xlu0 %2004
    %2007 = vset.pattern.permute.xlu0 9
    %2008 = vperm.xlu0 %2007, %v1658
    %v2009 = vpop.permute.xlu0 %2008
    %2011 = vset.pattern.permute.xlu0 9
    %2012 = vperm.xlu0 %2011, %v1663
    %v2013 = vpop.permute.xlu0 %2012
    %2015 = vset.pattern.permute.xlu0 9
    %2016 = vperm.xlu0 %2015, %v1668
    %v2017 = vpop.permute.xlu0 %2016
    %v2019 = vmul.f32 %v2005, %v528
    %v2020 = vmul.f32 %v2009, %v534
    %v2021 = vmul.f32 %v2013, %v540
    %v2022 = vmul.f32 %v2017, %v546
    %2027 = vrot.lane.b32.xlu0 %v2019, 112
    %v2028 = vpop.permute.xlu0 %2027
    %2029 = vrot.lane.b32.xlu0 %v2020, 112
    %v2030 = vpop.permute.xlu0 %2029
    %2031 = vrot.lane.b32.xlu0 %v2021, 112
    %v2032 = vpop.permute.xlu0 %2031
    %2033 = vrot.lane.b32.xlu0 %v2022, 112
    %v2034 = vpop.permute.xlu0 %2033
    %v2039 = vadd.f32 %v1999, %v2028
    %v2040 = vadd.f32 %v2000, %v2030
    %v2041 = vadd.f32 %v2001, %v2032
    %v2042 = vadd.f32 %v2002, %v2034
    %2043 = vset.pattern.permute.xlu0 10
    %2044 = vperm.xlu0 %2043, %v1653
    %v2045 = vpop.permute.xlu0 %2044
    %2047 = vset.pattern.permute.xlu0 10
    %2048 = vperm.xlu0 %2047, %v1658
    %v2049 = vpop.permute.xlu0 %2048
    %2051 = vset.pattern.permute.xlu0 10
    %2052 = vperm.xlu0 %2051, %v1663
    %v2053 = vpop.permute.xlu0 %2052
    %2055 = vset.pattern.permute.xlu0 10
    %2056 = vperm.xlu0 %2055, %v1668
    %v2057 = vpop.permute.xlu0 %2056
    %v2059 = vmul.f32 %v2045, %v528
    %v2060 = vmul.f32 %v2049, %v534
    %v2061 = vmul.f32 %v2053, %v540
    %v2062 = vmul.f32 %v2057, %v546
    %2067 = vrot.lane.b32.xlu0 %v2059, 96
    %v2068 = vpop.permute.xlu0 %2067
    %2069 = vrot.lane.b32.xlu0 %v2060, 96
    %v2070 = vpop.permute.xlu0 %2069
    %2071 = vrot.lane.b32.xlu0 %v2061, 96
    %v2072 = vpop.permute.xlu0 %2071
    %2073 = vrot.lane.b32.xlu0 %v2062, 96
    %v2074 = vpop.permute.xlu0 %2073
    %v2079 = vadd.f32 %v2039, %v2068
    %v2080 = vadd.f32 %v2040, %v2070
    %v2081 = vadd.f32 %v2041, %v2072
    %v2082 = vadd.f32 %v2042, %v2074
    %2083 = vset.pattern.permute.xlu0 11
    %2084 = vperm.xlu0 %2083, %v1653
    %v2085 = vpop.permute.xlu0 %2084
    %2087 = vset.pattern.permute.xlu0 11
    %2088 = vperm.xlu0 %2087, %v1658
    %v2089 = vpop.permute.xlu0 %2088
    %2091 = vset.pattern.permute.xlu0 11
    %2092 = vperm.xlu0 %2091, %v1663
    %v2093 = vpop.permute.xlu0 %2092
    %2095 = vset.pattern.permute.xlu0 11
    %2096 = vperm.xlu0 %2095, %v1668
    %v2097 = vpop.permute.xlu0 %2096
    %v2099 = vmul.f32 %v2085, %v528
    %v2100 = vmul.f32 %v2089, %v534
    %v2101 = vmul.f32 %v2093, %v540
    %v2102 = vmul.f32 %v2097, %v546
    %2107 = vrot.lane.b32.xlu0 %v2099, 80
    %v2108 = vpop.permute.xlu0 %2107
    %2109 = vrot.lane.b32.xlu0 %v2100, 80
    %v2110 = vpop.permute.xlu0 %2109
    %2111 = vrot.lane.b32.xlu0 %v2101, 80
    %v2112 = vpop.permute.xlu0 %2111
    %2113 = vrot.lane.b32.xlu0 %v2102, 80
    %v2114 = vpop.permute.xlu0 %2113
    %v2119 = vadd.f32 %v2079, %v2108
    %v2120 = vadd.f32 %v2080, %v2110
    %v2121 = vadd.f32 %v2081, %v2112
    %v2122 = vadd.f32 %v2082, %v2114
    %2123 = vset.pattern.permute.xlu0 12
    %2124 = vperm.xlu0 %2123, %v1653
    %v2125 = vpop.permute.xlu0 %2124
    %2127 = vset.pattern.permute.xlu0 12
    %2128 = vperm.xlu0 %2127, %v1658
    %v2129 = vpop.permute.xlu0 %2128
    %2131 = vset.pattern.permute.xlu0 12
    %2132 = vperm.xlu0 %2131, %v1663
    %v2133 = vpop.permute.xlu0 %2132
    %2135 = vset.pattern.permute.xlu0 12
    %2136 = vperm.xlu0 %2135, %v1668
    %v2137 = vpop.permute.xlu0 %2136
    %v2139 = vmul.f32 %v2125, %v528
    %v2140 = vmul.f32 %v2129, %v534
    %v2141 = vmul.f32 %v2133, %v540
    %v2142 = vmul.f32 %v2137, %v546
    %2147 = vrot.lane.b32.xlu0 %v2139, 64
    %v2148 = vpop.permute.xlu0 %2147
    %2149 = vrot.lane.b32.xlu0 %v2140, 64
    %v2150 = vpop.permute.xlu0 %2149
    %2151 = vrot.lane.b32.xlu0 %v2141, 64
    %v2152 = vpop.permute.xlu0 %2151
    %2153 = vrot.lane.b32.xlu0 %v2142, 64
    %v2154 = vpop.permute.xlu0 %2153
    %v2159 = vadd.f32 %v2119, %v2148
    %v2160 = vadd.f32 %v2120, %v2150
    %v2161 = vadd.f32 %v2121, %v2152
    %v2162 = vadd.f32 %v2122, %v2154
    %2163 = vset.pattern.permute.xlu0 13
    %2164 = vperm.xlu0 %2163, %v1653
    %v2165 = vpop.permute.xlu0 %2164
    %2167 = vset.pattern.permute.xlu0 13
    %2168 = vperm.xlu0 %2167, %v1658
    %v2169 = vpop.permute.xlu0 %2168
    %2171 = vset.pattern.permute.xlu0 13
    %2172 = vperm.xlu0 %2171, %v1663
    %v2173 = vpop.permute.xlu0 %2172
    %2175 = vset.pattern.permute.xlu0 13
    %2176 = vperm.xlu0 %2175, %v1668
    %v2177 = vpop.permute.xlu0 %2176
    %v2179 = vmul.f32 %v2165, %v528
    %v2180 = vmul.f32 %v2169, %v534
    %v2181 = vmul.f32 %v2173, %v540
    %v2182 = vmul.f32 %v2177, %v546
    %2187 = vrot.lane.b32.xlu0 %v2179, 48
    %v2188 = vpop.permute.xlu0 %2187
    %2189 = vrot.lane.b32.xlu0 %v2180, 48
    %v2190 = vpop.permute.xlu0 %2189
    %2191 = vrot.lane.b32.xlu0 %v2181, 48
    %v2192 = vpop.permute.xlu0 %2191
    %2193 = vrot.lane.b32.xlu0 %v2182, 48
    %v2194 = vpop.permute.xlu0 %2193
    %v2199 = vadd.f32 %v2159, %v2188
    %v2200 = vadd.f32 %v2160, %v2190
    %v2201 = vadd.f32 %v2161, %v2192
    %v2202 = vadd.f32 %v2162, %v2194
    %2203 = vset.pattern.permute.xlu0 14
    %2204 = vperm.xlu0 %2203, %v1653
    %v2205 = vpop.permute.xlu0 %2204
    %2207 = vset.pattern.permute.xlu0 14
    %2208 = vperm.xlu0 %2207, %v1658
    %v2209 = vpop.permute.xlu0 %2208
    %2211 = vset.pattern.permute.xlu0 14
    %2212 = vperm.xlu0 %2211, %v1663
    %v2213 = vpop.permute.xlu0 %2212
    %2215 = vset.pattern.permute.xlu0 14
    %2216 = vperm.xlu0 %2215, %v1668
    %v2217 = vpop.permute.xlu0 %2216
    %v2219 = vmul.f32 %v2205, %v528
    %v2220 = vmul.f32 %v2209, %v534
    %v2221 = vmul.f32 %v2213, %v540
    %v2222 = vmul.f32 %v2217, %v546
    %2227 = vrot.lane.b32.xlu0 %v2219, 32
    %v2228 = vpop.permute.xlu0 %2227
    %2229 = vrot.lane.b32.xlu0 %v2220, 32
    %v2230 = vpop.permute.xlu0 %2229
    %2231 = vrot.lane.b32.xlu0 %v2221, 32
    %v2232 = vpop.permute.xlu0 %2231
    %2233 = vrot.lane.b32.xlu0 %v2222, 32
    %v2234 = vpop.permute.xlu0 %2233
    %v2239 = vadd.f32 %v2199, %v2228
    %v2240 = vadd.f32 %v2200, %v2230
    %v2241 = vadd.f32 %v2201, %v2232
    %v2242 = vadd.f32 %v2202, %v2234
    %2243 = vset.pattern.permute.xlu0 15
    %2244 = vperm.xlu0 %2243, %v1653
    %v2245 = vpop.permute.xlu0 %2244
    %2247 = vset.pattern.permute.xlu0 15
    %2248 = vperm.xlu0 %2247, %v1658
    %v2249 = vpop.permute.xlu0 %2248
    %2251 = vset.pattern.permute.xlu0 15
    %2252 = vperm.xlu0 %2251, %v1663
    %v2253 = vpop.permute.xlu0 %2252
    %2255 = vset.pattern.permute.xlu0 15
    %2256 = vperm.xlu0 %2255, %v1668
    %v2257 = vpop.permute.xlu0 %2256
    %v2259 = vmul.f32 %v2245, %v528
    %v2260 = vmul.f32 %v2249, %v534
    %v2261 = vmul.f32 %v2253, %v540
    %v2262 = vmul.f32 %v2257, %v546
    %2267 = vrot.lane.b32.xlu0 %v2259, 16
    %v2268 = vpop.permute.xlu0 %2267
    %2269 = vrot.lane.b32.xlu0 %v2260, 16
    %v2270 = vpop.permute.xlu0 %2269
    %2271 = vrot.lane.b32.xlu0 %v2261, 16
    %v2272 = vpop.permute.xlu0 %2271
    %2273 = vrot.lane.b32.xlu0 %v2262, 16
    %v2274 = vpop.permute.xlu0 %2273
    %v2279 = vadd.f32 %v2239, %v2268
    %v2280 = vadd.f32 %v2240, %v2270
    %v2281 = vadd.f32 %v2241, %v2272
    %v2282 = vadd.f32 %v2242, %v2274
    %2283 = vmatprep.subr.mxu0 0.0
    %2284 = vmatpush1.msra.mxu0 0.0
    %2285 = vmatprep.subr.mxu0 0.0
    %2286 = vmatpush1.msra.mxu0 0.0
    %2287 = vmatprep.subr.mxu0 0.0
    %2288 = vmatpush1.msra.mxu0 0.0
    %2289 = vmatprep.subr.mxu0 0.0
    %2290 = vmatpush1.msra.mxu0 0.0
    %2291 = vmatprep.subr.mxu0 0.0
    %2292 = vmatpush1.msra.mxu0 0.0
    %2293 = vmatprep.subr.mxu0 0.0
    %2294 = vmatpush1.msra.mxu0 0.0
    %2295 = vmatprep.subr.mxu0 0.0
    %2296 = vmatpush1.msra.mxu0 0.0
    %2297 = vmatprep.subr.mxu0 0.0
    %2298 = vmatpush1.msra.mxu0 0.0
    %2299 = vmatprep.subr.mxu0 0.0
    %2300 = vmatpush1.msra.mxu0 0.0
    %2301 = vmatprep.subr.mxu0 0.0
    %2302 = vmatpush1.msra.mxu0 0.0
    %2303 = vmatprep.subr.mxu0 0.0
    %2304 = vmatpush1.msra.mxu0 0.0
    %2305 = vmatprep.subr.mxu0 0.0
    %2306 = vmatpush1.msra.mxu0 0.0
    %2307 = vmatprep.subr.mxu0 0.0
    %2308 = vmatpush1.msra.mxu0 %v2282
    %2309 = vmatprep.subr.mxu0 0.0
    %2310 = vmatpush1.msra.mxu0 %v2281
    %2311 = vmatprep.subr.mxu0 0.0
    %2312 = vmatpush1.msra.mxu0 %v2280
    %2313 = vmatprep.subr.mxu0 0.0
    %2314 = vmatpush1.msra.mxu0 %v2279
    %2315 = vmatprep.subr.mxu0 0.0
    %2316 = vmatpush2.msra.mxu0 0.0
    %2317 = vmatprep.subr.mxu0 0.0
    %2318 = vmatpush2.msra.mxu0 0.0
    %2319 = vmatprep.subr.mxu0 0.0
    %2320 = vmatpush2.msra.mxu0 0.0
    %2321 = vmatprep.subr.mxu0 0.0
    %2322 = vmatpush2.msra.mxu0 0.0
    %2323 = vmatprep.subr.mxu0 0.0
    %2324 = vmatpush2.msra.mxu0 0.0
    %2325 = vmatprep.subr.mxu0 0.0
    %2326 = vmatpush2.msra.mxu0 0.0
    %2327 = vmatprep.subr.mxu0 0.0
    %2328 = vmatpush2.msra.mxu0 0.0
    %2329 = vmatprep.subr.mxu0 0.0
    %2330 = vmatpush2.msra.mxu0 0.0
    %2331 = vmatprep.subr.mxu0 0.0
    %2332 = vmatpush2.msra.mxu0 0.0
    %2333 = vmatprep.subr.mxu0 0.0
    %2334 = vmatpush2.msra.mxu0 0.0
    %2335 = vmatprep.subr.mxu0 0.0
    %2336 = vmatpush2.msra.mxu0 0.0
    %2337 = vmatprep.subr.mxu0 0.0
    %2338 = vmatpush2.msra.mxu0 0.0
    %2339 = vmatprep.subr.mxu0 0.0
    %2340 = vmatpush2.msra.mxu0 0.0
    %2341 = vmatprep.subr.mxu0 0.0
    %2342 = vmatpush2.msra.mxu0 0.0
    %2343 = vmatprep.subr.mxu0 0.0
    %2344 = vmatpush2.msra.mxu0 0.0
    %2345 = vmatprep.subr.mxu0 0.0
    %2346 = vmatpush2.msra.mxu0 0.0
    %2347 = vmatprep.mubr.f32.mxu0 0.0
    %2348 = vmatmul.mubr.f32.gmra.mxu0 %v1266
    %v2349 = vpop.f32.mrf.mxu0
    %v2350 = vadd.f32 0.0, %v2349
    %v2351 = vpop.f32.mrf.mxu0
    %2352 = vmatprep.mubr.f32.mxu0 0.0
    %2353 = vmatmul.mubr.f32.gmra.mxu0 %v1269
    %v2354 = vpop.f32.mrf.mxu0
    %v2355 = vadd.f32 0.0, %v2354
    %v2356 = vpop.f32.mrf.mxu0
    %2357 = vdwg.mxu0
    %v2359 = vsel %vm554, %v2350, 0
    %v2362 = vsel %vm554, %v2355, 0
    %2364 = vmatprep.subr.mxu0 0.0
    %2365 = vmatpush1.msra.mxu0 0.0
    %2366 = vmatprep.subr.mxu0 0.0
    %2367 = vmatpush1.msra.mxu0 0.0
    %2368 = vmatprep.subr.mxu0 0.0
    %2369 = vmatpush1.msra.mxu0 0.0
    %2370 = vmatprep.subr.mxu0 0.0
    %2371 = vmatpush1.msra.mxu0 0.0
    %2372 = vmatprep.subr.mxu0 0.0
    %2373 = vmatpush1.msra.mxu0 0.0
    %2374 = vmatprep.subr.mxu0 0.0
    %2375 = vmatpush1.msra.mxu0 0.0
    %2376 = vmatprep.subr.mxu0 0.0
    %2377 = vmatpush1.msra.mxu0 0.0
    %2378 = vmatprep.subr.mxu0 0.0
    %2379 = vmatpush1.msra.mxu0 0.0
    %2380 = vmatprep.subr.mxu0 0.0
    %2381 = vmatpush1.msra.mxu0 0.0
    %2382 = vmatprep.subr.mxu0 0.0
    %2383 = vmatpush1.msra.mxu0 0.0
    %2384 = vmatprep.subr.mxu0 0.0
    %2385 = vmatpush1.msra.mxu0 0.0
    %2386 = vmatprep.subr.mxu0 0.0
    %2387 = vmatpush1.msra.mxu0 0.0
    %2388 = vmatprep.subr.mxu0 0.0
    %2389 = vmatpush1.msra.mxu0 0.0
    %2390 = vmatprep.subr.mxu0 0.0
    %2391 = vmatpush1.msra.mxu0 0.0
    %2392 = vmatprep.subr.mxu0 0.0
    %2393 = vmatpush1.msra.mxu0 %v549
    %2394 = vmatprep.subr.mxu0 0.0
    %2395 = vmatpush1.msra.mxu0 %v548
    %2396 = vmatprep.subr.mxu0 0.0
    %2397 = vmatpush2.msra.mxu0 0.0
    %2398 = vmatprep.subr.mxu0 0.0
    %2399 = vmatpush2.msra.mxu0 0.0
    %2400 = vmatprep.subr.mxu0 0.0
    %2401 = vmatpush2.msra.mxu0 0.0
    %2402 = vmatprep.subr.mxu0 0.0
    %2403 = vmatpush2.msra.mxu0 0.0
    %2404 = vmatprep.subr.mxu0 0.0
    %2405 = vmatpush2.msra.mxu0 0.0
    %2406 = vmatprep.subr.mxu0 0.0
    %2407 = vmatpush2.msra.mxu0 0.0
    %2408 = vmatprep.subr.mxu0 0.0
    %2409 = vmatpush2.msra.mxu0 0.0
    %2410 = vmatprep.subr.mxu0 0.0
    %2411 = vmatpush2.msra.mxu0 0.0
    %2412 = vmatprep.subr.mxu0 0.0
    %2413 = vmatpush2.msra.mxu0 0.0
    %2414 = vmatprep.subr.mxu0 0.0
    %2415 = vmatpush2.msra.mxu0 0.0
    %2416 = vmatprep.subr.mxu0 0.0
    %2417 = vmatpush2.msra.mxu0 0.0
    %2418 = vmatprep.subr.mxu0 0.0
    %2419 = vmatpush2.msra.mxu0 0.0
    %2420 = vmatprep.subr.mxu0 0.0
    %2421 = vmatpush2.msra.mxu0 0.0
    %2422 = vmatprep.subr.mxu0 0.0
    %2423 = vmatpush2.msra.mxu0 0.0
    %2424 = vmatprep.subr.mxu0 0.0
    %2425 = vmatpush2.msra.mxu0 0.0
    %2426 = vmatprep.subr.mxu0 0.0
    %2427 = vmatpush2.msra.mxu0 0.0
    %2428 = vmatprep.mubr.f32.mxu0 0.0
    %2429 = vmatmul.mubr.f32.gmra.mxu0 %v2359
    %v2430 = vpop.f32.mrf.mxu0
    %v2431 = vadd.f32 %v1350, %v2430
    %v2432 = vpop.f32.mrf.mxu0
    %2433 = vmatprep.mubr.f32.mxu0 0.0
    %2434 = vmatmul.mubr.f32.gmra.mxu0 %v2362
    %v2435 = vpop.f32.mrf.mxu0
    %v2436 = vadd.f32 %v1350, %v2435
    %v2437 = vpop.f32.mrf.mxu0
    %2438 = vdwg.mxu0
    %v2439 = vsel %vm554, %v1581, 0
    %v2441 = vsel %vm554, %v1583, 0
    %2443 = vmatprep.subr.mxu0 0.0
    %2444 = vmatpush1.msra.mxu0 0.0
    %2445 = vmatprep.subr.mxu0 0.0
    %2446 = vmatpush1.msra.mxu0 0.0
    %2447 = vmatprep.subr.mxu0 0.0
    %2448 = vmatpush1.msra.mxu0 0.0
    %2449 = vmatprep.subr.mxu0 0.0
    %2450 = vmatpush1.msra.mxu0 0.0
    %2451 = vmatprep.subr.mxu0 0.0
    %2452 = vmatpush1.msra.mxu0 0.0
    %2453 = vmatprep.subr.mxu0 0.0
    %2454 = vmatpush1.msra.mxu0 0.0
    %2455 = vmatprep.subr.mxu0 0.0
    %2456 = vmatpush1.msra.mxu0 0.0
    %2457 = vmatprep.subr.mxu0 0.0
    %2458 = vmatpush1.msra.mxu0 0.0
    %2459 = vmatprep.subr.mxu0 0.0
    %2460 = vmatpush1.msra.mxu0 0.0
    %2461 = vmatprep.subr.mxu0 0.0
    %2462 = vmatpush1.msra.mxu0 0.0
    %2463 = vmatprep.subr.mxu0 0.0
    %2464 = vmatpush1.msra.mxu0 0.0
    %2465 = vmatprep.subr.mxu0 0.0
    %2466 = vmatpush1.msra.mxu0 0.0
    %2467 = vmatprep.subr.mxu0 0.0
    %2468 = vmatpush1.msra.mxu0 0.0
    %2469 = vmatprep.subr.mxu0 0.0
    %2470 = vmatpush1.msra.mxu0 0.0
    %2471 = vmatprep.subr.mxu0 0.0
    %2472 = vmatpush1.msra.mxu0 %v552
    %2473 = vmatprep.subr.mxu0 0.0
    %2474 = vmatpush1.msra.mxu0 %v551
    %2475 = vmatprep.subr.mxu0 0.0
    %2476 = vmatpush2.msra.mxu0 0.0
    %2477 = vmatprep.subr.mxu0 0.0
    %2478 = vmatpush2.msra.mxu0 0.0
    %2479 = vmatprep.subr.mxu0 0.0
    %2480 = vmatpush2.msra.mxu0 0.0
    %2481 = vmatprep.subr.mxu0 0.0
    %2482 = vmatpush2.msra.mxu0 0.0
    %2483 = vmatprep.subr.mxu0 0.0
    %2484 = vmatpush2.msra.mxu0 0.0
    %2485 = vmatprep.subr.mxu0 0.0
    %2486 = vmatpush2.msra.mxu0 0.0
    %2487 = vmatprep.subr.mxu0 0.0
    %2488 = vmatpush2.msra.mxu0 0.0
    %2489 = vmatprep.subr.mxu0 0.0
    %2490 = vmatpush2.msra.mxu0 0.0
    %2491 = vmatprep.subr.mxu0 0.0
    %2492 = vmatpush2.msra.mxu0 0.0
    %2493 = vmatprep.subr.mxu0 0.0
    %2494 = vmatpush2.msra.mxu0 0.0
    %2495 = vmatprep.subr.mxu0 0.0
    %2496 = vmatpush2.msra.mxu0 0.0
    %2497 = vmatprep.subr.mxu0 0.0
    %2498 = vmatpush2.msra.mxu0 0.0
    %2499 = vmatprep.subr.mxu0 0.0
    %2500 = vmatpush2.msra.mxu0 0.0
    %2501 = vmatprep.subr.mxu0 0.0
    %2502 = vmatpush2.msra.mxu0 0.0
    %2503 = vmatprep.subr.mxu0 0.0
    %2504 = vmatpush2.msra.mxu0 0.0
    %2505 = vmatprep.subr.mxu0 0.0
    %2506 = vmatpush2.msra.mxu0 0.0
    %2507 = vmatprep.mubr.f32.mxu0 0.0
    %2508 = vmatmul.mubr.f32.gmra.mxu0 %v2439
    %v2509 = vpop.f32.mrf.mxu0
    %v2510 = vadd.f32 %v1437, %v2509
    %v2511 = vpop.f32.mrf.mxu0
    %2512 = vmatprep.mubr.f32.mxu0 0.0
    %2513 = vmatmul.mubr.f32.gmra.mxu0 %v2441
    %v2514 = vpop.f32.mrf.mxu0
    %v2515 = vadd.f32 %v1437, %v2514
    %v2516 = vpop.f32.mrf.mxu0
    %2517 = vdwg.mxu0
    %v2518 = vadd.f32 %v2431, %v2510
    %v2519 = vadd.f32 %v2436, %v2515
    %v2520 = vxor.u32 %v2518, 2147483648
    %v2521 = vxor.u32 %v2519, 2147483648
    %v2522 = vmul.f32 %v2520, 1.442695
    %v2523 = vpow.pop %v2522
    %v2524 = vmul.f32 %v2521, 1.442695
    %v2525 = vpow.pop %v2524
    %v2526 = vadd.f32 %v2523, 1.0
    %v2527 = vadd.f32 %v2525, 1.0
    %v2528 = vrcp.pop %v2526
    %v2529 = vmul.f32 1.0, %v2528
    %v2530 = vrcp.pop %v2527
    %v2531 = vmul.f32 1.0, %v2530
    %2534 = vrot.lane.b32.xlu0 %v2510, 96
    %v2535 = vpop.permute.xlu0 %2534
    %2536 = vrot.lane.b32.xlu0 %v2515, 96
    %v2537 = vpop.permute.xlu0 %2536
    %v2540 = vmul.f32 %v2529, %v2535
    %v2541 = vmul.f32 %v2531, %v2537
    %2544 = vrot.lane.b32.xlu0 %v2540, 32
    %v2545 = vpop.permute.xlu0 %2544
    %2546 = vrot.lane.b32.xlu0 %v2541, 32
    %v2547 = vpop.permute.xlu0 %2546
    %v2550 = vadd.f32 %v2431, %v2545
    %v2551 = vadd.f32 %v2436, %v2547
    %v2552 = vtanh.pop %v2550
    %v2553 = vtanh.pop %v2551
    %v2554 = vsub.f32 1.0, %v2529
    %v2555 = vsub.f32 1.0, %v2531
    %2558 = vrot.lane.b32.xlu0 %v2552, 112
    %v2559 = vpop.permute.xlu0 %2558
    %2560 = vrot.lane.b32.xlu0 %v2553, 112
    %v2561 = vpop.permute.xlu0 %2560
    %v2564 = vmul.f32 %v2554, %v2559
    %v2565 = vmul.f32 %v2555, %v2561
    %v2566 = vmul.f32 %v2529, %v1576
    %v2567 = vmul.f32 %v2531, %v1577
    %v2568 = vadd.f32 %v2564, %v2566
    %v2569 = vadd.f32 %v2565, %v2567
    %2572 = vrot.lane.b32.xlu0 %v2568, 112
    %v2573 = vpop.permute.xlu0 %2572
    %2574 = vrot.lane.b32.xlu0 %v2569, 112
    %v2575 = vpop.permute.xlu0 %2574
    %2578 = vmatprep.subr.mxu0 0.0
    %2579 = vmatpush1.msra.mxu0 0.0
    %2580 = vmatprep.subr.mxu0 0.0
    %2581 = vmatpush1.msra.mxu0 0.0
    %2582 = vmatprep.subr.mxu0 0.0
    %2583 = vmatpush1.msra.mxu0 0.0
    %2584 = vmatprep.subr.mxu0 0.0
    %2585 = vmatpush1.msra.mxu0 0.0
    %2586 = vmatprep.subr.mxu0 0.0
    %2587 = vmatpush1.msra.mxu0 0.0
    %2588 = vmatprep.subr.mxu0 0.0
    %2589 = vmatpush1.msra.mxu0 0.0
    %2590 = vmatprep.subr.mxu0 0.0
    %2591 = vmatpush1.msra.mxu0 0.0
    %2592 = vmatprep.subr.mxu0 0.0
    %2593 = vmatpush1.msra.mxu0 0.0
    %2594 = vmatprep.subr.mxu0 0.0
    %2595 = vmatpush1.msra.mxu0 0.0
    %2596 = vmatprep.subr.mxu0 0.0
    %2597 = vmatpush1.msra.mxu0 0.0
    %2598 = vmatprep.subr.mxu0 0.0
    %2599 = vmatpush1.msra.mxu0 0.0
    %2600 = vmatprep.subr.mxu0 0.0
    %2601 = vmatpush1.msra.mxu0 0.0
    %2602 = vmatprep.subr.mxu0 0.0
    %2603 = vmatpush1.msra.mxu0 0.0
    %2604 = vmatprep.subr.mxu0 0.0
    %2605 = vmatpush1.msra.mxu0 0.0
    %2606 = vmatprep.subr.mxu0 0.0
    %2607 = vmatpush1.msra.mxu0 %v2575
    %2608 = vmatprep.subr.mxu0 0.0
    %2609 = vmatpush1.msra.mxu0 %v2573
    %2610 = vmatprep.subr.mxu0 0.0
    %2611 = vmatpush2.msra.mxu0 0.0
    %2612 = vmatprep.subr.mxu0 0.0
    %2613 = vmatpush2.msra.mxu0 0.0
    %2614 = vmatprep.subr.mxu0 0.0
    %2615 = vmatpush2.msra.mxu0 0.0
    %2616 = vmatprep.subr.mxu0 0.0
    %2617 = vmatpush2.msra.mxu0 0.0
    %2618 = vmatprep.subr.mxu0 0.0
    %2619 = vmatpush2.msra.mxu0 0.0
    %2620 = vmatprep.subr.mxu0 0.0
    %2621 = vmatpush2.msra.mxu0 0.0
    %2622 = vmatprep.subr.mxu0 0.0
    %2623 = vmatpush2.msra.mxu0 0.0
    %2624 = vmatprep.subr.mxu0 0.0
    %2625 = vmatpush2.msra.mxu0 0.0
    %2626 = vmatprep.subr.mxu0 0.0
    %2627 = vmatpush2.msra.mxu0 0.0
    %2628 = vmatprep.subr.mxu0 0.0
    %2629 = vmatpush2.msra.mxu0 0.0
    %2630 = vmatprep.subr.mxu0 0.0
    %2631 = vmatpush2.msra.mxu0 0.0
    %2632 = vmatprep.subr.mxu0 0.0
    %2633 = vmatpush2.msra.mxu0 0.0
    %2634 = vmatprep.subr.mxu0 0.0
    %2635 = vmatpush2.msra.mxu0 0.0
    %2636 = vmatprep.subr.mxu0 0.0
    %2637 = vmatpush2.msra.mxu0 0.0
    %2638 = vmatprep.subr.mxu0 0.0
    %2639 = vmatpush2.msra.mxu0 0.0
    %2640 = vmatprep.subr.mxu0 0.0
    %2641 = vmatpush2.msra.mxu0 0.0
    %2642 = vmatprep.mubr.f32.mxu0 0.0
    %2643 = vmatmul.mubr.f32.gmra.mxu0 %v556
    %v2644 = vpop.f32.mrf.mxu0
    %v2645 = vadd.f32 0.0, %v2644
    %v2646 = vpop.f32.mrf.mxu0
    %2647 = vmatprep.mubr.f32.mxu0 0.0
    %2648 = vmatmul.mubr.f32.gmra.mxu0 %v559
    %v2649 = vpop.f32.mrf.mxu0
    %v2650 = vadd.f32 0.0, %v2649
    %v2651 = vpop.f32.mrf.mxu0
    %2652 = vmatprep.mubr.f32.mxu0 0.0
    %2653 = vmatmul.mubr.f32.gmra.mxu0 %v562
    %v2654 = vpop.f32.mrf.mxu0
    %v2655 = vadd.f32 0.0, %v2654
    %v2656 = vpop.f32.mrf.mxu0
    %2657 = vmatprep.mubr.f32.mxu0 0.0
    %2658 = vmatmul.mubr.f32.gmra.mxu0 %v565
    %v2659 = vpop.f32.mrf.mxu0
    %v2660 = vadd.f32 0.0, %v2659
    %v2661 = vpop.f32.mrf.mxu0
    %2662 = vdwg.mxu0
    %2664 = vset.pattern.permute.xlu0 0
    %2665 = vperm.xlu0 %2664, %v2645
    %v2666 = vpop.permute.xlu0 %2665
    %2669 = vset.pattern.permute.xlu0 0
    %2670 = vperm.xlu0 %2669, %v2650
    %v2671 = vpop.permute.xlu0 %2670
    %2674 = vset.pattern.permute.xlu0 0
    %2675 = vperm.xlu0 %2674, %v2655
    %v2676 = vpop.permute.xlu0 %2675
    %2679 = vset.pattern.permute.xlu0 0
    %2680 = vperm.xlu0 %2679, %v2660
    %v2681 = vpop.permute.xlu0 %2680
    %v2683 = vmul.f32 %v2666, %v526
    %v2684 = vmul.f32 %v2671, %v532
    %v2685 = vmul.f32 %v2676, %v538
    %v2686 = vmul.f32 %v2681, %v544
    %v2687 = vadd.f32 %v2683, 0.0
    %v2688 = vadd.f32 %v2684, 0.0
    %v2689 = vadd.f32 %v2685, 0.0
    %v2690 = vadd.f32 %v2686, 0.0
    %2691 = vset.pattern.permute.xlu0 1
    %2692 = vperm.xlu0 %2691, %v2645
    %v2693 = vpop.permute.xlu0 %2692
    %2695 = vset.pattern.permute.xlu0 1
    %2696 = vperm.xlu0 %2695, %v2650
    %v2697 = vpop.permute.xlu0 %2696
    %2699 = vset.pattern.permute.xlu0 1
    %2700 = vperm.xlu0 %2699, %v2655
    %v2701 = vpop.permute.xlu0 %2700
    %2703 = vset.pattern.permute.xlu0 1
    %2704 = vperm.xlu0 %2703, %v2660
    %v2705 = vpop.permute.xlu0 %2704
    %v2707 = vmul.f32 %v2693, %v526
    %v2708 = vmul.f32 %v2697, %v532
    %v2709 = vmul.f32 %v2701, %v538
    %v2710 = vmul.f32 %v2705, %v544
    %2715 = vrot.lane.b32.xlu0 %v2707, 112
    %v2716 = vpop.permute.xlu0 %2715
    %2717 = vrot.lane.b32.xlu0 %v2708, 112
    %v2718 = vpop.permute.xlu0 %2717
    %2719 = vrot.lane.b32.xlu0 %v2709, 112
    %v2720 = vpop.permute.xlu0 %2719
    %2721 = vrot.lane.b32.xlu0 %v2710, 112
    %v2722 = vpop.permute.xlu0 %2721
    %v2727 = vadd.f32 %v2687, %v2716
    %v2728 = vadd.f32 %v2688, %v2718
    %v2729 = vadd.f32 %v2689, %v2720
    %v2730 = vadd.f32 %v2690, %v2722
    %2731 = vset.pattern.permute.xlu0 2
    %2732 = vperm.xlu0 %2731, %v2645
    %v2733 = vpop.permute.xlu0 %2732
    %2735 = vset.pattern.permute.xlu0 2
    %2736 = vperm.xlu0 %2735, %v2650
    %v2737 = vpop.permute.xlu0 %2736
    %2739 = vset.pattern.permute.xlu0 2
    %2740 = vperm.xlu0 %2739, %v2655
    %v2741 = vpop.permute.xlu0 %2740
    %2743 = vset.pattern.permute.xlu0 2
    %2744 = vperm.xlu0 %2743, %v2660
    %v2745 = vpop.permute.xlu0 %2744
    %v2747 = vmul.f32 %v2733, %v526
    %v2748 = vmul.f32 %v2737, %v532
    %v2749 = vmul.f32 %v2741, %v538
    %v2750 = vmul.f32 %v2745, %v544
    %2755 = vrot.lane.b32.xlu0 %v2747, 96
    %v2756 = vpop.permute.xlu0 %2755
    %2757 = vrot.lane.b32.xlu0 %v2748, 96
    %v2758 = vpop.permute.xlu0 %2757
    %2759 = vrot.lane.b32.xlu0 %v2749, 96
    %v2760 = vpop.permute.xlu0 %2759
    %2761 = vrot.lane.b32.xlu0 %v2750, 96
    %v2762 = vpop.permute.xlu0 %2761
    %v2767 = vadd.f32 %v2727, %v2756
    %v2768 = vadd.f32 %v2728, %v2758
    %v2769 = vadd.f32 %v2729, %v2760
    %v2770 = vadd.f32 %v2730, %v2762
    %2771 = vset.pattern.permute.xlu0 3
    %2772 = vperm.xlu0 %2771, %v2645
    %v2773 = vpop.permute.xlu0 %2772
    %2775 = vset.pattern.permute.xlu0 3
    %2776 = vperm.xlu0 %2775, %v2650
    %v2777 = vpop.permute.xlu0 %2776
    %2779 = vset.pattern.permute.xlu0 3
    %2780 = vperm.xlu0 %2779, %v2655
    %v2781 = vpop.permute.xlu0 %2780
    %2783 = vset.pattern.permute.xlu0 3
    %2784 = vperm.xlu0 %2783, %v2660
    %v2785 = vpop.permute.xlu0 %2784
    %v2787 = vmul.f32 %v2773, %v526
    %v2788 = vmul.f32 %v2777, %v532
    %v2789 = vmul.f32 %v2781, %v538
    %v2790 = vmul.f32 %v2785, %v544
    %2795 = vrot.lane.b32.xlu0 %v2787, 80
    %v2796 = vpop.permute.xlu0 %2795
    %2797 = vrot.lane.b32.xlu0 %v2788, 80
    %v2798 = vpop.permute.xlu0 %2797
    %2799 = vrot.lane.b32.xlu0 %v2789, 80
    %v2800 = vpop.permute.xlu0 %2799
    %2801 = vrot.lane.b32.xlu0 %v2790, 80
    %v2802 = vpop.permute.xlu0 %2801
    %v2807 = vadd.f32 %v2767, %v2796
    %v2808 = vadd.f32 %v2768, %v2798
    %v2809 = vadd.f32 %v2769, %v2800
    %v2810 = vadd.f32 %v2770, %v2802
    %2811 = vset.pattern.permute.xlu0 4
    %2812 = vperm.xlu0 %2811, %v2645
    %v2813 = vpop.permute.xlu0 %2812
    %2815 = vset.pattern.permute.xlu0 4
    %2816 = vperm.xlu0 %2815, %v2650
    %v2817 = vpop.permute.xlu0 %2816
    %2819 = vset.pattern.permute.xlu0 4
    %2820 = vperm.xlu0 %2819, %v2655
    %v2821 = vpop.permute.xlu0 %2820
    %2823 = vset.pattern.permute.xlu0 4
    %2824 = vperm.xlu0 %2823, %v2660
    %v2825 = vpop.permute.xlu0 %2824
    %v2827 = vmul.f32 %v2813, %v526
    %v2828 = vmul.f32 %v2817, %v532
    %v2829 = vmul.f32 %v2821, %v538
    %v2830 = vmul.f32 %v2825, %v544
    %2835 = vrot.lane.b32.xlu0 %v2827, 64
    %v2836 = vpop.permute.xlu0 %2835
    %2837 = vrot.lane.b32.xlu0 %v2828, 64
    %v2838 = vpop.permute.xlu0 %2837
    %2839 = vrot.lane.b32.xlu0 %v2829, 64
    %v2840 = vpop.permute.xlu0 %2839
    %2841 = vrot.lane.b32.xlu0 %v2830, 64
    %v2842 = vpop.permute.xlu0 %2841
    %v2847 = vadd.f32 %v2807, %v2836
    %v2848 = vadd.f32 %v2808, %v2838
    %v2849 = vadd.f32 %v2809, %v2840
    %v2850 = vadd.f32 %v2810, %v2842
    %2851 = vset.pattern.permute.xlu0 5
    %2852 = vperm.xlu0 %2851, %v2645
    %v2853 = vpop.permute.xlu0 %2852
    %2855 = vset.pattern.permute.xlu0 5
    %2856 = vperm.xlu0 %2855, %v2650
    %v2857 = vpop.permute.xlu0 %2856
    %2859 = vset.pattern.permute.xlu0 5
    %2860 = vperm.xlu0 %2859, %v2655
    %v2861 = vpop.permute.xlu0 %2860
    %2863 = vset.pattern.permute.xlu0 5
    %2864 = vperm.xlu0 %2863, %v2660
    %v2865 = vpop.permute.xlu0 %2864
    %v2867 = vmul.f32 %v2853, %v526
    %v2868 = vmul.f32 %v2857, %v532
    %v2869 = vmul.f32 %v2861, %v538
    %v2870 = vmul.f32 %v2865, %v544
    %2875 = vrot.lane.b32.xlu0 %v2867, 48
    %v2876 = vpop.permute.xlu0 %2875
    %2877 = vrot.lane.b32.xlu0 %v2868, 48
    %v2878 = vpop.permute.xlu0 %2877
    %2879 = vrot.lane.b32.xlu0 %v2869, 48
    %v2880 = vpop.permute.xlu0 %2879
    %2881 = vrot.lane.b32.xlu0 %v2870, 48
    %v2882 = vpop.permute.xlu0 %2881
    %v2887 = vadd.f32 %v2847, %v2876
    %v2888 = vadd.f32 %v2848, %v2878
    %v2889 = vadd.f32 %v2849, %v2880
    %v2890 = vadd.f32 %v2850, %v2882
    %2891 = vset.pattern.permute.xlu0 6
    %2892 = vperm.xlu0 %2891, %v2645
    %v2893 = vpop.permute.xlu0 %2892
    %2895 = vset.pattern.permute.xlu0 6
    %2896 = vperm.xlu0 %2895, %v2650
    %v2897 = vpop.permute.xlu0 %2896
    %2899 = vset.pattern.permute.xlu0 6
    %2900 = vperm.xlu0 %2899, %v2655
    %v2901 = vpop.permute.xlu0 %2900
    %2903 = vset.pattern.permute.xlu0 6
    %2904 = vperm.xlu0 %2903, %v2660
    %v2905 = vpop.permute.xlu0 %2904
    %v2907 = vmul.f32 %v2893, %v526
    %v2908 = vmul.f32 %v2897, %v532
    %v2909 = vmul.f32 %v2901, %v538
    %v2910 = vmul.f32 %v2905, %v544
    %2915 = vrot.lane.b32.xlu0 %v2907, 32
    %v2916 = vpop.permute.xlu0 %2915
    %2917 = vrot.lane.b32.xlu0 %v2908, 32
    %v2918 = vpop.permute.xlu0 %2917
    %2919 = vrot.lane.b32.xlu0 %v2909, 32
    %v2920 = vpop.permute.xlu0 %2919
    %2921 = vrot.lane.b32.xlu0 %v2910, 32
    %v2922 = vpop.permute.xlu0 %2921
    %v2927 = vadd.f32 %v2887, %v2916
    %v2928 = vadd.f32 %v2888, %v2918
    %v2929 = vadd.f32 %v2889, %v2920
    %v2930 = vadd.f32 %v2890, %v2922
    %2931 = vset.pattern.permute.xlu0 7
    %2932 = vperm.xlu0 %2931, %v2645
    %v2933 = vpop.permute.xlu0 %2932
    %2935 = vset.pattern.permute.xlu0 7
    %2936 = vperm.xlu0 %2935, %v2650
    %v2937 = vpop.permute.xlu0 %2936
    %2939 = vset.pattern.permute.xlu0 7
    %2940 = vperm.xlu0 %2939, %v2655
    %v2941 = vpop.permute.xlu0 %2940
    %2943 = vset.pattern.permute.xlu0 7
    %2944 = vperm.xlu0 %2943, %v2660
    %v2945 = vpop.permute.xlu0 %2944
    %v2947 = vmul.f32 %v2933, %v526
    %v2948 = vmul.f32 %v2937, %v532
    %v2949 = vmul.f32 %v2941, %v538
    %v2950 = vmul.f32 %v2945, %v544
    %2955 = vrot.lane.b32.xlu0 %v2947, 16
    %v2956 = vpop.permute.xlu0 %2955
    %2957 = vrot.lane.b32.xlu0 %v2948, 16
    %v2958 = vpop.permute.xlu0 %2957
    %2959 = vrot.lane.b32.xlu0 %v2949, 16
    %v2960 = vpop.permute.xlu0 %2959
    %2961 = vrot.lane.b32.xlu0 %v2950, 16
    %v2962 = vpop.permute.xlu0 %2961
    %v2967 = vadd.f32 %v2927, %v2956
    %v2968 = vadd.f32 %v2928, %v2958
    %v2969 = vadd.f32 %v2929, %v2960
    %v2970 = vadd.f32 %v2930, %v2962
    %2971 = vset.pattern.permute.xlu0 8
    %2972 = vperm.xlu0 %2971, %v2645
    %v2973 = vpop.permute.xlu0 %2972
    %2975 = vset.pattern.permute.xlu0 8
    %2976 = vperm.xlu0 %2975, %v2650
    %v2977 = vpop.permute.xlu0 %2976
    %2979 = vset.pattern.permute.xlu0 8
    %2980 = vperm.xlu0 %2979, %v2655
    %v2981 = vpop.permute.xlu0 %2980
    %2983 = vset.pattern.permute.xlu0 8
    %2984 = vperm.xlu0 %2983, %v2660
    %v2985 = vpop.permute.xlu0 %2984
    %v2987 = vmul.f32 %v2973, %v528
    %v2988 = vmul.f32 %v2977, %v534
    %v2989 = vmul.f32 %v2981, %v540
    %v2990 = vmul.f32 %v2985, %v546
    %v2991 = vadd.f32 %v2967, %v2987
    %v2992 = vadd.f32 %v2968, %v2988
    %v2993 = vadd.f32 %v2969, %v2989
    %v2994 = vadd.f32 %v2970, %v2990
    %2995 = vset.pattern.permute.xlu0 9
    %2996 = vperm.xlu0 %2995, %v2645
    %v2997 = vpop.permute.xlu0 %2996
    %2999 = vset.pattern.permute.xlu0 9
    %3000 = vperm.xlu0 %2999, %v2650
    %v3001 = vpop.permute.xlu0 %3000
    %3003 = vset.pattern.permute.xlu0 9
    %3004 = vperm.xlu0 %3003, %v2655
    %v3005 = vpop.permute.xlu0 %3004
    %3007 = vset.pattern.permute.xlu0 9
    %3008 = vperm.xlu0 %3007, %v2660
    %v3009 = vpop.permute.xlu0 %3008
    %v3011 = vmul.f32 %v2997, %v528
    %v3012 = vmul.f32 %v3001, %v534
    %v3013 = vmul.f32 %v3005, %v540
    %v3014 = vmul.f32 %v3009, %v546
    %3019 = vrot.lane.b32.xlu0 %v3011, 112
    %v3020 = vpop.permute.xlu0 %3019
    %3021 = vrot.lane.b32.xlu0 %v3012, 112
    %v3022 = vpop.permute.xlu0 %3021
    %3023 = vrot.lane.b32.xlu0 %v3013, 112
    %v3024 = vpop.permute.xlu0 %3023
    %3025 = vrot.lane.b32.xlu0 %v3014, 112
    %v3026 = vpop.permute.xlu0 %3025
    %v3031 = vadd.f32 %v2991, %v3020
    %v3032 = vadd.f32 %v2992, %v3022
    %v3033 = vadd.f32 %v2993, %v3024
    %v3034 = vadd.f32 %v2994, %v3026
    %3035 = vset.pattern.permute.xlu0 10
    %3036 = vperm.xlu0 %3035, %v2645
    %v3037 = vpop.permute.xlu0 %3036
    %3039 = vset.pattern.permute.xlu0 10
    %3040 = vperm.xlu0 %3039, %v2650
    %v3041 = vpop.permute.xlu0 %3040
    %3043 = vset.pattern.permute.xlu0 10
    %3044 = vperm.xlu0 %3043, %v2655
    %v3045 = vpop.permute.xlu0 %3044
    %3047 = vset.pattern.permute.xlu0 10
    %3048 = vperm.xlu0 %3047, %v2660
    %v3049 = vpop.permute.xlu0 %3048
    %v3051 = vmul.f32 %v3037, %v528
    %v3052 = vmul.f32 %v3041, %v534
    %v3053 = vmul.f32 %v3045, %v540
    %v3054 = vmul.f32 %v3049, %v546
    %3059 = vrot.lane.b32.xlu0 %v3051, 96
    %v3060 = vpop.permute.xlu0 %3059
    %3061 = vrot.lane.b32.xlu0 %v3052, 96
    %v3062 = vpop.permute.xlu0 %3061
    %3063 = vrot.lane.b32.xlu0 %v3053, 96
    %v3064 = vpop.permute.xlu0 %3063
    %3065 = vrot.lane.b32.xlu0 %v3054, 96
    %v3066 = vpop.permute.xlu0 %3065
    %v3071 = vadd.f32 %v3031, %v3060
    %v3072 = vadd.f32 %v3032, %v3062
    %v3073 = vadd.f32 %v3033, %v3064
    %v3074 = vadd.f32 %v3034, %v3066
    %3075 = vset.pattern.permute.xlu0 11
    %3076 = vperm.xlu0 %3075, %v2645
    %v3077 = vpop.permute.xlu0 %3076
    %3079 = vset.pattern.permute.xlu0 11
    %3080 = vperm.xlu0 %3079, %v2650
    %v3081 = vpop.permute.xlu0 %3080
    %3083 = vset.pattern.permute.xlu0 11
    %3084 = vperm.xlu0 %3083, %v2655
    %v3085 = vpop.permute.xlu0 %3084
    %3087 = vset.pattern.permute.xlu0 11
    %3088 = vperm.xlu0 %3087, %v2660
    %v3089 = vpop.permute.xlu0 %3088
    %v3091 = vmul.f32 %v3077, %v528
    %v3092 = vmul.f32 %v3081, %v534
    %v3093 = vmul.f32 %v3085, %v540
    %v3094 = vmul.f32 %v3089, %v546
    %3099 = vrot.lane.b32.xlu0 %v3091, 80
    %v3100 = vpop.permute.xlu0 %3099
    %3101 = vrot.lane.b32.xlu0 %v3092, 80
    %v3102 = vpop.permute.xlu0 %3101
    %3103 = vrot.lane.b32.xlu0 %v3093, 80
    %v3104 = vpop.permute.xlu0 %3103
    %3105 = vrot.lane.b32.xlu0 %v3094, 80
    %v3106 = vpop.permute.xlu0 %3105
    %v3111 = vadd.f32 %v3071, %v3100
    %v3112 = vadd.f32 %v3072, %v3102
    %v3113 = vadd.f32 %v3073, %v3104
    %v3114 = vadd.f32 %v3074, %v3106
    %3115 = vset.pattern.permute.xlu0 12
    %3116 = vperm.xlu0 %3115, %v2645
    %v3117 = vpop.permute.xlu0 %3116
    %3119 = vset.pattern.permute.xlu0 12
    %3120 = vperm.xlu0 %3119, %v2650
    %v3121 = vpop.permute.xlu0 %3120
    %3123 = vset.pattern.permute.xlu0 12
    %3124 = vperm.xlu0 %3123, %v2655
    %v3125 = vpop.permute.xlu0 %3124
    %3127 = vset.pattern.permute.xlu0 12
    %3128 = vperm.xlu0 %3127, %v2660
    %v3129 = vpop.permute.xlu0 %3128
    %v3131 = vmul.f32 %v3117, %v528
    %v3132 = vmul.f32 %v3121, %v534
    %v3133 = vmul.f32 %v3125, %v540
    %v3134 = vmul.f32 %v3129, %v546
    %3139 = vrot.lane.b32.xlu0 %v3131, 64
    %v3140 = vpop.permute.xlu0 %3139
    %3141 = vrot.lane.b32.xlu0 %v3132, 64
    %v3142 = vpop.permute.xlu0 %3141
    %3143 = vrot.lane.b32.xlu0 %v3133, 64
    %v3144 = vpop.permute.xlu0 %3143
    %3145 = vrot.lane.b32.xlu0 %v3134, 64
    %v3146 = vpop.permute.xlu0 %3145
    %v3151 = vadd.f32 %v3111, %v3140
    %v3152 = vadd.f32 %v3112, %v3142
    %v3153 = vadd.f32 %v3113, %v3144
    %v3154 = vadd.f32 %v3114, %v3146
    %3155 = vset.pattern.permute.xlu0 13
    %3156 = vperm.xlu0 %3155, %v2645
    %v3157 = vpop.permute.xlu0 %3156
    %3159 = vset.pattern.permute.xlu0 13
    %3160 = vperm.xlu0 %3159, %v2650
    %v3161 = vpop.permute.xlu0 %3160
    %3163 = vset.pattern.permute.xlu0 13
    %3164 = vperm.xlu0 %3163, %v2655
    %v3165 = vpop.permute.xlu0 %3164
    %3167 = vset.pattern.permute.xlu0 13
    %3168 = vperm.xlu0 %3167, %v2660
    %v3169 = vpop.permute.xlu0 %3168
    %v3171 = vmul.f32 %v3157, %v528
    %v3172 = vmul.f32 %v3161, %v534
    %v3173 = vmul.f32 %v3165, %v540
    %v3174 = vmul.f32 %v3169, %v546
    %3179 = vrot.lane.b32.xlu0 %v3171, 48
    %v3180 = vpop.permute.xlu0 %3179
    %3181 = vrot.lane.b32.xlu0 %v3172, 48
    %v3182 = vpop.permute.xlu0 %3181
    %3183 = vrot.lane.b32.xlu0 %v3173, 48
    %v3184 = vpop.permute.xlu0 %3183
    %3185 = vrot.lane.b32.xlu0 %v3174, 48
    %v3186 = vpop.permute.xlu0 %3185
    %v3191 = vadd.f32 %v3151, %v3180
    %v3192 = vadd.f32 %v3152, %v3182
    %v3193 = vadd.f32 %v3153, %v3184
    %v3194 = vadd.f32 %v3154, %v3186
    %3195 = vset.pattern.permute.xlu0 14
    %3196 = vperm.xlu0 %3195, %v2645
    %v3197 = vpop.permute.xlu0 %3196
    %3199 = vset.pattern.permute.xlu0 14
    %3200 = vperm.xlu0 %3199, %v2650
    %v3201 = vpop.permute.xlu0 %3200
    %3203 = vset.pattern.permute.xlu0 14
    %3204 = vperm.xlu0 %3203, %v2655
    %v3205 = vpop.permute.xlu0 %3204
    %3207 = vset.pattern.permute.xlu0 14
    %3208 = vperm.xlu0 %3207, %v2660
    %v3209 = vpop.permute.xlu0 %3208
    %v3211 = vmul.f32 %v3197, %v528
    %v3212 = vmul.f32 %v3201, %v534
    %v3213 = vmul.f32 %v3205, %v540
    %v3214 = vmul.f32 %v3209, %v546
    %3219 = vrot.lane.b32.xlu0 %v3211, 32
    %v3220 = vpop.permute.xlu0 %3219
    %3221 = vrot.lane.b32.xlu0 %v3212, 32
    %v3222 = vpop.permute.xlu0 %3221
    %3223 = vrot.lane.b32.xlu0 %v3213, 32
    %v3224 = vpop.permute.xlu0 %3223
    %3225 = vrot.lane.b32.xlu0 %v3214, 32
    %v3226 = vpop.permute.xlu0 %3225
    %v3231 = vadd.f32 %v3191, %v3220
    %v3232 = vadd.f32 %v3192, %v3222
    %v3233 = vadd.f32 %v3193, %v3224
    %v3234 = vadd.f32 %v3194, %v3226
    %3235 = vset.pattern.permute.xlu0 15
    %3236 = vperm.xlu0 %3235, %v2645
    %v3237 = vpop.permute.xlu0 %3236
    %3239 = vset.pattern.permute.xlu0 15
    %3240 = vperm.xlu0 %3239, %v2650
    %v3241 = vpop.permute.xlu0 %3240
    %3243 = vset.pattern.permute.xlu0 15
    %3244 = vperm.xlu0 %3243, %v2655
    %v3245 = vpop.permute.xlu0 %3244
    %3247 = vset.pattern.permute.xlu0 15
    %3248 = vperm.xlu0 %3247, %v2660
    %v3249 = vpop.permute.xlu0 %3248
    %v3251 = vmul.f32 %v3237, %v528
    %v3252 = vmul.f32 %v3241, %v534
    %v3253 = vmul.f32 %v3245, %v540
    %v3254 = vmul.f32 %v3249, %v546
    %3259 = vrot.lane.b32.xlu0 %v3251, 16
    %v3260 = vpop.permute.xlu0 %3259
    %3261 = vrot.lane.b32.xlu0 %v3252, 16
    %v3262 = vpop.permute.xlu0 %3261
    %3263 = vrot.lane.b32.xlu0 %v3253, 16
    %v3264 = vpop.permute.xlu0 %3263
    %3265 = vrot.lane.b32.xlu0 %v3254, 16
    %v3266 = vpop.permute.xlu0 %3265
    %v3271 = vadd.f32 %v3231, %v3260
    %v3272 = vadd.f32 %v3232, %v3262
    %v3273 = vadd.f32 %v3233, %v3264
    %v3274 = vadd.f32 %v3234, %v3266
    %3275 = vmatprep.subr.mxu0 0.0
    %3276 = vmatpush1.msra.mxu0 0.0
    %3277 = vmatprep.subr.mxu0 0.0
    %3278 = vmatpush1.msra.mxu0 0.0
    %3279 = vmatprep.subr.mxu0 0.0
    %3280 = vmatpush1.msra.mxu0 0.0
    %3281 = vmatprep.subr.mxu0 0.0
    %3282 = vmatpush1.msra.mxu0 0.0
    %3283 = vmatprep.subr.mxu0 0.0
    %3284 = vmatpush1.msra.mxu0 0.0
    %3285 = vmatprep.subr.mxu0 0.0
    %3286 = vmatpush1.msra.mxu0 0.0
    %3287 = vmatprep.subr.mxu0 0.0
    %3288 = vmatpush1.msra.mxu0 0.0
    %3289 = vmatprep.subr.mxu0 0.0
    %3290 = vmatpush1.msra.mxu0 0.0
    %3291 = vmatprep.subr.mxu0 0.0
    %3292 = vmatpush1.msra.mxu0 0.0
    %3293 = vmatprep.subr.mxu0 0.0
    %3294 = vmatpush1.msra.mxu0 0.0
    %3295 = vmatprep.subr.mxu0 0.0
    %3296 = vmatpush1.msra.mxu0 0.0
    %3297 = vmatprep.subr.mxu0 0.0
    %3298 = vmatpush1.msra.mxu0 0.0
    %3299 = vmatprep.subr.mxu0 0.0
    %3300 = vmatpush1.msra.mxu0 %v3274
    %3301 = vmatprep.subr.mxu0 0.0
    %3302 = vmatpush1.msra.mxu0 %v3273
    %3303 = vmatprep.subr.mxu0 0.0
    %3304 = vmatpush1.msra.mxu0 %v3272
    %3305 = vmatprep.subr.mxu0 0.0
    %3306 = vmatpush1.msra.mxu0 %v3271
    %3307 = vmatprep.subr.mxu0 0.0
    %3308 = vmatpush2.msra.mxu0 0.0
    %3309 = vmatprep.subr.mxu0 0.0
    %3310 = vmatpush2.msra.mxu0 0.0
    %3311 = vmatprep.subr.mxu0 0.0
    %3312 = vmatpush2.msra.mxu0 0.0
    %3313 = vmatprep.subr.mxu0 0.0
    %3314 = vmatpush2.msra.mxu0 0.0
    %3315 = vmatprep.subr.mxu0 0.0
    %3316 = vmatpush2.msra.mxu0 0.0
    %3317 = vmatprep.subr.mxu0 0.0
    %3318 = vmatpush2.msra.mxu0 0.0
    %3319 = vmatprep.subr.mxu0 0.0
    %3320 = vmatpush2.msra.mxu0 0.0
    %3321 = vmatprep.subr.mxu0 0.0
    %3322 = vmatpush2.msra.mxu0 0.0
    %3323 = vmatprep.subr.mxu0 0.0
    %3324 = vmatpush2.msra.mxu0 0.0
    %3325 = vmatprep.subr.mxu0 0.0
    %3326 = vmatpush2.msra.mxu0 0.0
    %3327 = vmatprep.subr.mxu0 0.0
    %3328 = vmatpush2.msra.mxu0 0.0
    %3329 = vmatprep.subr.mxu0 0.0
    %3330 = vmatpush2.msra.mxu0 0.0
    %3331 = vmatprep.subr.mxu0 0.0
    %3332 = vmatpush2.msra.mxu0 0.0
    %3333 = vmatprep.subr.mxu0 0.0
    %3334 = vmatpush2.msra.mxu0 0.0
    %3335 = vmatprep.subr.mxu0 0.0
    %3336 = vmatpush2.msra.mxu0 0.0
    %3337 = vmatprep.subr.mxu0 0.0
    %3338 = vmatpush2.msra.mxu0 0.0
    %3339 = vmatprep.mubr.f32.mxu0 0.0
    %3340 = vmatmul.mubr.f32.gmra.mxu0 %v1266
    %v3341 = vpop.f32.mrf.mxu0
    %v3342 = vadd.f32 0.0, %v3341
    %v3343 = vpop.f32.mrf.mxu0
    %3344 = vmatprep.mubr.f32.mxu0 0.0
    %3345 = vmatmul.mubr.f32.gmra.mxu0 %v1269
    %v3346 = vpop.f32.mrf.mxu0
    %v3347 = vadd.f32 0.0, %v3346
    %v3348 = vpop.f32.mrf.mxu0
    %3349 = vdwg.mxu0
    %v3351 = vsel %vm554, %v3342, 0
    %v3354 = vsel %vm554, %v3347, 0
    %3356 = vmatprep.subr.mxu0 0.0
    %3357 = vmatpush1.msra.mxu0 0.0
    %3358 = vmatprep.subr.mxu0 0.0
    %3359 = vmatpush1.msra.mxu0 0.0
    %3360 = vmatprep.subr.mxu0 0.0
    %3361 = vmatpush1.msra.mxu0 0.0
    %3362 = vmatprep.subr.mxu0 0.0
    %3363 = vmatpush1.msra.mxu0 0.0
    %3364 = vmatprep.subr.mxu0 0.0
    %3365 = vmatpush1.msra.mxu0 0.0
    %3366 = vmatprep.subr.mxu0 0.0
    %3367 = vmatpush1.msra.mxu0 0.0
    %3368 = vmatprep.subr.mxu0 0.0
    %3369 = vmatpush1.msra.mxu0 0.0
    %3370 = vmatprep.subr.mxu0 0.0
    %3371 = vmatpush1.msra.mxu0 0.0
    %3372 = vmatprep.subr.mxu0 0.0
    %3373 = vmatpush1.msra.mxu0 0.0
    %3374 = vmatprep.subr.mxu0 0.0
    %3375 = vmatpush1.msra.mxu0 0.0
    %3376 = vmatprep.subr.mxu0 0.0
    %3377 = vmatpush1.msra.mxu0 0.0
    %3378 = vmatprep.subr.mxu0 0.0
    %3379 = vmatpush1.msra.mxu0 0.0
    %3380 = vmatprep.subr.mxu0 0.0
    %3381 = vmatpush1.msra.mxu0 0.0
    %3382 = vmatprep.subr.mxu0 0.0
    %3383 = vmatpush1.msra.mxu0 0.0
    %3384 = vmatprep.subr.mxu0 0.0
    %3385 = vmatpush1.msra.mxu0 %v549
    %3386 = vmatprep.subr.mxu0 0.0
    %3387 = vmatpush1.msra.mxu0 %v548
    %3388 = vmatprep.subr.mxu0 0.0
    %3389 = vmatpush2.msra.mxu0 0.0
    %3390 = vmatprep.subr.mxu0 0.0
    %3391 = vmatpush2.msra.mxu0 0.0
    %3392 = vmatprep.subr.mxu0 0.0
    %3393 = vmatpush2.msra.mxu0 0.0
    %3394 = vmatprep.subr.mxu0 0.0
    %3395 = vmatpush2.msra.mxu0 0.0
    %3396 = vmatprep.subr.mxu0 0.0
    %3397 = vmatpush2.msra.mxu0 0.0
    %3398 = vmatprep.subr.mxu0 0.0
    %3399 = vmatpush2.msra.mxu0 0.0
    %3400 = vmatprep.subr.mxu0 0.0
    %3401 = vmatpush2.msra.mxu0 0.0
    %3402 = vmatprep.subr.mxu0 0.0
    %3403 = vmatpush2.msra.mxu0 0.0
    %3404 = vmatprep.subr.mxu0 0.0
    %3405 = vmatpush2.msra.mxu0 0.0
    %3406 = vmatprep.subr.mxu0 0.0
    %3407 = vmatpush2.msra.mxu0 0.0
    %3408 = vmatprep.subr.mxu0 0.0
    %3409 = vmatpush2.msra.mxu0 0.0
    %3410 = vmatprep.subr.mxu0 0.0
    %3411 = vmatpush2.msra.mxu0 0.0
    %3412 = vmatprep.subr.mxu0 0.0
    %3413 = vmatpush2.msra.mxu0 0.0
    %3414 = vmatprep.subr.mxu0 0.0
    %3415 = vmatpush2.msra.mxu0 0.0
    %3416 = vmatprep.subr.mxu0 0.0
    %3417 = vmatpush2.msra.mxu0 0.0
    %3418 = vmatprep.subr.mxu0 0.0
    %3419 = vmatpush2.msra.mxu0 0.0
    %3420 = vmatprep.mubr.f32.mxu0 0.0
    %3421 = vmatmul.mubr.f32.gmra.mxu0 %v3351
    %v3422 = vpop.f32.mrf.mxu0
    %v3423 = vadd.f32 %v1350, %v3422
    %v3424 = vpop.f32.mrf.mxu0
    %3425 = vmatprep.mubr.f32.mxu0 0.0
    %3426 = vmatmul.mubr.f32.gmra.mxu0 %v3354
    %v3427 = vpop.f32.mrf.mxu0
    %v3428 = vadd.f32 %v1350, %v3427
    %v3429 = vpop.f32.mrf.mxu0
    %3430 = vdwg.mxu0
    %v3431 = vsel %vm554, %v2573, 0
    %v3433 = vsel %vm554, %v2575, 0
    %3435 = vmatprep.subr.mxu0 0.0
    %3436 = vmatpush1.msra.mxu0 0.0
    %3437 = vmatprep.subr.mxu0 0.0
    %3438 = vmatpush1.msra.mxu0 0.0
    %3439 = vmatprep.subr.mxu0 0.0
    %3440 = vmatpush1.msra.mxu0 0.0
    %3441 = vmatprep.subr.mxu0 0.0
    %3442 = vmatpush1.msra.mxu0 0.0
    %3443 = vmatprep.subr.mxu0 0.0
    %3444 = vmatpush1.msra.mxu0 0.0
    %3445 = vmatprep.subr.mxu0 0.0
    %3446 = vmatpush1.msra.mxu0 0.0
    %3447 = vmatprep.subr.mxu0 0.0
    %3448 = vmatpush1.msra.mxu0 0.0
    %3449 = vmatprep.subr.mxu0 0.0
    %3450 = vmatpush1.msra.mxu0 0.0
    %3451 = vmatprep.subr.mxu0 0.0
    %3452 = vmatpush1.msra.mxu0 0.0
    %3453 = vmatprep.subr.mxu0 0.0
    %3454 = vmatpush1.msra.mxu0 0.0
    %3455 = vmatprep.subr.mxu0 0.0
    %3456 = vmatpush1.msra.mxu0 0.0
    %3457 = vmatprep.subr.mxu0 0.0
    %3458 = vmatpush1.msra.mxu0 0.0
    %3459 = vmatprep.subr.mxu0 0.0
    %3460 = vmatpush1.msra.mxu0 0.0
    %3461 = vmatprep.subr.mxu0 0.0
    %3462 = vmatpush1.msra.mxu0 0.0
    %3463 = vmatprep.subr.mxu0 0.0
    %3464 = vmatpush1.msra.mxu0 %v552
    %3465 = vmatprep.subr.mxu0 0.0
    %3466 = vmatpush1.msra.mxu0 %v551
    %3467 = vmatprep.subr.mxu0 0.0
    %3468 = vmatpush2.msra.mxu0 0.0
    %3469 = vmatprep.subr.mxu0 0.0
    %3470 = vmatpush2.msra.mxu0 0.0
    %3471 = vmatprep.subr.mxu0 0.0
    %3472 = vmatpush2.msra.mxu0 0.0
    %3473 = vmatprep.subr.mxu0 0.0
    %3474 = vmatpush2.msra.mxu0 0.0
    %3475 = vmatprep.subr.mxu0 0.0
    %3476 = vmatpush2.msra.mxu0 0.0
    %3477 = vmatprep.subr.mxu0 0.0
    %3478 = vmatpush2.msra.mxu0 0.0
    %3479 = vmatprep.subr.mxu0 0.0
    %3480 = vmatpush2.msra.mxu0 0.0
    %3481 = vmatprep.subr.mxu0 0.0
    %3482 = vmatpush2.msra.mxu0 0.0
    %3483 = vmatprep.subr.mxu0 0.0
    %3484 = vmatpush2.msra.mxu0 0.0
    %3485 = vmatprep.subr.mxu0 0.0
    %3486 = vmatpush2.msra.mxu0 0.0
    %3487 = vmatprep.subr.mxu0 0.0
    %3488 = vmatpush2.msra.mxu0 0.0
    %3489 = vmatprep.subr.mxu0 0.0
    %3490 = vmatpush2.msra.mxu0 0.0
    %3491 = vmatprep.subr.mxu0 0.0
    %3492 = vmatpush2.msra.mxu0 0.0
    %3493 = vmatprep.subr.mxu0 0.0
    %3494 = vmatpush2.msra.mxu0 0.0
    %3495 = vmatprep.subr.mxu0 0.0
    %3496 = vmatpush2.msra.mxu0 0.0
    %3497 = vmatprep.subr.mxu0 0.0
    %3498 = vmatpush2.msra.mxu0 0.0
    %3499 = vmatprep.mubr.f32.mxu0 0.0
    %3500 = vmatmul.mubr.f32.gmra.mxu0 %v3431
    %v3501 = vpop.f32.mrf.mxu0
    %v3502 = vadd.f32 %v1437, %v3501
    %v3503 = vpop.f32.mrf.mxu0
    %3504 = vmatprep.mubr.f32.mxu0 0.0
    %3505 = vmatmul.mubr.f32.gmra.mxu0 %v3433
    %v3506 = vpop.f32.mrf.mxu0
    %v3507 = vadd.f32 %v1437, %v3506
    %v3508 = vpop.f32.mrf.mxu0
    %3509 = vdwg.mxu0
    %v3510 = vadd.f32 %v3423, %v3502
    %v3511 = vadd.f32 %v3428, %v3507
    %v3512 = vxor.u32 %v3510, 2147483648
    %v3513 = vxor.u32 %v3511, 2147483648
    %v3514 = vmul.f32 %v3512, 1.442695
    %v3515 = vpow.pop %v3514
    %v3516 = vmul.f32 %v3513, 1.442695
    %v3517 = vpow.pop %v3516
    %v3518 = vadd.f32 %v3515, 1.0
    %v3519 = vadd.f32 %v3517, 1.0
    %v3520 = vrcp.pop %v3518
    %v3521 = vmul.f32 1.0, %v3520
    %v3522 = vrcp.pop %v3519
    %v3523 = vmul.f32 1.0, %v3522
    %3526 = vrot.lane.b32.xlu0 %v3502, 96
    %v3527 = vpop.permute.xlu0 %3526
    %3528 = vrot.lane.b32.xlu0 %v3507, 96
    %v3529 = vpop.permute.xlu0 %3528
    %v3532 = vmul.f32 %v3521, %v3527
    %v3533 = vmul.f32 %v3523, %v3529
    %3536 = vrot.lane.b32.xlu0 %v3532, 32
    %v3537 = vpop.permute.xlu0 %3536
    %3538 = vrot.lane.b32.xlu0 %v3533, 32
    %v3539 = vpop.permute.xlu0 %3538
    %v3542 = vadd.f32 %v3423, %v3537
    %v3543 = vadd.f32 %v3428, %v3539
    %v3544 = vtanh.pop %v3542
    %v3545 = vtanh.pop %v3543
    %v3546 = vsub.f32 1.0, %v3521
    %v3547 = vsub.f32 1.0, %v3523
    %3550 = vrot.lane.b32.xlu0 %v3544, 112
    %v3551 = vpop.permute.xlu0 %3550
    %3552 = vrot.lane.b32.xlu0 %v3545, 112
    %v3553 = vpop.permute.xlu0 %3552
    %v3556 = vmul.f32 %v3546, %v3551
    %v3557 = vmul.f32 %v3547, %v3553
    %v3558 = vmul.f32 %v3521, %v2568
    %v3559 = vmul.f32 %v3523, %v2569
    %v3560 = vadd.f32 %v3556, %v3558
    %v3561 = vadd.f32 %v3557, %v3559
    %v3562 = vld [vmem:[#allocation15] sm:$0xff]
    %v3563 = vld [vmem:[#allocation15 + $0x8] sm:$0xff]
    %v3564 = vld [vmem:[#allocation16] sm:$0xff]
    %v3565 = vld [vmem:[#allocation16 + $0x8] sm:$0xff]
    %3566 = vmatprep.subr.mxu0 0.0
    %3567 = vmatpush1.msra.mxu0 0.0
    %3568 = vmatprep.subr.mxu0 0.0
    %3569 = vmatpush1.msra.mxu0 0.0
    %3570 = vmatprep.subr.mxu0 0.0
    %3571 = vmatpush1.msra.mxu0 0.0
    %3572 = vmatprep.subr.mxu0 0.0
    %3573 = vmatpush1.msra.mxu0 0.0
    %3574 = vmatprep.subr.mxu0 0.0
    %3575 = vmatpush1.msra.mxu0 0.0
    %3576 = vmatprep.subr.mxu0 0.0
    %3577 = vmatpush1.msra.mxu0 0.0
    %3578 = vmatprep.subr.mxu0 0.0
    %3579 = vmatpush1.msra.mxu0 0.0
    %3580 = vmatprep.subr.mxu0 0.0
    %3581 = vmatpush1.msra.mxu0 0.0
    %3582 = vmatprep.subr.mxu0 0.0
    %3583 = vmatpush1.msra.mxu0 0.0
    %3584 = vmatprep.subr.mxu0 0.0
    %3585 = vmatpush1.msra.mxu0 0.0
    %3586 = vmatprep.subr.mxu0 0.0
    %3587 = vmatpush1.msra.mxu0 0.0
    %3588 = vmatprep.subr.mxu0 0.0
    %3589 = vmatpush1.msra.mxu0 0.0
    %3590 = vmatprep.subr.mxu0 0.0
    %3591 = vmatpush1.msra.mxu0 0.0
    %3592 = vmatprep.subr.mxu0 0.0
    %3593 = vmatpush1.msra.mxu0 0.0
    %3594 = vmatprep.subr.mxu0 0.0
    %3595 = vmatpush1.msra.mxu0 %v3565
    %3596 = vmatprep.subr.mxu0 0.0
    %3597 = vmatpush1.msra.mxu0 %v3564
    %3598 = vmatprep.subr.mxu0 0.0
    %3599 = vmatpush2.msra.mxu0 0.0
    %3600 = vmatprep.subr.mxu0 0.0
    %3601 = vmatpush2.msra.mxu0 0.0
    %3602 = vmatprep.subr.mxu0 0.0
    %3603 = vmatpush2.msra.mxu0 0.0
    %3604 = vmatprep.subr.mxu0 0.0
    %3605 = vmatpush2.msra.mxu0 0.0
    %3606 = vmatprep.subr.mxu0 0.0
    %3607 = vmatpush2.msra.mxu0 0.0
    %3608 = vmatprep.subr.mxu0 0.0
    %3609 = vmatpush2.msra.mxu0 0.0
    %3610 = vmatprep.subr.mxu0 0.0
    %3611 = vmatpush2.msra.mxu0 0.0
    %3612 = vmatprep.subr.mxu0 0.0
    %3613 = vmatpush2.msra.mxu0 0.0
    %3614 = vmatprep.subr.mxu0 0.0
    %3615 = vmatpush2.msra.mxu0 0.0
    %3616 = vmatprep.subr.mxu0 0.0
    %3617 = vmatpush2.msra.mxu0 0.0
    %3618 = vmatprep.subr.mxu0 0.0
    %3619 = vmatpush2.msra.mxu0 0.0
    %3620 = vmatprep.subr.mxu0 0.0
    %3621 = vmatpush2.msra.mxu0 0.0
    %3622 = vmatprep.subr.mxu0 0.0
    %3623 = vmatpush2.msra.mxu0 0.0
    %3624 = vmatprep.subr.mxu0 0.0
    %3625 = vmatpush2.msra.mxu0 0.0
    %3626 = vmatprep.subr.mxu0 0.0
    %3627 = vmatpush2.msra.mxu0 0.0
    %3628 = vmatprep.subr.mxu0 0.0
    %3629 = vmatpush2.msra.mxu0 0.0
    %3630 = vmatprep.mubr.f32.mxu0 0.0
    %3631 = vmatmul.mubr.f32.gmra.mxu0 %v1440
    %v3632 = vpop.f32.mrf.mxu0
    %v3633 = vadd.f32 0.0, %v3632
    %v3634 = vpop.f32.mrf.mxu0
    %3635 = vmatprep.mubr.f32.mxu0 0.0
    %3636 = vmatmul.mubr.f32.gmra.mxu0 %v1443
    %v3637 = vpop.f32.mrf.mxu0
    %v3638 = vadd.f32 0.0, %v3637
    %v3639 = vpop.f32.mrf.mxu0
    %3640 = vdwg.mxu0
    %3643 = vrot.lane.b32.xlu0 %v3560, 112
    %v3644 = vpop.permute.xlu0 %3643
    %3645 = vrot.lane.b32.xlu0 %v3561, 112
    %v3646 = vpop.permute.xlu0 %3645
    %v3647 = vsel %vm554, %v3644, 0
    %v3649 = vsel %vm554, %v3646, 0
    %3651 = vmatprep.subr.mxu0 0.0
    %3652 = vmatpush1.msra.mxu0 0.0
    %3653 = vmatprep.subr.mxu0 0.0
    %3654 = vmatpush1.msra.mxu0 0.0
    %3655 = vmatprep.subr.mxu0 0.0
    %3656 = vmatpush1.msra.mxu0 0.0
    %3657 = vmatprep.subr.mxu0 0.0
    %3658 = vmatpush1.msra.mxu0 0.0
    %3659 = vmatprep.subr.mxu0 0.0
    %3660 = vmatpush1.msra.mxu0 0.0
    %3661 = vmatprep.subr.mxu0 0.0
    %3662 = vmatpush1.msra.mxu0 0.0
    %3663 = vmatprep.subr.mxu0 0.0
    %3664 = vmatpush1.msra.mxu0 0.0
    %3665 = vmatprep.subr.mxu0 0.0
    %3666 = vmatpush1.msra.mxu0 0.0
    %3667 = vmatprep.subr.mxu0 0.0
    %3668 = vmatpush1.msra.mxu0 0.0
    %3669 = vmatprep.subr.mxu0 0.0
    %3670 = vmatpush1.msra.mxu0 0.0
    %3671 = vmatprep.subr.mxu0 0.0
    %3672 = vmatpush1.msra.mxu0 0.0
    %3673 = vmatprep.subr.mxu0 0.0
    %3674 = vmatpush1.msra.mxu0 0.0
    %3675 = vmatprep.subr.mxu0 0.0
    %3676 = vmatpush1.msra.mxu0 0.0
    %3677 = vmatprep.subr.mxu0 0.0
    %3678 = vmatpush1.msra.mxu0 0.0
    %3679 = vmatprep.subr.mxu0 0.0
    %3680 = vmatpush1.msra.mxu0 %v3563
    %3681 = vmatprep.subr.mxu0 0.0
    %3682 = vmatpush1.msra.mxu0 %v3562
    %3683 = vmatprep.subr.mxu0 0.0
    %3684 = vmatpush2.msra.mxu0 0.0
    %3685 = vmatprep.subr.mxu0 0.0
    %3686 = vmatpush2.msra.mxu0 0.0
    %3687 = vmatprep.subr.mxu0 0.0
    %3688 = vmatpush2.msra.mxu0 0.0
    %3689 = vmatprep.subr.mxu0 0.0
    %3690 = vmatpush2.msra.mxu0 0.0
    %3691 = vmatprep.subr.mxu0 0.0
    %3692 = vmatpush2.msra.mxu0 0.0
    %3693 = vmatprep.subr.mxu0 0.0
    %3694 = vmatpush2.msra.mxu0 0.0
    %3695 = vmatprep.subr.mxu0 0.0
    %3696 = vmatpush2.msra.mxu0 0.0
    %3697 = vmatprep.subr.mxu0 0.0
    %3698 = vmatpush2.msra.mxu0 0.0
    %3699 = vmatprep.subr.mxu0 0.0
    %3700 = vmatpush2.msra.mxu0 0.0
    %3701 = vmatprep.subr.mxu0 0.0
    %3702 = vmatpush2.msra.mxu0 0.0
    %3703 = vmatprep.subr.mxu0 0.0
    %3704 = vmatpush2.msra.mxu0 0.0
    %3705 = vmatprep.subr.mxu0 0.0
    %3706 = vmatpush2.msra.mxu0 0.0
    %3707 = vmatprep.subr.mxu0 0.0
    %3708 = vmatpush2.msra.mxu0 0.0
    %3709 = vmatprep.subr.mxu0 0.0
    %3710 = vmatpush2.msra.mxu0 0.0
    %3711 = vmatprep.subr.mxu0 0.0
    %3712 = vmatpush2.msra.mxu0 0.0
    %3713 = vmatprep.subr.mxu0 0.0
    %3714 = vmatpush2.msra.mxu0 0.0
    %3715 = vmatprep.mubr.f32.mxu0 0.0
    %3716 = vmatmul.mubr.f32.gmra.mxu0 %v3647
    %v3717 = vpop.f32.mrf.mxu0
    %v3718 = vadd.f32 %v3633, %v3717
    %v3719 = vpop.f32.mrf.mxu0
    %3720 = vmatprep.mubr.f32.mxu0 0.0
    %3721 = vmatmul.mubr.f32.gmra.mxu0 %v3649
    %v3722 = vpop.f32.mrf.mxu0
    %v3723 = vadd.f32 %v3638, %v3722
    %v3724 = vpop.f32.mrf.mxu0
    %3725 = vdwg.mxu0
    %v3726 = vld [vmem:[#allocation18] sm:$0x1]
    %v3728 = vlaneseq
    %v3729 = vshrl.u32 %v3728, 7
    %v3730 = vsub.s32 0, %v3729
    %v3731 = vrot.slane %v3726, %v3730
    %v3733 = vadd.f32 %v3718, %v3731
    %v3734 = vadd.f32 %v3723, %v3731
    %v3735 = vmax.f32 %v3733, 0.0
    %v3736 = vmax.f32 %v3734, 0.0
    %v3737 = vld [vmem:[%s16] sm:$0xff]
    %v3738 = vld [vmem:[%s16 + $0x8] sm:$0xff]
    %v3739 = vld [vmem:[%s16 + $0x10] sm:$0xff]
    %v3740 = vld [vmem:[%s16 + $0x18] sm:$0xff]
    %v3741 = vld [vmem:[%s16 + $0x20] sm:$0xff]
    %v3742 = vld [vmem:[%s16 + $0x28] sm:$0xff]
    %v3743 = vld [vmem:[%s16 + $0x30] sm:$0xff]
    %v3744 = vld [vmem:[%s16 + $0x38] sm:$0xff]
    %v3745 = vld [vmem:[%s16 + $0x40] sm:$0xff]
    %v3746 = vld [vmem:[%s16 + $0x48] sm:$0xff]
    %v3747 = vld [vmem:[%s16 + $0x50] sm:$0xff]
    %v3748 = vld [vmem:[%s16 + $0x58] sm:$0xff]
    %v3749 = vld [vmem:[%s16 + $0x60] sm:$0xff]
    %v3750 = vld [vmem:[%s16 + $0x68] sm:$0xff]
    %v3751 = vld [vmem:[%s16 + $0x70] sm:$0xff]
    %v3752 = vld [vmem:[%s16 + $0x78] sm:$0xff]
    %v3753 = vld [vmem:[#allocation19] sm:$0x1]
    %v3755 = vlaneseq
    %v3756 = vshrl.u32 %v3755, 7
    %v3757 = vsub.s32 0, %v3756
    %v3758 = vrot.slane %v3753, %v3757
    %3760 = vmatprep.subr.mxu0 0.0
    %3761 = vmatpush1.msra.mxu0 %v3752
    %3762 = vmatprep.subr.mxu0 0.0
    %3763 = vmatpush1.msra.mxu0 %v3751
    %3764 = vmatprep.subr.mxu0 0.0
    %3765 = vmatpush1.msra.mxu0 %v3750
    %3766 = vmatprep.subr.mxu0 0.0
    %3767 = vmatpush1.msra.mxu0 %v3749
    %3768 = vmatprep.subr.mxu0 0.0
    %3769 = vmatpush1.msra.mxu0 %v3748
    %3770 = vmatprep.subr.mxu0 0.0
    %3771 = vmatpush1.msra.mxu0 %v3747
    %3772 = vmatprep.subr.mxu0 0.0
    %3773 = vmatpush1.msra.mxu0 %v3746
    %3774 = vmatprep.subr.mxu0 0.0
    %3775 = vmatpush1.msra.mxu0 %v3745
    %3776 = vmatprep.subr.mxu0 0.0
    %3777 = vmatpush1.msra.mxu0 %v3744
    %3778 = vmatprep.subr.mxu0 0.0
    %3779 = vmatpush1.msra.mxu0 %v3743
    %3780 = vmatprep.subr.mxu0 0.0
    %3781 = vmatpush1.msra.mxu0 %v3742
    %3782 = vmatprep.subr.mxu0 0.0
    %3783 = vmatpush1.msra.mxu0 %v3741
    %3784 = vmatprep.subr.mxu0 0.0
    %3785 = vmatpush1.msra.mxu0 %v3740
    %3786 = vmatprep.subr.mxu0 0.0
    %3787 = vmatpush1.msra.mxu0 %v3739
    %3788 = vmatprep.subr.mxu0 0.0
    %3789 = vmatpush1.msra.mxu0 %v3738
    %3790 = vmatprep.subr.mxu0 0.0
    %3791 = vmatpush1.msra.mxu0 %v3737
    %3792 = vmatprep.subr.mxu0 0.0
    %3793 = vmatpush2.msra.mxu0 0.0
    %3794 = vmatprep.subr.mxu0 0.0
    %3795 = vmatpush2.msra.mxu0 0.0
    %3796 = vmatprep.subr.mxu0 0.0
    %3797 = vmatpush2.msra.mxu0 0.0
    %3798 = vmatprep.subr.mxu0 0.0
    %3799 = vmatpush2.msra.mxu0 0.0
    %3800 = vmatprep.subr.mxu0 0.0
    %3801 = vmatpush2.msra.mxu0 0.0
    %3802 = vmatprep.subr.mxu0 0.0
    %3803 = vmatpush2.msra.mxu0 0.0
    %3804 = vmatprep.subr.mxu0 0.0
    %3805 = vmatpush2.msra.mxu0 0.0
    %3806 = vmatprep.subr.mxu0 0.0
    %3807 = vmatpush2.msra.mxu0 0.0
    %3808 = vmatprep.subr.mxu0 0.0
    %3809 = vmatpush2.msra.mxu0 0.0
    %3810 = vmatprep.subr.mxu0 0.0
    %3811 = vmatpush2.msra.mxu0 0.0
    %3812 = vmatprep.subr.mxu0 0.0
    %3813 = vmatpush2.msra.mxu0 0.0
    %3814 = vmatprep.subr.mxu0 0.0
    %3815 = vmatpush2.msra.mxu0 0.0
    %3816 = vmatprep.subr.mxu0 0.0
    %3817 = vmatpush2.msra.mxu0 0.0
    %3818 = vmatprep.subr.mxu0 0.0
    %3819 = vmatpush2.msra.mxu0 0.0
    %3820 = vmatprep.subr.mxu0 0.0
    %3821 = vmatpush2.msra.mxu0 0.0
    %3822 = vmatprep.subr.mxu0 0.0
    %3823 = vmatpush2.msra.mxu0 0.0
    %3824 = vmatprep.mubr.f32.mxu0 0.0
    %3825 = vmatmul.mubr.f32.gmra.mxu0 %v3735
    %v3826 = vpop.f32.mrf.mxu0
    %v3827 = vadd.f32 %v3758, %v3826
    %v3828 = vpop.f32.mrf.mxu0
    %3829 = vmatprep.mubr.f32.mxu0 0.0
    %3830 = vmatmul.mubr.f32.gmra.mxu0 %v3736
    %v3831 = vpop.f32.mrf.mxu0
    %v3832 = vadd.f32 %v3758, %v3831
    %v3833 = vpop.f32.mrf.mxu0
    %3834 = vdwg.mxu0
    %v3835 = vld [vmem:[#allocation21] sm:$0xff]
    %v3836 = vld [vmem:[#allocation21 + $0x8] sm:$0xff]
    %v3837 = vld [vmem:[#allocation22] sm:$0x1]
    %v3839 = vlaneseq
    %v3840 = vshrl.u32 %v3839, 7
    %v3841 = vsub.s32 0, %v3840
    %v3842 = vrot.slane %v3837, %v3841
    %3844 = vmatprep.subr.mxu0 0.0
    %3845 = vmatpush1.msra.mxu0 0.0
    %3846 = vmatprep.subr.mxu0 0.0
    %3847 = vmatpush1.msra.mxu0 0.0
    %3848 = vmatprep.subr.mxu0 0.0
    %3849 = vmatpush1.msra.mxu0 0.0
    %3850 = vmatprep.subr.mxu0 0.0
    %3851 = vmatpush1.msra.mxu0 0.0
    %3852 = vmatprep.subr.mxu0 0.0
    %3853 = vmatpush1.msra.mxu0 0.0
    %3854 = vmatprep.subr.mxu0 0.0
    %3855 = vmatpush1.msra.mxu0 0.0
    %3856 = vmatprep.subr.mxu0 0.0
    %3857 = vmatpush1.msra.mxu0 0.0
    %3858 = vmatprep.subr.mxu0 0.0
    %3859 = vmatpush1.msra.mxu0 0.0
    %3860 = vmatprep.subr.mxu0 0.0
    %3861 = vmatpush1.msra.mxu0 0.0
    %3862 = vmatprep.subr.mxu0 0.0
    %3863 = vmatpush1.msra.mxu0 0.0
    %3864 = vmatprep.subr.mxu0 0.0
    %3865 = vmatpush1.msra.mxu0 0.0
    %3866 = vmatprep.subr.mxu0 0.0
    %3867 = vmatpush1.msra.mxu0 0.0
    %3868 = vmatprep.subr.mxu0 0.0
    %3869 = vmatpush1.msra.mxu0 0.0
    %3870 = vmatprep.subr.mxu0 0.0
    %3871 = vmatpush1.msra.mxu0 0.0
    %3872 = vmatprep.subr.mxu0 0.0
    %3873 = vmatpush1.msra.mxu0 %v3836
    %3874 = vmatprep.subr.mxu0 0.0
    %3875 = vmatpush1.msra.mxu0 %v3835
    %3876 = vmatprep.subr.mxu0 0.0
    %3877 = vmatpush2.msra.mxu0 0.0
    %3878 = vmatprep.subr.mxu0 0.0
    %3879 = vmatpush2.msra.mxu0 0.0
    %3880 = vmatprep.subr.mxu0 0.0
    %3881 = vmatpush2.msra.mxu0 0.0
    %3882 = vmatprep.subr.mxu0 0.0
    %3883 = vmatpush2.msra.mxu0 0.0
    %3884 = vmatprep.subr.mxu0 0.0
    %3885 = vmatpush2.msra.mxu0 0.0
    %3886 = vmatprep.subr.mxu0 0.0
    %3887 = vmatpush2.msra.mxu0 0.0
    %3888 = vmatprep.subr.mxu0 0.0
    %3889 = vmatpush2.msra.mxu0 0.0
    %3890 = vmatprep.subr.mxu0 0.0
    %3891 = vmatpush2.msra.mxu0 0.0
    %3892 = vmatprep.subr.mxu0 0.0
    %3893 = vmatpush2.msra.mxu0 0.0
    %3894 = vmatprep.subr.mxu0 0.0
    %3895 = vmatpush2.msra.mxu0 0.0
    %3896 = vmatprep.subr.mxu0 0.0
    %3897 = vmatpush2.msra.mxu0 0.0
    %3898 = vmatprep.subr.mxu0 0.0
    %3899 = vmatpush2.msra.mxu0 0.0
    %3900 = vmatprep.subr.mxu0 0.0
    %3901 = vmatpush2.msra.mxu0 0.0
    %3902 = vmatprep.subr.mxu0 0.0
    %3903 = vmatpush2.msra.mxu0 0.0
    %3904 = vmatprep.subr.mxu0 0.0
    %3905 = vmatpush2.msra.mxu0 0.0
    %3906 = vmatprep.subr.mxu0 0.0
    %3907 = vmatpush2.msra.mxu0 0.0
    %3908 = vmatprep.mubr.f32.mxu0 0.0
    %3909 = vmatmul.mubr.f32.gmra.mxu0 %v3647
    %v3910 = vpop.f32.mrf.mxu0
    %v3911 = vadd.f32 %v3842, %v3910
    %v3912 = vpop.f32.mrf.mxu0
    %3913 = vmatprep.mubr.f32.mxu0 0.0
    %3914 = vmatmul.mubr.f32.gmra.mxu0 %v3649
    %v3915 = vpop.f32.mrf.mxu0
    %v3916 = vadd.f32 %v3842, %v3915
    %v3917 = vpop.f32.mrf.mxu0
    %3918 = vdwg.mxu0
    %v3919 = vmax.f32 %v3911, 0.0
    %v3920 = vmax.f32 %v3916, 0.0
    %v3921 = vld [vmem:[%s20] sm:$0xff]
    %v3922 = vld [vmem:[%s20 + $0x8] sm:$0xff]
    %v3923 = vld [vmem:[%s20 + $0x10] sm:$0xff]
    %v3924 = vld [vmem:[%s20 + $0x18] sm:$0xff]
    %v3925 = vld [vmem:[%s20 + $0x20] sm:$0xff]
    %v3926 = vld [vmem:[%s20 + $0x28] sm:$0xff]
    %v3927 = vld [vmem:[%s20 + $0x30] sm:$0xff]
    %v3928 = vld [vmem:[%s20 + $0x38] sm:$0xff]
    %v3929 = vld [vmem:[%s20 + $0x40] sm:$0xff]
    %v3930 = vld [vmem:[%s20 + $0x48] sm:$0xff]
    %v3931 = vld [vmem:[%s20 + $0x50] sm:$0xff]
    %v3932 = vld [vmem:[%s20 + $0x58] sm:$0xff]
    %v3933 = vld [vmem:[%s20 + $0x60] sm:$0xff]
    %v3934 = vld [vmem:[%s20 + $0x68] sm:$0xff]
    %v3935 = vld [vmem:[%s20 + $0x70] sm:$0xff]
    %v3936 = vld [vmem:[%s20 + $0x78] sm:$0xff]
    %v3937 = vld [vmem:[%s21] sm:$0x1]
    %v3939 = vlaneseq
    %v3940 = vshrl.u32 %v3939, 7
    %v3941 = vsub.s32 0, %v3940
    %v3942 = vrot.slane %v3937, %v3941
    %3944 = vmatprep.subr.mxu0 0.0
    %3945 = vmatpush1.msra.mxu0 %v3936
    %3946 = vmatprep.subr.mxu0 0.0
    %3947 = vmatpush1.msra.mxu0 %v3935
    %3948 = vmatprep.subr.mxu0 0.0
    %3949 = vmatpush1.msra.mxu0 %v3934
    %3950 = vmatprep.subr.mxu0 0.0
    %3951 = vmatpush1.msra.mxu0 %v3933
    %3952 = vmatprep.subr.mxu0 0.0
    %3953 = vmatpush1.msra.mxu0 %v3932
    %3954 = vmatprep.subr.mxu0 0.0
    %3955 = vmatpush1.msra.mxu0 %v3931
    %3956 = vmatprep.subr.mxu0 0.0
    %3957 = vmatpush1.msra.mxu0 %v3930
    %3958 = vmatprep.subr.mxu0 0.0
    %3959 = vmatpush1.msra.mxu0 %v3929
    %3960 = vmatprep.subr.mxu0 0.0
    %3961 = vmatpush1.msra.mxu0 %v3928
    %3962 = vmatprep.subr.mxu0 0.0
    %3963 = vmatpush1.msra.mxu0 %v3927
    %3964 = vmatprep.subr.mxu0 0.0
    %3965 = vmatpush1.msra.mxu0 %v3926
    %3966 = vmatprep.subr.mxu0 0.0
    %3967 = vmatpush1.msra.mxu0 %v3925
    %3968 = vmatprep.subr.mxu0 0.0
    %3969 = vmatpush1.msra.mxu0 %v3924
    %3970 = vmatprep.subr.mxu0 0.0
    %3971 = vmatpush1.msra.mxu0 %v3923
    %3972 = vmatprep.subr.mxu0 0.0
    %3973 = vmatpush1.msra.mxu0 %v3922
    %3974 = vmatprep.subr.mxu0 0.0
    %3975 = vmatpush1.msra.mxu0 %v3921
    %3976 = vmatprep.subr.mxu0 0.0
    %3977 = vmatpush2.msra.mxu0 0.0
    %3978 = vmatprep.subr.mxu0 0.0
    %3979 = vmatpush2.msra.mxu0 0.0
    %3980 = vmatprep.subr.mxu0 0.0
    %3981 = vmatpush2.msra.mxu0 0.0
    %3982 = vmatprep.subr.mxu0 0.0
    %3983 = vmatpush2.msra.mxu0 0.0
    %3984 = vmatprep.subr.mxu0 0.0
    %3985 = vmatpush2.msra.mxu0 0.0
    %3986 = vmatprep.subr.mxu0 0.0
    %3987 = vmatpush2.msra.mxu0 0.0
    %3988 = vmatprep.subr.mxu0 0.0
    %3989 = vmatpush2.msra.mxu0 0.0
    %3990 = vmatprep.subr.mxu0 0.0
    %3991 = vmatpush2.msra.mxu0 0.0
    %3992 = vmatprep.subr.mxu0 0.0
    %3993 = vmatpush2.msra.mxu0 0.0
    %3994 = vmatprep.subr.mxu0 0.0
    %3995 = vmatpush2.msra.mxu0 0.0
    %3996 = vmatprep.subr.mxu0 0.0
    %3997 = vmatpush2.msra.mxu0 0.0
    %3998 = vmatprep.subr.mxu0 0.0
    %3999 = vmatpush2.msra.mxu0 0.0
    %4000 = vmatprep.subr.mxu0 0.0
    %4001 = vmatpush2.msra.mxu0 0.0
    %4002 = vmatprep.subr.mxu0 0.0
    %4003 = vmatpush2.msra.mxu0 0.0
    %4004 = vmatprep.subr.mxu0 0.0
    %4005 = vmatpush2.msra.mxu0 0.0
    %4006 = vmatprep.subr.mxu0 0.0
    %4007 = vmatpush2.msra.mxu0 0.0
    %4008 = vmatprep.mubr.f32.mxu0 0.0
    %4009 = vmatmul.mubr.f32.gmra.mxu0 %v3919
    %v4010 = vpop.f32.mrf.mxu0
    %v4011 = vadd.f32 %v3942, %v4010
    %v4012 = vpop.f32.mrf.mxu0
    %4013 = vmatprep.mubr.f32.mxu0 0.0
    %4014 = vmatmul.mubr.f32.gmra.mxu0 %v3920
    %v4015 = vpop.f32.mrf.mxu0
    %v4016 = vadd.f32 %v3942, %v4015
    %v4017 = vpop.f32.mrf.mxu0
    %4018 = vdwg.mxu0
    %v4019 = vxor.u32 %v3827, 2147483648
    %v4020 = vxor.u32 %v3832, 2147483648
    %v4021 = vmul.f32 %v4019, 1.442695
    %v4022 = vpow.pop %v4021
    %v4023 = vmul.f32 %v4020, 1.442695
    %v4024 = vpow.pop %v4023
    %v4025 = vadd.f32 %v4022, 1.0
    %v4026 = vadd.f32 %v4024, 1.0
    %v4027 = vrcp.pop %v4025
    %v4028 = vmul.f32 1.0, %v4027
    %v4029 = vrcp.pop %v4026
    %v4030 = vmul.f32 1.0, %v4029
    %v4031 = vmul.f32 %v4028, %v4011
    %v4032 = vmul.f32 %v4030, %v4016
    %v4033 = vld [vmem:[%s3] sm:$0x3]
    %v4035 = vsel %vm554, %v4033, 0
    %4037 = vmatprep.subr.mxu0 0.0
    %4038 = vmatpush1.msra.mxu0 0.0
    %4039 = vmatprep.subr.mxu0 0.0
    %4040 = vmatpush1.msra.mxu0 0.0
    %4041 = vmatprep.subr.mxu0 0.0
    %4042 = vmatpush1.msra.mxu0 0.0
    %4043 = vmatprep.subr.mxu0 0.0
    %4044 = vmatpush1.msra.mxu0 0.0
    %4045 = vmatprep.subr.mxu0 0.0
    %4046 = vmatpush1.msra.mxu0 0.0
    %4047 = vmatprep.subr.mxu0 0.0
    %4048 = vmatpush1.msra.mxu0 0.0
    %4049 = vmatprep.subr.mxu0 0.0
    %4050 = vmatpush1.msra.mxu0 0.0
    %4051 = vmatprep.subr.mxu0 0.0
    %4052 = vmatpush1.msra.mxu0 0.0
    %4053 = vmatprep.subr.mxu0 0.0
    %4054 = vmatpush1.msra.mxu0 0.0
    %4055 = vmatprep.subr.mxu0 0.0
    %4056 = vmatpush1.msra.mxu0 0.0
    %4057 = vmatprep.subr.mxu0 0.0
    %4058 = vmatpush1.msra.mxu0 0.0
    %4059 = vmatprep.subr.mxu0 0.0
    %4060 = vmatpush1.msra.mxu0 0.0
    %4061 = vmatprep.subr.mxu0 0.0
    %4062 = vmatpush1.msra.mxu0 0.0
    %4063 = vmatprep.subr.mxu0 0.0
    %4064 = vmatpush1.msra.mxu0 0.0
    %4065 = vmatprep.subr.mxu0 0.0
    %4066 = vmatpush1.msra.mxu0 %v4032
    %4067 = vmatprep.subr.mxu0 0.0
    %4068 = vmatpush1.msra.mxu0 %v4031
    %4069 = vmatprep.subr.mxu0 0.0
    %4070 = vmatpush2.msra.mxu0 0.0
    %4071 = vmatprep.subr.mxu0 0.0
    %4072 = vmatpush2.msra.mxu0 0.0
    %4073 = vmatprep.subr.mxu0 0.0
    %4074 = vmatpush2.msra.mxu0 0.0
    %4075 = vmatprep.subr.mxu0 0.0
    %4076 = vmatpush2.msra.mxu0 0.0
    %4077 = vmatprep.subr.mxu0 0.0
    %4078 = vmatpush2.msra.mxu0 0.0
    %4079 = vmatprep.subr.mxu0 0.0
    %4080 = vmatpush2.msra.mxu0 0.0
    %4081 = vmatprep.subr.mxu0 0.0
    %4082 = vmatpush2.msra.mxu0 0.0
    %4083 = vmatprep.subr.mxu0 0.0
    %4084 = vmatpush2.msra.mxu0 0.0
    %4085 = vmatprep.subr.mxu0 0.0
    %4086 = vmatpush2.msra.mxu0 0.0
    %4087 = vmatprep.subr.mxu0 0.0
    %4088 = vmatpush2.msra.mxu0 0.0
    %4089 = vmatprep.subr.mxu0 0.0
    %4090 = vmatpush2.msra.mxu0 0.0
    %4091 = vmatprep.subr.mxu0 0.0
    %4092 = vmatpush2.msra.mxu0 0.0
    %4093 = vmatprep.subr.mxu0 0.0
    %4094 = vmatpush2.msra.mxu0 0.0
    %4095 = vmatprep.subr.mxu0 0.0
    %4096 = vmatpush2.msra.mxu0 0.0
    %4097 = vmatprep.subr.mxu0 0.0
    %4098 = vmatpush2.msra.mxu0 0.0
    %4099 = vmatprep.subr.mxu0 0.0
    %4100 = vmatpush2.msra.mxu0 0.0
    %4101 = vmatprep.mubr.f32.mxu0 0.0
    %4102 = vmatmul.mubr.f32.gmra.mxu0 %v4035
    %v4103 = vpop.f32.mrf.mxu0
    %v4104 = vadd.f32 0.0, %v4103
    %v4105 = vpop.f32.mrf.mxu0
    %4106 = vdwg.mxu0
    %v4107 = vld [vmem:[#allocation24] sm:$0xff]
    %v4108 = vld [vmem:[#allocation24 + $0x8] sm:$0xff]
    %v4109 = vld [vmem:[#allocation25] sm:$0x1]
    %v4111 = vlaneseq
    %v4112 = vshrl.u32 %v4111, 7
    %v4113 = vsub.s32 0, %v4112
    %v4114 = vrot.slane %v4109, %v4113
    %v4117 = vsel %vm554, %v4104, 0
    %4119 = vmatprep.subr.mxu0 0.0
    %4120 = vmatpush1.msra.mxu0 0.0
    %4121 = vmatprep.subr.mxu0 0.0
    %4122 = vmatpush1.msra.mxu0 0.0
    %4123 = vmatprep.subr.mxu0 0.0
    %4124 = vmatpush1.msra.mxu0 0.0
    %4125 = vmatprep.subr.mxu0 0.0
    %4126 = vmatpush1.msra.mxu0 0.0
    %4127 = vmatprep.subr.mxu0 0.0
    %4128 = vmatpush1.msra.mxu0 0.0
    %4129 = vmatprep.subr.mxu0 0.0
    %4130 = vmatpush1.msra.mxu0 0.0
    %4131 = vmatprep.subr.mxu0 0.0
    %4132 = vmatpush1.msra.mxu0 0.0
    %4133 = vmatprep.subr.mxu0 0.0
    %4134 = vmatpush1.msra.mxu0 0.0
    %4135 = vmatprep.subr.mxu0 0.0
    %4136 = vmatpush1.msra.mxu0 0.0
    %4137 = vmatprep.subr.mxu0 0.0
    %4138 = vmatpush1.msra.mxu0 0.0
    %4139 = vmatprep.subr.mxu0 0.0
    %4140 = vmatpush1.msra.mxu0 0.0
    %4141 = vmatprep.subr.mxu0 0.0
    %4142 = vmatpush1.msra.mxu0 0.0
    %4143 = vmatprep.subr.mxu0 0.0
    %4144 = vmatpush1.msra.mxu0 0.0
    %4145 = vmatprep.subr.mxu0 0.0
    %4146 = vmatpush1.msra.mxu0 0.0
    %4147 = vmatprep.subr.mxu0 0.0
    %4148 = vmatpush1.msra.mxu0 %v4108
    %4149 = vmatprep.subr.mxu0 0.0
    %4150 = vmatpush1.msra.mxu0 %v4107
    %4151 = vmatprep.subr.mxu0 0.0
    %4152 = vmatpush2.msra.mxu0 0.0
    %4153 = vmatprep.subr.mxu0 0.0
    %4154 = vmatpush2.msra.mxu0 0.0
    %4155 = vmatprep.subr.mxu0 0.0
    %4156 = vmatpush2.msra.mxu0 0.0
    %4157 = vmatprep.subr.mxu0 0.0
    %4158 = vmatpush2.msra.mxu0 0.0
    %4159 = vmatprep.subr.mxu0 0.0
    %4160 = vmatpush2.msra.mxu0 0.0
    %4161 = vmatprep.subr.mxu0 0.0
    %4162 = vmatpush2.msra.mxu0 0.0
    %4163 = vmatprep.subr.mxu0 0.0
    %4164 = vmatpush2.msra.mxu0 0.0
    %4165 = vmatprep.subr.mxu0 0.0
    %4166 = vmatpush2.msra.mxu0 0.0
    %4167 = vmatprep.subr.mxu0 0.0
    %4168 = vmatpush2.msra.mxu0 0.0
    %4169 = vmatprep.subr.mxu0 0.0
    %4170 = vmatpush2.msra.mxu0 0.0
    %4171 = vmatprep.subr.mxu0 0.0
    %4172 = vmatpush2.msra.mxu0 0.0
    %4173 = vmatprep.subr.mxu0 0.0
    %4174 = vmatpush2.msra.mxu0 0.0
    %4175 = vmatprep.subr.mxu0 0.0
    %4176 = vmatpush2.msra.mxu0 0.0
    %4177 = vmatprep.subr.mxu0 0.0
    %4178 = vmatpush2.msra.mxu0 0.0
    %4179 = vmatprep.subr.mxu0 0.0
    %4180 = vmatpush2.msra.mxu0 0.0
    %4181 = vmatprep.subr.mxu0 0.0
    %4182 = vmatpush2.msra.mxu0 0.0
    %4183 = vmatprep.mubr.f32.mxu0 0.0
    %4184 = vmatmul.mubr.f32.gmra.mxu0 %v4117
    %v4185 = vpop.f32.mrf.mxu0
    %v4186 = vadd.f32 %v4114, %v4185
    %v4187 = vpop.f32.mrf.mxu0
    %4188 = vdwg.mxu0
    %v4189 = vmax.f32 %v4186, 0.0
    %v4190 = vld [vmem:[%s24] sm:$0xff]
    %v4191 = vld [vmem:[%s24 + $0x8] sm:$0xff]
    %v4192 = vld [vmem:[%s24 + $0x10] sm:$0xff]
    %v4193 = vld [vmem:[%s24 + $0x18] sm:$0xff]
    %v4194 = vld [vmem:[%s24 + $0x20] sm:$0xff]
    %v4195 = vld [vmem:[%s24 + $0x28] sm:$0xff]
    %v4196 = vld [vmem:[%s24 + $0x30] sm:$0xff]
    %v4197 = vld [vmem:[%s24 + $0x38] sm:$0xff]
    %v4198 = vld [vmem:[%s24 + $0x40] sm:$0xff]
    %v4199 = vld [vmem:[%s24 + $0x48] sm:$0xff]
    %v4200 = vld [vmem:[%s24 + $0x50] sm:$0xff]
    %v4201 = vld [vmem:[%s24 + $0x58] sm:$0xff]
    %v4202 = vld [vmem:[%s24 + $0x60] sm:$0xff]
    %v4203 = vld [vmem:[%s24 + $0x68] sm:$0xff]
    %v4204 = vld [vmem:[%s24 + $0x70] sm:$0xff]
    %v4205 = vld [vmem:[%s24 + $0x78] sm:$0xff]
    %v4206 = vld [vmem:[#allocation27] sm:$0x1]
    %v4208 = vlaneseq
    %v4209 = vshrl.u32 %v4208, 7
    %v4210 = vsub.s32 0, %v4209
    %v4211 = vrot.slane %v4206, %v4210
    %4213 = vmatprep.subr.mxu0 0.0
    %4214 = vmatpush1.msra.mxu0 %v4205
    %4215 = vmatprep.subr.mxu0 0.0
    %4216 = vmatpush1.msra.mxu0 %v4204
    %4217 = vmatprep.subr.mxu0 0.0
    %4218 = vmatpush1.msra.mxu0 %v4203
    %4219 = vmatprep.subr.mxu0 0.0
    %4220 = vmatpush1.msra.mxu0 %v4202
    %4221 = vmatprep.subr.mxu0 0.0
    %4222 = vmatpush1.msra.mxu0 %v4201
    %4223 = vmatprep.subr.mxu0 0.0
    %4224 = vmatpush1.msra.mxu0 %v4200
    %4225 = vmatprep.subr.mxu0 0.0
    %4226 = vmatpush1.msra.mxu0 %v4199
    %4227 = vmatprep.subr.mxu0 0.0
    %4228 = vmatpush1.msra.mxu0 %v4198
    %4229 = vmatprep.subr.mxu0 0.0
    %4230 = vmatpush1.msra.mxu0 %v4197
    %4231 = vmatprep.subr.mxu0 0.0
    %4232 = vmatpush1.msra.mxu0 %v4196
    %4233 = vmatprep.subr.mxu0 0.0
    %4234 = vmatpush1.msra.mxu0 %v4195
    %4235 = vmatprep.subr.mxu0 0.0
    %4236 = vmatpush1.msra.mxu0 %v4194
    %4237 = vmatprep.subr.mxu0 0.0
    %4238 = vmatpush1.msra.mxu0 %v4193
    %4239 = vmatprep.subr.mxu0 0.0
    %4240 = vmatpush1.msra.mxu0 %v4192
    %4241 = vmatprep.subr.mxu0 0.0
    %4242 = vmatpush1.msra.mxu0 %v4191
    %4243 = vmatprep.subr.mxu0 0.0
    %4244 = vmatpush1.msra.mxu0 %v4190
    %4245 = vmatprep.subr.mxu0 0.0
    %4246 = vmatpush2.msra.mxu0 0.0
    %4247 = vmatprep.subr.mxu0 0.0
    %4248 = vmatpush2.msra.mxu0 0.0
    %4249 = vmatprep.subr.mxu0 0.0
    %4250 = vmatpush2.msra.mxu0 0.0
    %4251 = vmatprep.subr.mxu0 0.0
    %4252 = vmatpush2.msra.mxu0 0.0
    %4253 = vmatprep.subr.mxu0 0.0
    %4254 = vmatpush2.msra.mxu0 0.0
    %4255 = vmatprep.subr.mxu0 0.0
    %4256 = vmatpush2.msra.mxu0 0.0
    %4257 = vmatprep.subr.mxu0 0.0
    %4258 = vmatpush2.msra.mxu0 0.0
    %4259 = vmatprep.subr.mxu0 0.0
    %4260 = vmatpush2.msra.mxu0 0.0
    %4261 = vmatprep.subr.mxu0 0.0
    %4262 = vmatpush2.msra.mxu0 0.0
    %4263 = vmatprep.subr.mxu0 0.0
    %4264 = vmatpush2.msra.mxu0 0.0
    %4265 = vmatprep.subr.mxu0 0.0
    %4266 = vmatpush2.msra.mxu0 0.0
    %4267 = vmatprep.subr.mxu0 0.0
    %4268 = vmatpush2.msra.mxu0 0.0
    %4269 = vmatprep.subr.mxu0 0.0
    %4270 = vmatpush2.msra.mxu0 0.0
    %4271 = vmatprep.subr.mxu0 0.0
    %4272 = vmatpush2.msra.mxu0 0.0
    %4273 = vmatprep.subr.mxu0 0.0
    %4274 = vmatpush2.msra.mxu0 0.0
    %4275 = vmatprep.subr.mxu0 0.0
    %4276 = vmatpush2.msra.mxu0 0.0
    %4277 = vmatprep.mubr.f32.mxu0 0.0
    %4278 = vmatmul.mubr.f32.gmra.mxu0 %v4189
    %v4279 = vpop.f32.mrf.mxu0
    %v4280 = vadd.f32 %v4211, %v4279
    %v4281 = vpop.f32.mrf.mxu0
    %4282 = vdwg.mxu0
    %v4283 = vxor.u32 %v4280, 2147483648
    %v4284 = vmul.f32 %v4283, 1.442695
    %v4285 = vpow.pop %v4284
    %v4286 = vadd.f32 %v4285, 1.0
    %v4287 = vrcp.pop %v4286
    %v4288 = vmul.f32 1.0, %v4287
    %4289 = vst [vmem:[%s26] sm:$0x3] %v4288
    // Predicated region
    $region174: #{mpnn_forward.1} parent=1 // pred_check
      _
    $region175: #{mpnn_forward.1} parent=1 // pred_check_branch
      %4291 = sbr.rel (0) target = $region177
    $region176: #{mpnn_forward.1} parent=1 // pred_region
      _
    $region177: #{mpnn_forward.1} parent=1 // pred_fallthru
      _
    // Predicated region
    $region178: #{mpnn_forward.1} parent=1 // pred_check
      _
    $region179: #{mpnn_forward.1} parent=1 // pred_check_branch
      %4293 = sbr.rel (0) target = $region181
    $region180: #{mpnn_forward.1} parent=1 // pred_region
      _
    $region181: #{mpnn_forward.1} parent=1 // pred_fallthru
      _
    %4294 = vsyncpa [#allocation3], 1
    %4295 = vsyncpa [#allocation5], 1
    %4296 = vsyncpa [#allocation8], 1
    %4297 = vsyncpa [#allocation11], 1
    %4298 = vsyncpa [#allocation14], 1
    %4299 = vsyncpa [#allocation17], 1
    %4300 = vsyncpa [#allocation20], 1
    %4301 = vsyncpa [#allocation23], 1
    %4302 = vsyncpa [#allocation26], 1

</llo_original>
